<compile_context>
chip_gen: v7x
topology: tpu7x:2x2x1
jax: 0.10.0
libtpu: 0.0.40
codegen_flags: <defaults>
</compile_context>

<pallas_src>
import numpy as np

import jax
import jax.numpy as jnp
from jax.experimental import pallas as pl
from jax.experimental.pallas import tpu as pltpu


# ----------------------------------------------------------------------------
# Fused Pallas kernel: whole down+up chain, all intermediates VMEM-resident
# ----------------------------------------------------------------------------
def _make_fused_kernel(n):
    """Builds the kernel for a chain of `n` down + `n` up steps.

    Ref order: [ft_h, ft_l_0..n-1,
                n x (ccol, rrow, bias, alpha)   # down steps, forward order
                n x (ccol, rrow, bias, alpha)   # up steps,   forward order
                out]
    """

    def kernel(*refs):
        pos = 0
        ft_h_ref = refs[pos]
        pos += 1
        ft_l_refs = refs[pos:pos + n]
        pos += n
        down = [refs[pos + 4 * i: pos + 4 * (i + 1)] for i in range(n)]
        pos += 4 * n
        up = [refs[pos + 4 * i: pos + 4 * (i + 1)] for i in range(n)]
        pos += 4 * n
        out_ref = refs[pos]

        def conv_prelu(x, ccol_ref, rrow_ref, bias_ref, alpha_ref):
            # y = sum_kw Rrow[kw] @ (x @ Ccol[kw])  + bias, then PReLU.
            acc = None
            for k in range(4):                       # static unroll (4 kernel cols)
                t = jnp.dot(x, ccol_ref[k], preferred_element_type=jnp.float32)
                z = jnp.dot(rrow_ref[k], t, preferred_element_type=jnp.float32)
                acc = z if acc is None else acc + z
            acc = acc + bias_ref[...]                # [R,1] broadcast along lanes
            a = alpha_ref[0, 0]                      # PReLU alpha (SMEM scalar)
            return jnp.where(acc >= 0.0, acc, a * acc)

        # ---- down chain -----------------------------------------------------
        x = ft_h_ref[...]
        skips = []
        for i in range(n):
            skips.append(x)
            x = conv_prelu(x, *down[i])
        # ---- up chain + residual adds ---------------------------------------
        fusion = x
        for i in range(n):
            fusion = conv_prelu(fusion - ft_l_refs[i][...], *up[i]) + skips[n - 1 - i]
        out_ref[...] = fusion

    return kernel


# ----------------------------------------------------------------------------
# Host-side wrapper (only tiny layout reshapes + one pallas_call)
# ----------------------------------------------------------------------------
def _to_lane_layout(x):
    # [B, C, H, W] -> [C*H, B*W]  (batch folded into the lane axis)
    b, c, h, w = x.shape
    return jnp.transpose(x, (1, 2, 0, 3)).reshape(c * h, b * w)


def decoder_mdcblock1_forward(ft_h, ft_l_list, prepped):
    B, C0, H, W = ft_h.shape
    n = len(ft_l_list)
    assert len(prepped["down"]) == n and len(prepped["up"]) == n

    vmem = pl.BlockSpec(memory_space=pltpu.MemorySpace.VMEM)
    smem = pl.BlockSpec(memory_space=pltpu.MemorySpace.SMEM)

    args = [_to_lane_layout(ft_h).astype(jnp.float32)]
    in_specs = [vmem]
    for lo in ft_l_list:
        args.append(_to_lane_layout(lo).astype(jnp.float32))
        in_specs.append(vmem)
    for step in list(prepped["down"]) + list(prepped["up"]):
        ccol, rrow, bias, alpha = step
        args += [ccol, rrow, bias, alpha]
        in_specs += [vmem, vmem, vmem, smem]

    out2 = pl.pallas_call(
        _make_fused_kernel(n),
        out_shape=jax.ShapeDtypeStruct((C0 * H, B * W), jnp.float32),
        in_specs=in_specs,
        out_specs=vmem,
    )(*args)

    # [C*H, B*W] -> [B, C, H, W]
    return jnp.transpose(out2.reshape(C0, H, B, W), (2, 0, 1, 3))


# ----------------------------------------------------------------------------
# One-time parameter transform: raw PyTorch-layout weights -> matmul constants
# ----------------------------------------------------------------------------
def _down_consts(w, b, H, W, B):
    """Conv2d(Cin, Cout, 4, stride=2, padding=1) applied at input size (H, W)."""
    w = np.asarray(w, np.float32)            # [Cout, Cin, kh, kw]
    bias = np.asarray(b, np.float32)
    Cout, Cin = w.shape[0], w.shape[1]
    Ho, Wo = H // 2, W // 2
    ccol = np.zeros((4, W, Wo), np.float32)
    rrow = np.zeros((4, Cout * Ho, Cin * H), np.float32)
    ci_idx = np.arange(Cin) * H
    for kw in range(4):
        for j in range(Wo):
            wc = 2 * j + kw - 1              # input column (padding=1)
            if 0 <= wc < W:
                ccol[kw, wc, j] = 1.0
        for co in range(Cout):
            for i in range(Ho):
                for kh in range(4):
                    hr = 2 * i + kh - 1      # input row (padding=1)
                    if 0 <= hr < H:
                        rrow[kw, co * Ho + i, ci_idx + hr] += w[co, :, kh, kw]
    ccol_b = np.stack([np.kron(np.eye(B, dtype=np.float32), ccol[k]) for k in range(4)])
    bias_col = np.repeat(bias, Ho).reshape(Cout * Ho, 1)
    return ccol_b, rrow, bias_col


def _up_consts(w, b, Hc, Wc, B):
    """ConvTranspose2d(Cin, Cout, 4, stride=2, padding=1) at input size (Hc, Wc)."""
    w = np.asarray(w, np.float32)            # torch layout [Cin, Cout, kh, kw]
    bias = np.asarray(b, np.float32)
    Cin, Cout = w.shape[0], w.shape[1]
    Hu, Wu = 2 * Hc, 2 * Wc
    ccol = np.zeros((4, Wc, Wu), np.float32)
    rrow = np.zeros((4, Cout * Hu, Cin * Hc), np.float32)
    ci_idx = np.arange(Cin) * Hc
    for kw in range(4):
        for j in range(Wc):
            bb = 2 * j + kw - 1              # output column = 2*j + kw - padding
            if 0 <= bb < Wu:
                ccol[kw, j, bb] = 1.0
        for co in range(Cout):
            for a in range(Hu):
                for i in range(Hc):
                    kh = a - 2 * i + 1       # output row a = 2*i + kh - padding
                    if 0 <= kh < 4:
                        rrow[kw, co * Hu + a, ci_idx + i] += w[:, co, kh, kw]
    ccol_b = np.stack([np.kron(np.eye(B, dtype=np.float32), ccol[k]) for k in range(4)])
    bias_col = np.repeat(bias, Hu).reshape(Cout * Hu, 1)
    return ccol_b, rrow, bias_col


def prepare_params(raw, H, W, n, B):
    """Pre-transform the raw (PyTorch-layout) weights once, outside the forward."""
    num_ft_m1 = len(raw["down"])
    assert n <= num_ft_m1
    down_steps, up_steps = [], []
    for i in range(n):                                     # down chain, forward order
        w, b, a = raw["down"][num_ft_m1 - n + i]
        Hi, Wi = H // (2 ** i), W // (2 ** i)
        ccol, rrow, bias = _down_consts(w, b, Hi, Wi, B)
        down_steps.append((jnp.asarray(ccol), jnp.asarray(rrow), jnp.asarray(bias),
                           jnp.asarray(a, jnp.float32).reshape(1, 1)))
    for i in range(n):                                     # up chain, forward order
        w, b, a = raw["up"][num_ft_m1 - 1 - i]
        Hc, Wc = H // (2 ** (n - i)), W // (2 ** (n - i))
        ccol, rrow, bias = _up_consts(w, b, Hc, Wc, B)
        up_steps.append((jnp.asarray(ccol), jnp.asarray(rrow), jnp.asarray(bias),
                         jnp.asarray(a, jnp.float32).reshape(1, 1)))
    return {"down": down_steps, "up": up_steps}


# ----------------------------------------------------------------------------
# Raw (PyTorch-layout) parameter init
# ----------------------------------------------------------------------------
def init_raw_params(key, num_filter, num_ft):
    num_ft_m1 = num_ft - 1
    raw = {"down": [], "up": []}
    for i in range(num_ft_m1):
        cin = num_filter * 2 ** i
        cout = num_filter * 2 ** (i + 1)
        key, k1, k2, k3, k4 = jax.random.split(key, 5)
        # ConvBlock: Conv2d(cin, cout, 4, 2, 1) weight [cout, cin, 4, 4]
        dw = 0.05 * jax.random.normal(k1, (cout, cin, 4, 4), jnp.float32)
        db = 0.05 * jax.random.normal(k2, (cout,), jnp.float32)
        raw["down"].append((dw, db, jnp.float32(0.25)))        # PReLU init 0.25
        # DeconvBlock: ConvTranspose2d(cout, cin, 4, 2, 1) weight [cout, cin, 4, 4]
        uw = 0.05 * jax.random.normal(k3, (cout, cin, 4, 4), jnp.float32)
        ub = 0.05 * jax.random.normal(k4, (cin,), jnp.float32)
        raw["up"].append((uw, ub, jnp.float32(0.25)))
    return raw


# ----------------------------------------------------------------------------
# Pure-XLA reference (PyTorch-equivalent semantics) for the self-check
# ----------------------------------------------------------------------------
def _prelu(y, a):
    return jnp.where(y >= 0.0, y, a * y)


def reference_forward(ft_h, ft_l_list, raw):
    hi = jax.lax.Precision.HIGHEST

    def conv_down(x, w, b, a):
        y = jax.lax.conv_general_dilated(
            x, w, window_strides=(2, 2), padding=((1, 1), (1, 1)),
            dimension_numbers=("NCHW", "OIHW", "NCHW"), precision=hi)
        return _prelu(y + b[None, :, None, None], a)

    def deconv_up(x, w, b, a):
        wf = jnp.transpose(w[:, :, ::-1, ::-1], (1, 0, 2, 3))
        y = jax.lax.conv_general_dilated(
            x, wf, window_strides=(1, 1), padding=((2, 2), (2, 2)),
            lhs_dilation=(2, 2),
            dimension_numbers=("NCHW", "OIHW", "NCHW"), precision=hi)
        return _prelu(y + b[None, :, None, None], a)

    num_ft_m1 = len(raw["down"])
    n = len(ft_l_list)
    hs, h = [], ft_h
    for i in range(n):
        hs.append(h)
        w, b, a = raw["down"][num_ft_m1 - n + i]
        h = conv_down(h, w, b, a)
    fusion = h
    for i in range(n):
        w, b, a = raw["up"][num_ft_m1 - i - 1]
        fusion = deconv_up(fusion - ft_l_list[i], w, b, a) + hs[n - i - 1]
    return fusion


if __name__ == "__main__":
    key = jax.random.PRNGKey(0)
    B, num_filter, num_ft, H = 2, 4, 3, 16
    n = 2                                    # len(ft_l_list)

    kp, k1, k2, k3 = jax.random.split(key, 4)
    raw = init_raw_params(kp, num_filter, num_ft)
    prepped = prepare_params(raw, H, H, n, B)

    # ft_h at finest scale; ft_l_list ordered coarse -> fine (iter1 mode)
    ft_h = jax.random.normal(k1, (B, num_filter, H, H), jnp.float32)            # [2,4,16,16]
    ft_l0 = jax.random.normal(k2, (B, num_filter * 4, H // 4, H // 4),          # [2,16,4,4]
                              jnp.float32)
    ft_l1 = jax.random.normal(k3, (B, num_filter * 2, H // 2, H // 2),          # [2,8,8,8]
                              jnp.float32)

    fwd = jax.jit(lambda h, l0, l1: decoder_mdcblock1_forward(h, [l0, l1], prepped))
    out = fwd(ft_h, ft_l0, ft_l1)
    jax.block_until_ready(out)
    assert out.shape == (B, num_filter, H, H), out.shape

    # correctness self-check vs. pure-XLA reference (MXU matmul drift tolerated)
    ref = reference_forward(ft_h, [ft_l0, ft_l1], raw)
    err = float(jnp.max(jnp.abs(out - ref)))
    assert err < 5e-2, f"mismatch vs reference: max |err| = {err}"
    print("KERNEL_OK")
</pallas_src>

<mosaic_0001>
module attributes {stable_mosaic.version = 11 : i64} {
  func.func @kernel(%arg0: memref<64x32xf32, #tpu.memory_space<vmem>>, %arg1: memref<64x8xf32, #tpu.memory_space<vmem>>, %arg2: memref<64x16xf32, #tpu.memory_space<vmem>>, %arg3: memref<4x32x16xf32, #tpu.memory_space<vmem>>, %arg4: memref<4x64x64xf32, #tpu.memory_space<vmem>>, %arg5: memref<64x1xf32, #tpu.memory_space<vmem>>, %arg6: memref<1x1xf32, #tpu.memory_space<smem>>, %arg7: memref<4x16x8xf32, #tpu.memory_space<vmem>>, %arg8: memref<4x64x64xf32, #tpu.memory_space<vmem>>, %arg9: memref<64x1xf32, #tpu.memory_space<vmem>>, %arg10: memref<1x1xf32, #tpu.memory_space<smem>>, %arg11: memref<4x8x16xf32, #tpu.memory_space<vmem>>, %arg12: memref<4x64x64xf32, #tpu.memory_space<vmem>>, %arg13: memref<64x1xf32, #tpu.memory_space<vmem>>, %arg14: memref<1x1xf32, #tpu.memory_space<smem>>, %arg15: memref<4x16x32xf32, #tpu.memory_space<vmem>>, %arg16: memref<4x64x64xf32, #tpu.memory_space<vmem>>, %arg17: memref<64x1xf32, #tpu.memory_space<vmem>>, %arg18: memref<1x1xf32, #tpu.memory_space<smem>>, %arg19: memref<64x32xf32, #tpu.memory_space<vmem>>) attributes {dimension_semantics = [], scalar_prefetch = 0 : i64, scratch_operands = 0 : i64, tpu.core_type = #tpu.core_type<tc>} {
    %c0 = arith.constant 0 : index
    %c0_0 = arith.constant 0 : index
    %0 = vector.load %arg0[%c0, %c0_0] : memref<64x32xf32, #tpu.memory_space<vmem>>, vector<64x32xf32>
    %c0_1 = arith.constant 0 : index
    %c0_2 = arith.constant 0 : index
    %c0_3 = arith.constant 0 : index
    %1 = vector.load %arg3[%c0_1, %c0_2, %c0_3] : memref<4x32x16xf32, #tpu.memory_space<vmem>>, vector<1x32x16xf32>
    %2 = vector.shape_cast %1 : vector<1x32x16xf32> to vector<32x16xf32>
    %cst = arith.constant dense<0.000000e+00> : vector<64x16xf32>
    %3 = tpu.matmul %0, %2, %cst {dimension_numbers = #tpu.dot_dimension_numbers<[1], [0], [0], [1], [0, 0, 1, 1], [], []>} : vector<64x32xf32>, vector<32x16xf32>, vector<64x16xf32> -> vector<64x16xf32>
    %c0_4 = arith.constant 0 : index
    %c0_5 = arith.constant 0 : index
    %c0_6 = arith.constant 0 : index
    %4 = vector.load %arg4[%c0_4, %c0_5, %c0_6] : memref<4x64x64xf32, #tpu.memory_space<vmem>>, vector<1x64x64xf32>
    %5 = vector.shape_cast %4 : vector<1x64x64xf32> to vector<64x64xf32>
    %cst_7 = arith.constant dense<0.000000e+00> : vector<64x16xf32>
    %6 = tpu.matmul %5, %3, %cst_7 {dimension_numbers = #tpu.dot_dimension_numbers<[1], [0], [0], [1], [0, 0, 1, 1], [], []>} : vector<64x64xf32>, vector<64x16xf32>, vector<64x16xf32> -> vector<64x16xf32>
    %c1 = arith.constant 1 : index
    %c0_8 = arith.constant 0 : index
    %c0_9 = arith.constant 0 : index
    %7 = vector.load %arg3[%c1, %c0_8, %c0_9] : memref<4x32x16xf32, #tpu.memory_space<vmem>>, vector<1x32x16xf32>
    %8 = vector.shape_cast %7 : vector<1x32x16xf32> to vector<32x16xf32>
    %cst_10 = arith.constant dense<0.000000e+00> : vector<64x16xf32>
    %9 = tpu.matmul %0, %8, %cst_10 {dimension_numbers = #tpu.dot_dimension_numbers<[1], [0], [0], [1], [0, 0, 1, 1], [], []>} : vector<64x32xf32>, vector<32x16xf32>, vector<64x16xf32> -> vector<64x16xf32>
    %c1_11 = arith.constant 1 : index
    %c0_12 = arith.constant 0 : index
    %c0_13 = arith.constant 0 : index
    %10 = vector.load %arg4[%c1_11, %c0_12, %c0_13] : memref<4x64x64xf32, #tpu.memory_space<vmem>>, vector<1x64x64xf32>
    %11 = vector.shape_cast %10 : vector<1x64x64xf32> to vector<64x64xf32>
    %cst_14 = arith.constant dense<0.000000e+00> : vector<64x16xf32>
    %12 = tpu.matmul %11, %9, %cst_14 {dimension_numbers = #tpu.dot_dimension_numbers<[1], [0], [0], [1], [0, 0, 1, 1], [], []>} : vector<64x64xf32>, vector<64x16xf32>, vector<64x16xf32> -> vector<64x16xf32>
    %13 = arith.addf %6, %12 : vector<64x16xf32>
    %c2 = arith.constant 2 : index
    %c0_15 = arith.constant 0 : index
    %c0_16 = arith.constant 0 : index
    %14 = vector.load %arg3[%c2, %c0_15, %c0_16] : memref<4x32x16xf32, #tpu.memory_space<vmem>>, vector<1x32x16xf32>
    %15 = vector.shape_cast %14 : vector<1x32x16xf32> to vector<32x16xf32>
    %cst_17 = arith.constant dense<0.000000e+00> : vector<64x16xf32>
    %16 = tpu.matmul %0, %15, %cst_17 {dimension_numbers = #tpu.dot_dimension_numbers<[1], [0], [0], [1], [0, 0, 1, 1], [], []>} : vector<64x32xf32>, vector<32x16xf32>, vector<64x16xf32> -> vector<64x16xf32>
    %c2_18 = arith.constant 2 : index
    %c0_19 = arith.constant 0 : index
    %c0_20 = arith.constant 0 : index
    %17 = vector.load %arg4[%c2_18, %c0_19, %c0_20] : memref<4x64x64xf32, #tpu.memory_space<vmem>>, vector<1x64x64xf32>
    %18 = vector.shape_cast %17 : vector<1x64x64xf32> to vector<64x64xf32>
    %cst_21 = arith.constant dense<0.000000e+00> : vector<64x16xf32>
    %19 = tpu.matmul %18, %16, %cst_21 {dimension_numbers = #tpu.dot_dimension_numbers<[1], [0], [0], [1], [0, 0, 1, 1], [], []>} : vector<64x64xf32>, vector<64x16xf32>, vector<64x16xf32> -> vector<64x16xf32>
    %20 = arith.addf %13, %19 : vector<64x16xf32>
    %c3 = arith.constant 3 : index
    %c0_22 = arith.constant 0 : index
    %c0_23 = arith.constant 0 : index
    %21 = vector.load %arg3[%c3, %c0_22, %c0_23] : memref<4x32x16xf32, #tpu.memory_space<vmem>>, vector<1x32x16xf32>
    %22 = vector.shape_cast %21 : vector<1x32x16xf32> to vector<32x16xf32>
    %cst_24 = arith.constant dense<0.000000e+00> : vector<64x16xf32>
    %23 = tpu.matmul %0, %22, %cst_24 {dimension_numbers = #tpu.dot_dimension_numbers<[1], [0], [0], [1], [0, 0, 1, 1], [], []>} : vector<64x32xf32>, vector<32x16xf32>, vector<64x16xf32> -> vector<64x16xf32>
    %c3_25 = arith.constant 3 : index
    %c0_26 = arith.constant 0 : index
    %c0_27 = arith.constant 0 : index
    %24 = vector.load %arg4[%c3_25, %c0_26, %c0_27] : memref<4x64x64xf32, #tpu.memory_space<vmem>>, vector<1x64x64xf32>
    %25 = vector.shape_cast %24 : vector<1x64x64xf32> to vector<64x64xf32>
    %cst_28 = arith.constant dense<0.000000e+00> : vector<64x16xf32>
    %26 = tpu.matmul %25, %23, %cst_28 {dimension_numbers = #tpu.dot_dimension_numbers<[1], [0], [0], [1], [0, 0, 1, 1], [], []>} : vector<64x64xf32>, vector<64x16xf32>, vector<64x16xf32> -> vector<64x16xf32>
    %27 = arith.addf %20, %26 : vector<64x16xf32>
    %c0_29 = arith.constant 0 : index
    %c0_30 = arith.constant 0 : index
    %28 = vector.load %arg5[%c0_29, %c0_30] : memref<64x1xf32, #tpu.memory_space<vmem>>, vector<64x1xf32>
    %29 = vector.broadcast %28 : vector<64x1xf32> to vector<64x16xf32>
    %30 = arith.addf %27, %29 : vector<64x16xf32>
    %c0_31 = arith.constant 0 : index
    %c0_32 = arith.constant 0 : index
    %31 = memref.load %arg6[%c0_31, %c0_32] : memref<1x1xf32, #tpu.memory_space<smem>>
    %cst_33 = arith.constant 0.000000e+00 : f32
    %32 = vector.broadcast %cst_33 : f32 to vector<64x16xf32>
    %33 = arith.cmpf oge, %30, %32 : vector<64x16xf32>
    %34 = vector.broadcast %31 : f32 to vector<64x16xf32>
    %35 = arith.mulf %34, %30 : vector<64x16xf32>
    %36 = arith.select %33, %30, %35 : vector<64x16xi1>, vector<64x16xf32>
    %c0_34 = arith.constant 0 : index
    %c0_35 = arith.constant 0 : index
    %c0_36 = arith.constant 0 : index
    %37 = vector.load %arg7[%c0_34, %c0_35, %c0_36] : memref<4x16x8xf32, #tpu.memory_space<vmem>>, vector<1x16x8xf32>
    %38 = vector.shape_cast %37 : vector<1x16x8xf32> to vector<16x8xf32>
    %cst_37 = arith.constant dense<0.000000e+00> : vector<64x8xf32>
    %39 = tpu.matmul %36, %38, %cst_37 {dimension_numbers = #tpu.dot_dimension_numbers<[1], [0], [0], [1], [0, 0, 1, 1], [], []>} : vector<64x16xf32>, vector<16x8xf32>, vector<64x8xf32> -> vector<64x8xf32>
    %c0_38 = arith.constant 0 : index
    %c0_39 = arith.constant 0 : index
    %c0_40 = arith.constant 0 : index
    %40 = vector.load %arg8[%c0_38, %c0_39, %c0_40] : memref<4x64x64xf32, #tpu.memory_space<vmem>>, vector<1x64x64xf32>
    %41 = vector.shape_cast %40 : vector<1x64x64xf32> to vector<64x64xf32>
    %cst_41 = arith.constant dense<0.000000e+00> : vector<64x8xf32>
    %42 = tpu.matmul %41, %39, %cst_41 {dimension_numbers = #tpu.dot_dimension_numbers<[1], [0], [0], [1], [0, 0, 1, 1], [], []>} : vector<64x64xf32>, vector<64x8xf32>, vector<64x8xf32> -> vector<64x8xf32>
    %c1_42 = arith.constant 1 : index
    %c0_43 = arith.constant 0 : index
    %c0_44 = arith.constant 0 : index
    %43 = vector.load %arg7[%c1_42, %c0_43, %c0_44] : memref<4x16x8xf32, #tpu.memory_space<vmem>>, vector<1x16x8xf32>
    %44 = vector.shape_cast %43 : vector<1x16x8xf32> to vector<16x8xf32>
    %cst_45 = arith.constant dense<0.000000e+00> : vector<64x8xf32>
    %45 = tpu.matmul %36, %44, %cst_45 {dimension_numbers = #tpu.dot_dimension_numbers<[1], [0], [0], [1], [0, 0, 1, 1], [], []>} : vector<64x16xf32>, vector<16x8xf32>, vector<64x8xf32> -> vector<64x8xf32>
    %c1_46 = arith.constant 1 : index
    %c0_47 = arith.constant 0 : index
    %c0_48 = arith.constant 0 : index
    %46 = vector.load %arg8[%c1_46, %c0_47, %c0_48] : memref<4x64x64xf32, #tpu.memory_space<vmem>>, vector<1x64x64xf32>
    %47 = vector.shape_cast %46 : vector<1x64x64xf32> to vector<64x64xf32>
    %cst_49 = arith.constant dense<0.000000e+00> : vector<64x8xf32>
    %48 = tpu.matmul %47, %45, %cst_49 {dimension_numbers = #tpu.dot_dimension_numbers<[1], [0], [0], [1], [0, 0, 1, 1], [], []>} : vector<64x64xf32>, vector<64x8xf32>, vector<64x8xf32> -> vector<64x8xf32>
    %49 = arith.addf %42, %48 : vector<64x8xf32>
    %c2_50 = arith.constant 2 : index
    %c0_51 = arith.constant 0 : index
    %c0_52 = arith.constant 0 : index
    %50 = vector.load %arg7[%c2_50, %c0_51, %c0_52] : memref<4x16x8xf32, #tpu.memory_space<vmem>>, vector<1x16x8xf32>
    %51 = vector.shape_cast %50 : vector<1x16x8xf32> to vector<16x8xf32>
    %cst_53 = arith.constant dense<0.000000e+00> : vector<64x8xf32>
    %52 = tpu.matmul %36, %51, %cst_53 {dimension_numbers = #tpu.dot_dimension_numbers<[1], [0], [0], [1], [0, 0, 1, 1], [], []>} : vector<64x16xf32>, vector<16x8xf32>, vector<64x8xf32> -> vector<64x8xf32>
    %c2_54 = arith.constant 2 : index
    %c0_55 = arith.constant 0 : index
    %c0_56 = arith.constant 0 : index
    %53 = vector.load %arg8[%c2_54, %c0_55, %c0_56] : memref<4x64x64xf32, #tpu.memory_space<vmem>>, vector<1x64x64xf32>
    %54 = vector.shape_cast %53 : vector<1x64x64xf32> to vector<64x64xf32>
    %cst_57 = arith.constant dense<0.000000e+00> : vector<64x8xf32>
    %55 = tpu.matmul %54, %52, %cst_57 {dimension_numbers = #tpu.dot_dimension_numbers<[1], [0], [0], [1], [0, 0, 1, 1], [], []>} : vector<64x64xf32>, vector<64x8xf32>, vector<64x8xf32> -> vector<64x8xf32>
    %56 = arith.addf %49, %55 : vector<64x8xf32>
    %c3_58 = arith.constant 3 : index
    %c0_59 = arith.constant 0 : index
    %c0_60 = arith.constant 0 : index
    %57 = vector.load %arg7[%c3_58, %c0_59, %c0_60] : memref<4x16x8xf32, #tpu.memory_space<vmem>>, vector<1x16x8xf32>
    %58 = vector.shape_cast %57 : vector<1x16x8xf32> to vector<16x8xf32>
    %cst_61 = arith.constant dense<0.000000e+00> : vector<64x8xf32>
    %59 = tpu.matmul %36, %58, %cst_61 {dimension_numbers = #tpu.dot_dimension_numbers<[1], [0], [0], [1], [0, 0, 1, 1], [], []>} : vector<64x16xf32>, vector<16x8xf32>, vector<64x8xf32> -> vector<64x8xf32>
    %c3_62 = arith.constant 3 : index
    %c0_63 = arith.constant 0 : index
    %c0_64 = arith.constant 0 : index
    %60 = vector.load %arg8[%c3_62, %c0_63, %c0_64] : memref<4x64x64xf32, #tpu.memory_space<vmem>>, vector<1x64x64xf32>
    %61 = vector.shape_cast %60 : vector<1x64x64xf32> to vector<64x64xf32>
    %cst_65 = arith.constant dense<0.000000e+00> : vector<64x8xf32>
    %62 = tpu.matmul %61, %59, %cst_65 {dimension_numbers = #tpu.dot_dimension_numbers<[1], [0], [0], [1], [0, 0, 1, 1], [], []>} : vector<64x64xf32>, vector<64x8xf32>, vector<64x8xf32> -> vector<64x8xf32>
    %63 = arith.addf %56, %62 : vector<64x8xf32>
    %c0_66 = arith.constant 0 : index
    %c0_67 = arith.constant 0 : index
    %64 = vector.load %arg9[%c0_66, %c0_67] : memref<64x1xf32, #tpu.memory_space<vmem>>, vector<64x1xf32>
    %65 = vector.broadcast %64 : vector<64x1xf32> to vector<64x8xf32>
    %66 = arith.addf %63, %65 : vector<64x8xf32>
    %c0_68 = arith.constant 0 : index
    %c0_69 = arith.constant 0 : index
    %67 = memref.load %arg10[%c0_68, %c0_69] : memref<1x1xf32, #tpu.memory_space<smem>>
    %cst_70 = arith.constant 0.000000e+00 : f32
    %68 = vector.broadcast %cst_70 : f32 to vector<64x8xf32>
    %69 = arith.cmpf oge, %66, %68 : vector<64x8xf32>
    %70 = vector.broadcast %67 : f32 to vector<64x8xf32>
    %71 = arith.mulf %70, %66 : vector<64x8xf32>
    %72 = arith.select %69, %66, %71 : vector<64x8xi1>, vector<64x8xf32>
    %c0_71 = arith.constant 0 : index
    %c0_72 = arith.constant 0 : index
    %73 = vector.load %arg1[%c0_71, %c0_72] : memref<64x8xf32, #tpu.memory_space<vmem>>, vector<64x8xf32>
    %74 = arith.subf %72, %73 : vector<64x8xf32>
    %c0_73 = arith.constant 0 : index
    %c0_74 = arith.constant 0 : index
    %c0_75 = arith.constant 0 : index
    %75 = vector.load %arg11[%c0_73, %c0_74, %c0_75] : memref<4x8x16xf32, #tpu.memory_space<vmem>>, vector<1x8x16xf32>
    %76 = vector.shape_cast %75 : vector<1x8x16xf32> to vector<8x16xf32>
    %cst_76 = arith.constant dense<0.000000e+00> : vector<64x16xf32>
    %77 = tpu.matmul %74, %76, %cst_76 {dimension_numbers = #tpu.dot_dimension_numbers<[1], [0], [0], [1], [0, 0, 1, 1], [], []>} : vector<64x8xf32>, vector<8x16xf32>, vector<64x16xf32> -> vector<64x16xf32>
    %c0_77 = arith.constant 0 : index
    %c0_78 = arith.constant 0 : index
    %c0_79 = arith.constant 0 : index
    %78 = vector.load %arg12[%c0_77, %c0_78, %c0_79] : memref<4x64x64xf32, #tpu.memory_space<vmem>>, vector<1x64x64xf32>
    %79 = vector.shape_cast %78 : vector<1x64x64xf32> to vector<64x64xf32>
    %cst_80 = arith.constant dense<0.000000e+00> : vector<64x16xf32>
    %80 = tpu.matmul %79, %77, %cst_80 {dimension_numbers = #tpu.dot_dimension_numbers<[1], [0], [0], [1], [0, 0, 1, 1], [], []>} : vector<64x64xf32>, vector<64x16xf32>, vector<64x16xf32> -> vector<64x16xf32>
    %c1_81 = arith.constant 1 : index
    %c0_82 = arith.constant 0 : index
    %c0_83 = arith.constant 0 : index
    %81 = vector.load %arg11[%c1_81, %c0_82, %c0_83] : memref<4x8x16xf32, #tpu.memory_space<vmem>>, vector<1x8x16xf32>
    %82 = vector.shape_cast %81 : vector<1x8x16xf32> to vector<8x16xf32>
    %cst_84 = arith.constant dense<0.000000e+00> : vector<64x16xf32>
    %83 = tpu.matmul %74, %82, %cst_84 {dimension_numbers = #tpu.dot_dimension_numbers<[1], [0], [0], [1], [0, 0, 1, 1], [], []>} : vector<64x8xf32>, vector<8x16xf32>, vector<64x16xf32> -> vector<64x16xf32>
    %c1_85 = arith.constant 1 : index
    %c0_86 = arith.constant 0 : index
    %c0_87 = arith.constant 0 : index
    %84 = vector.load %arg12[%c1_85, %c0_86, %c0_87] : memref<4x64x64xf32, #tpu.memory_space<vmem>>, vector<1x64x64xf32>
    %85 = vector.shape_cast %84 : vector<1x64x64xf32> to vector<64x64xf32>
    %cst_88 = arith.constant dense<0.000000e+00> : vector<64x16xf32>
    %86 = tpu.matmul %85, %83, %cst_88 {dimension_numbers = #tpu.dot_dimension_numbers<[1], [0], [0], [1], [0, 0, 1, 1], [], []>} : vector<64x64xf32>, vector<64x16xf32>, vector<64x16xf32> -> vector<64x16xf32>
    %87 = arith.addf %80, %86 : vector<64x16xf32>
    %c2_89 = arith.constant 2 : index
    %c0_90 = arith.constant 0 : index
    %c0_91 = arith.constant 0 : index
    %88 = vector.load %arg11[%c2_89, %c0_90, %c0_91] : memref<4x8x16xf32, #tpu.memory_space<vmem>>, vector<1x8x16xf32>
    %89 = vector.shape_cast %88 : vector<1x8x16xf32> to vector<8x16xf32>
    %cst_92 = arith.constant dense<0.000000e+00> : vector<64x16xf32>
    %90 = tpu.matmul %74, %89, %cst_92 {dimension_numbers = #tpu.dot_dimension_numbers<[1], [0], [0], [1], [0, 0, 1, 1], [], []>} : vector<64x8xf32>, vector<8x16xf32>, vector<64x16xf32> -> vector<64x16xf32>
    %c2_93 = arith.constant 2 : index
    %c0_94 = arith.constant 0 : index
    %c0_95 = arith.constant 0 : index
    %91 = vector.load %arg12[%c2_93, %c0_94, %c0_95] : memref<4x64x64xf32, #tpu.memory_space<vmem>>, vector<1x64x64xf32>
    %92 = vector.shape_cast %91 : vector<1x64x64xf32> to vector<64x64xf32>
    %cst_96 = arith.constant dense<0.000000e+00> : vector<64x16xf32>
    %93 = tpu.matmul %92, %90, %cst_96 {dimension_numbers = #tpu.dot_dimension_numbers<[1], [0], [0], [1], [0, 0, 1, 1], [], []>} : vector<64x64xf32>, vector<64x16xf32>, vector<64x16xf32> -> vector<64x16xf32>
    %94 = arith.addf %87, %93 : vector<64x16xf32>
    %c3_97 = arith.constant 3 : index
    %c0_98 = arith.constant 0 : index
    %c0_99 = arith.constant 0 : index
    %95 = vector.load %arg11[%c3_97, %c0_98, %c0_99] : memref<4x8x16xf32, #tpu.memory_space<vmem>>, vector<1x8x16xf32>
    %96 = vector.shape_cast %95 : vector<1x8x16xf32> to vector<8x16xf32>
    %cst_100 = arith.constant dense<0.000000e+00> : vector<64x16xf32>
    %97 = tpu.matmul %74, %96, %cst_100 {dimension_numbers = #tpu.dot_dimension_numbers<[1], [0], [0], [1], [0, 0, 1, 1], [], []>} : vector<64x8xf32>, vector<8x16xf32>, vector<64x16xf32> -> vector<64x16xf32>
    %c3_101 = arith.constant 3 : index
    %c0_102 = arith.constant 0 : index
    %c0_103 = arith.constant 0 : index
    %98 = vector.load %arg12[%c3_101, %c0_102, %c0_103] : memref<4x64x64xf32, #tpu.memory_space<vmem>>, vector<1x64x64xf32>
    %99 = vector.shape_cast %98 : vector<1x64x64xf32> to vector<64x64xf32>
    %cst_104 = arith.constant dense<0.000000e+00> : vector<64x16xf32>
    %100 = tpu.matmul %99, %97, %cst_104 {dimension_numbers = #tpu.dot_dimension_numbers<[1], [0], [0], [1], [0, 0, 1, 1], [], []>} : vector<64x64xf32>, vector<64x16xf32>, vector<64x16xf32> -> vector<64x16xf32>
    %101 = arith.addf %94, %100 : vector<64x16xf32>
    %c0_105 = arith.constant 0 : index
    %c0_106 = arith.constant 0 : index
    %102 = vector.load %arg13[%c0_105, %c0_106] : memref<64x1xf32, #tpu.memory_space<vmem>>, vector<64x1xf32>
    %103 = vector.broadcast %102 : vector<64x1xf32> to vector<64x16xf32>
    %104 = arith.addf %101, %103 : vector<64x16xf32>
    %c0_107 = arith.constant 0 : index
    %c0_108 = arith.constant 0 : index
    %105 = memref.load %arg14[%c0_107, %c0_108] : memref<1x1xf32, #tpu.memory_space<smem>>
    %cst_109 = arith.constant 0.000000e+00 : f32
    %106 = vector.broadcast %cst_109 : f32 to vector<64x16xf32>
    %107 = arith.cmpf oge, %104, %106 : vector<64x16xf32>
    %108 = vector.broadcast %105 : f32 to vector<64x16xf32>
    %109 = arith.mulf %108, %104 : vector<64x16xf32>
    %110 = arith.select %107, %104, %109 : vector<64x16xi1>, vector<64x16xf32>
    %111 = arith.addf %110, %36 : vector<64x16xf32>
    %c0_110 = arith.constant 0 : index
    %c0_111 = arith.constant 0 : index
    %112 = vector.load %arg2[%c0_110, %c0_111] : memref<64x16xf32, #tpu.memory_space<vmem>>, vector<64x16xf32>
    %113 = arith.subf %111, %112 : vector<64x16xf32>
    %c0_112 = arith.constant 0 : index
    %c0_113 = arith.constant 0 : index
    %c0_114 = arith.constant 0 : index
    %114 = vector.load %arg15[%c0_112, %c0_113, %c0_114] : memref<4x16x32xf32, #tpu.memory_space<vmem>>, vector<1x16x32xf32>
    %115 = vector.shape_cast %114 : vector<1x16x32xf32> to vector<16x32xf32>
    %cst_115 = arith.constant dense<0.000000e+00> : vector<64x32xf32>
    %116 = tpu.matmul %113, %115, %cst_115 {dimension_numbers = #tpu.dot_dimension_numbers<[1], [0], [0], [1], [0, 0, 1, 1], [], []>} : vector<64x16xf32>, vector<16x32xf32>, vector<64x32xf32> -> vector<64x32xf32>
    %c0_116 = arith.constant 0 : index
    %c0_117 = arith.constant 0 : index
    %c0_118 = arith.constant 0 : index
    %117 = vector.load %arg16[%c0_116, %c0_117, %c0_118] : memref<4x64x64xf32, #tpu.memory_space<vmem>>, vector<1x64x64xf32>
    %118 = vector.shape_cast %117 : vector<1x64x64xf32> to vector<64x64xf32>
    %cst_119 = arith.constant dense<0.000000e+00> : vector<64x32xf32>
    %119 = tpu.matmul %118, %116, %cst_119 {dimension_numbers = #tpu.dot_dimension_numbers<[1], [0], [0], [1], [0, 0, 1, 1], [], []>} : vector<64x64xf32>, vector<64x32xf32>, vector<64x32xf32> -> vector<64x32xf32>
    %c1_120 = arith.constant 1 : index
    %c0_121 = arith.constant 0 : index
    %c0_122 = arith.constant 0 : index
    %120 = vector.load %arg15[%c1_120, %c0_121, %c0_122] : memref<4x16x32xf32, #tpu.memory_space<vmem>>, vector<1x16x32xf32>
    %121 = vector.shape_cast %120 : vector<1x16x32xf32> to vector<16x32xf32>
    %cst_123 = arith.constant dense<0.000000e+00> : vector<64x32xf32>
    %122 = tpu.matmul %113, %121, %cst_123 {dimension_numbers = #tpu.dot_dimension_numbers<[1], [0], [0], [1], [0, 0, 1, 1], [], []>} : vector<64x16xf32>, vector<16x32xf32>, vector<64x32xf32> -> vector<64x32xf32>
    %c1_124 = arith.constant 1 : index
    %c0_125 = arith.constant 0 : index
    %c0_126 = arith.constant 0 : index
    %123 = vector.load %arg16[%c1_124, %c0_125, %c0_126] : memref<4x64x64xf32, #tpu.memory_space<vmem>>, vector<1x64x64xf32>
    %124 = vector.shape_cast %123 : vector<1x64x64xf32> to vector<64x64xf32>
    %cst_127 = arith.constant dense<0.000000e+00> : vector<64x32xf32>
    %125 = tpu.matmul %124, %122, %cst_127 {dimension_numbers = #tpu.dot_dimension_numbers<[1], [0], [0], [1], [0, 0, 1, 1], [], []>} : vector<64x64xf32>, vector<64x32xf32>, vector<64x32xf32> -> vector<64x32xf32>
    %126 = arith.addf %119, %125 : vector<64x32xf32>
    %c2_128 = arith.constant 2 : index
    %c0_129 = arith.constant 0 : index
    %c0_130 = arith.constant 0 : index
    %127 = vector.load %arg15[%c2_128, %c0_129, %c0_130] : memref<4x16x32xf32, #tpu.memory_space<vmem>>, vector<1x16x32xf32>
    %128 = vector.shape_cast %127 : vector<1x16x32xf32> to vector<16x32xf32>
    %cst_131 = arith.constant dense<0.000000e+00> : vector<64x32xf32>
    %129 = tpu.matmul %113, %128, %cst_131 {dimension_numbers = #tpu.dot_dimension_numbers<[1], [0], [0], [1], [0, 0, 1, 1], [], []>} : vector<64x16xf32>, vector<16x32xf32>, vector<64x32xf32> -> vector<64x32xf32>
    %c2_132 = arith.constant 2 : index
    %c0_133 = arith.constant 0 : index
    %c0_134 = arith.constant 0 : index
    %130 = vector.load %arg16[%c2_132, %c0_133, %c0_134] : memref<4x64x64xf32, #tpu.memory_space<vmem>>, vector<1x64x64xf32>
    %131 = vector.shape_cast %130 : vector<1x64x64xf32> to vector<64x64xf32>
    %cst_135 = arith.constant dense<0.000000e+00> : vector<64x32xf32>
    %132 = tpu.matmul %131, %129, %cst_135 {dimension_numbers = #tpu.dot_dimension_numbers<[1], [0], [0], [1], [0, 0, 1, 1], [], []>} : vector<64x64xf32>, vector<64x32xf32>, vector<64x32xf32> -> vector<64x32xf32>
    %133 = arith.addf %126, %132 : vector<64x32xf32>
    %c3_136 = arith.constant 3 : index
    %c0_137 = arith.constant 0 : index
    %c0_138 = arith.constant 0 : index
    %134 = vector.load %arg15[%c3_136, %c0_137, %c0_138] : memref<4x16x32xf32, #tpu.memory_space<vmem>>, vector<1x16x32xf32>
    %135 = vector.shape_cast %134 : vector<1x16x32xf32> to vector<16x32xf32>
    %cst_139 = arith.constant dense<0.000000e+00> : vector<64x32xf32>
    %136 = tpu.matmul %113, %135, %cst_139 {dimension_numbers = #tpu.dot_dimension_numbers<[1], [0], [0], [1], [0, 0, 1, 1], [], []>} : vector<64x16xf32>, vector<16x32xf32>, vector<64x32xf32> -> vector<64x32xf32>
    %c3_140 = arith.constant 3 : index
    %c0_141 = arith.constant 0 : index
    %c0_142 = arith.constant 0 : index
    %137 = vector.load %arg16[%c3_140, %c0_141, %c0_142] : memref<4x64x64xf32, #tpu.memory_space<vmem>>, vector<1x64x64xf32>
    %138 = vector.shape_cast %137 : vector<1x64x64xf32> to vector<64x64xf32>
    %cst_143 = arith.constant dense<0.000000e+00> : vector<64x32xf32>
    %139 = tpu.matmul %138, %136, %cst_143 {dimension_numbers = #tpu.dot_dimension_numbers<[1], [0], [0], [1], [0, 0, 1, 1], [], []>} : vector<64x64xf32>, vector<64x32xf32>, vector<64x32xf32> -> vector<64x32xf32>
    %140 = arith.addf %133, %139 : vector<64x32xf32>
    %c0_144 = arith.constant 0 : index
    %c0_145 = arith.constant 0 : index
    %141 = vector.load %arg17[%c0_144, %c0_145] : memref<64x1xf32, #tpu.memory_space<vmem>>, vector<64x1xf32>
    %142 = vector.broadcast %141 : vector<64x1xf32> to vector<64x32xf32>
    %143 = arith.addf %140, %142 : vector<64x32xf32>
    %c0_146 = arith.constant 0 : index
    %c0_147 = arith.constant 0 : index
    %144 = memref.load %arg18[%c0_146, %c0_147] : memref<1x1xf32, #tpu.memory_space<smem>>
    %cst_148 = arith.constant 0.000000e+00 : f32
    %145 = vector.broadcast %cst_148 : f32 to vector<64x32xf32>
    %146 = arith.cmpf oge, %143, %145 : vector<64x32xf32>
    %147 = vector.broadcast %144 : f32 to vector<64x32xf32>
    %148 = arith.mulf %147, %143 : vector<64x32xf32>
    %149 = arith.select %146, %143, %148 : vector<64x32xi1>, vector<64x32xf32>
    %150 = arith.addf %149, %0 : vector<64x32xf32>
    %c0_149 = arith.constant 0 : index
    %c0_150 = arith.constant 0 : index
    %151 = vector.load %arg19[%c0_149, %c0_150] : memref<64x32xf32, #tpu.memory_space<vmem>>, vector<64x32xf32>
    tpu.vector_store %arg19[%c0_149, %c0_150], %150 {strides = array<i32>} : memref<64x32xf32, #tpu.memory_space<vmem>>, vector<64x32xf32>,
    return
  }
}

</mosaic_0001>

<llo_original>
// kernel: _lambda_.1
$region0: #{_lambda_.1}
  #allocation0 [shape = 'u32[]', space=smem, size = 0x4, offset = 0x4, fixed_abs, tag = 'smem constant byte address 0x4 - core index']
  #allocation1 [shape = 'u32[144,128]{1,0:T(1,128)}', space=vmem, size = 0x12000, scoped, tag = 'internal scratch']
  #allocation2 [shape = 'f32[1,1]{1,0:T(1,128)S(6)}', space=smem, size = 0x200, scoped, tag = 'scoped memory for _lambda_.1']
  #allocation3 [shape = 'f32[1,1]{1,0:T(1,128)S(6)}', space=smem, size = 0x200, scoped, tag = 'scoped memory for _lambda_.1']
  #allocation4 [shape = 'f32[1,1]{1,0:T(1,128)S(6)}', space=smem, size = 0x200, scoped, tag = 'scoped memory for _lambda_.1']
  #allocation5 [shape = 'f32[1,1]{1,0:T(1,128)S(6)}', space=smem, size = 0x200, scoped, tag = 'scoped memory for _lambda_.1']
  %s0 = inlined_call_operand.vmem [shape: f32[64,32], index: 0, kind: input, shape index: {}]
  %s1 = inlined_call_operand.vmem [shape: f32[64,8], index: 1, kind: input, shape index: {}]
  %s2 = inlined_call_operand.vmem [shape: f32[64,16], index: 2, kind: input, shape index: {}]
  %s3 = inlined_call_operand.vmem [shape: f32[4,32,16], index: 3, kind: input, shape index: {}]
  %s4 = inlined_call_operand.vmem [shape: f32[4,64,64], index: 4, kind: input, shape index: {}]
  %s5 = inlined_call_operand.hbm [shape: f32[64,1], index: 5, kind: input, shape index: {}]
  %s6 = inlined_call_operand.<no memory space> [shape: f32[1,1], index: 6, kind: input, shape index: {}, may-alias: {6,10,14,18}]
  %s7 = inlined_call_operand.hbm [shape: f32[4,16,8], index: 7, kind: input, shape index: {}]
  %s8 = inlined_call_operand.vmem [shape: f32[4,64,64], index: 8, kind: input, shape index: {}]
  %s9 = inlined_call_operand.hbm [shape: f32[64,1], index: 9, kind: input, shape index: {}]
  %s10 = inlined_call_operand.<no memory space> [shape: f32[1,1], index: 10, kind: input, shape index: {}, may-alias: {6,10,14,18}]
  %s11 = inlined_call_operand.hbm [shape: f32[4,8,16], index: 11, kind: input, shape index: {}]
  %s12 = inlined_call_operand.vmem [shape: f32[4,64,64], index: 12, kind: input, shape index: {}]
  %s13 = inlined_call_operand.hbm [shape: f32[64,1], index: 13, kind: input, shape index: {}]
  %s14 = inlined_call_operand.<no memory space> [shape: f32[1,1], index: 14, kind: input, shape index: {}, may-alias: {6,10,14,18}]
  %s15 = inlined_call_operand.vmem [shape: f32[4,16,32], index: 15, kind: input, shape index: {}]
  %s16 = inlined_call_operand.vmem [shape: f32[4,64,64], index: 16, kind: input, shape index: {}]
  %s17 = inlined_call_operand.vmem [shape: f32[64,1], index: 17, kind: input, shape index: {}]
  %s18 = inlined_call_operand.<no memory space> [shape: f32[1,1], index: 18, kind: input, shape index: {}, may-alias: {6,10,14,18}]
  %s19 = inlined_call_operand.vmem [shape: f32[64,32], index: 19, kind: output, shape index: {}]
  %s20 = sld [smem:[#allocation0]]
  $region106: #{_lambda_.1} parent=0
    _
  %s22 = ssub.s32 1, %s20
  %s23 = scalar_select 0, %s22, %s20
  %24 = sst [smem:[#allocation2]] %s6
  %25 = sst [smem:[#allocation3]] %s10
  %26 = sst [smem:[#allocation4]] %s14
  %27 = sst [smem:[#allocation5]] %s18
  $region1: #{_lambda_.1} parent=0
    #allocation6 [shape = 'u8[32768]{0}', space=vmem, size = 0x8000, scoped, tag = 'input window, operand 5, single buffered']
    #allocation7 [shape = 's32[1]{0}', space=sflag, size = 0x4, scoped, tag = 'scoped memory for _lambda_.1']
    #allocation8 [shape = 'u8[32768]{0}', space=vmem, size = 0x8000, scoped, tag = 'input window, operand 7, single buffered']
    #allocation9 [shape = 's32[1]{0}', space=sflag, size = 0x4, scoped, tag = 'scoped memory for _lambda_.1']
    #allocation10 [shape = 'u8[32768]{0}', space=vmem, size = 0x8000, scoped, tag = 'input window, operand 9, single buffered']
    #allocation11 [shape = 'u8[16384]{0}', space=vmem, size = 0x4000, scoped, tag = 'input window, operand 11, single buffered']
    #allocation12 [shape = 's32[1]{0}', space=sflag, size = 0x4, scoped, tag = 'scoped memory for _lambda_.1']
    #allocation13 [shape = 'u8[32768]{0}', space=vmem, size = 0x8000, scoped, tag = 'input window, operand 13, single buffered']
    %28 = vsyncpa [#allocation7], 0
    %29 = vsyncpa [#allocation9], 0
    %30 = vsyncpa [#allocation12], 0
    // Predicated region
    $region2: #{_lambda_.1} parent=1 // pred_check
      _
    $region3: #{_lambda_.1} parent=1 // pred_check_branch
      %32 = sbr.rel (0) target = $region5
    $region4: #{_lambda_.1} parent=1 // pred_region
      _
    $region5: #{_lambda_.1} parent=1 // pred_fallthru
      _
    // Predicated region
    $region6: #{_lambda_.1} parent=1 // pred_check
      _
    $region7: #{_lambda_.1} parent=1 // pred_check_branch
      %34 = sbr.rel (0) target = $region9
    $region8: #{_lambda_.1} parent=1 // pred_region
      _
    $region9: #{_lambda_.1} parent=1 // pred_fallthru
      _
    // Predicated region
    $region10: #{_lambda_.1} parent=1 // pred_check
      _
    $region11: #{_lambda_.1} parent=1 // pred_check_branch
      %36 = sbr.rel (0) target = $region13
    $region12: #{_lambda_.1} parent=1 // pred_region
      _
    $region13: #{_lambda_.1} parent=1 // pred_fallthru
      _
    // Predicated region
    $region14: #{_lambda_.1} parent=1 // pred_check
      _
    $region15: #{_lambda_.1} parent=1 // pred_check_branch
      %38 = sbr.rel (0) target = $region17
    $region16: #{_lambda_.1} parent=1 // pred_region
      _
    $region17: #{_lambda_.1} parent=1 // pred_fallthru
      _
    // Predicated region
    $region18: #{_lambda_.1} parent=1 // pred_check
      _
    $region19: #{_lambda_.1} parent=1 // pred_check_branch
      %40 = sbr.rel (0) target = $region21
    $region20: #{_lambda_.1} parent=1 // pred_region
      _
    $region21: #{_lambda_.1} parent=1 // pred_fallthru
      _
    // Predicated region
    $region22: #{_lambda_.1} parent=1 // pred_check
      _
    $region23: #{_lambda_.1} parent=1 // pred_check_branch
      %42 = sbr.rel (0) target = $region25
    $region24: #{_lambda_.1} parent=1 // pred_region
      %s44 = ssub.s32 1024, 1024
      %45 = vsyncadd [#allocation7], %s44
      %s46 = sshll.u32 [#allocation6], 4
      %s47 = int_to_ptr.vmem [resolvable:$true] %s46
      %52 = dma.hbm_to_vmem [thread:$0]  %s5, 1024, %s47, [#allocation7], 128, 128, 8
    $region25: #{_lambda_.1} parent=1 // pred_fallthru
      _
    // Predicated region
    $region26: #{_lambda_.1} parent=1 // pred_check
      _
    $region27: #{_lambda_.1} parent=1 // pred_check_branch
      %54 = sbr.rel (0) target = $region29
    $region28: #{_lambda_.1} parent=1 // pred_region
      _
    $region29: #{_lambda_.1} parent=1 // pred_fallthru
      _
    // Predicated region
    $region30: #{_lambda_.1} parent=1 // pred_check
      _
    $region31: #{_lambda_.1} parent=1 // pred_check_branch
      %56 = sbr.rel (0) target = $region33
    $region32: #{_lambda_.1} parent=1 // pred_region
      %s58 = ssub.s32 1024, 1024
      %59 = vsyncadd [#allocation9], %s58
      %s60 = sshll.u32 [#allocation8], 4
      %s61 = int_to_ptr.vmem [resolvable:$true] %s60
      %66 = dma.hbm_to_vmem [thread:$0]  %s7, 1024, %s61, [#allocation9], 128, 128, 8
    $region33: #{_lambda_.1} parent=1 // pred_fallthru
      _
    // Predicated region
    $region34: #{_lambda_.1} parent=1 // pred_check
      _
    $region35: #{_lambda_.1} parent=1 // pred_check_branch
      %68 = sbr.rel (0) target = $region37
    $region36: #{_lambda_.1} parent=1 // pred_region
      _
    $region37: #{_lambda_.1} parent=1 // pred_fallthru
      _
    // Predicated region
    $region38: #{_lambda_.1} parent=1 // pred_check
      _
    $region39: #{_lambda_.1} parent=1 // pred_check_branch
      %70 = sbr.rel (0) target = $region41
    $region40: #{_lambda_.1} parent=1 // pred_region
      %s72 = ssub.s32 1024, 1024
      %73 = vsyncadd [#allocation9], %s72
      %s74 = sshll.u32 [#allocation10], 4
      %s75 = int_to_ptr.vmem [resolvable:$true] %s74
      %80 = dma.hbm_to_vmem [thread:$0]  %s9, 1024, %s75, [#allocation9], 128, 128, 8
    $region41: #{_lambda_.1} parent=1 // pred_fallthru
      _
    // Predicated region
    $region42: #{_lambda_.1} parent=1 // pred_check
      _
    $region43: #{_lambda_.1} parent=1 // pred_check_branch
      %82 = sbr.rel (0) target = $region45
    $region44: #{_lambda_.1} parent=1 // pred_region
      _
    $region45: #{_lambda_.1} parent=1 // pred_fallthru
      _
    // Predicated region
    $region46: #{_lambda_.1} parent=1 // pred_check
      _
    $region47: #{_lambda_.1} parent=1 // pred_check_branch
      %84 = sbr.rel (0) target = $region49
    $region48: #{_lambda_.1} parent=1 // pred_region
      %s86 = ssub.s32 512, 512
      %87 = vsyncadd [#allocation12], %s86
      %s88 = sshll.u32 [#allocation11], 4
      %s89 = int_to_ptr.vmem [resolvable:$true] %s88
      %94 = dma.hbm_to_vmem [thread:$0]  %s11, 512, %s89, [#allocation12], 128, 128, 8
    $region49: #{_lambda_.1} parent=1 // pred_fallthru
      _
    // Predicated region
    $region50: #{_lambda_.1} parent=1 // pred_check
      _
    $region51: #{_lambda_.1} parent=1 // pred_check_branch
      %96 = sbr.rel (0) target = $region53
    $region52: #{_lambda_.1} parent=1 // pred_region
      _
    $region53: #{_lambda_.1} parent=1 // pred_fallthru
      _
    // Predicated region
    $region54: #{_lambda_.1} parent=1 // pred_check
      _
    $region55: #{_lambda_.1} parent=1 // pred_check_branch
      %98 = sbr.rel (0) target = $region57
    $region56: #{_lambda_.1} parent=1 // pred_region
      %s100 = ssub.s32 1024, 1024
      %101 = vsyncadd [#allocation12], %s100
      %s102 = sshll.u32 [#allocation13], 4
      %s103 = int_to_ptr.vmem [resolvable:$true] %s102
      %108 = dma.hbm_to_vmem [thread:$0]  %s13, 1024, %s103, [#allocation12], 128, 128, 8
    $region57: #{_lambda_.1} parent=1 // pred_fallthru
      _
    // Predicated region
    $region58: #{_lambda_.1} parent=1 // pred_check
      _
    $region59: #{_lambda_.1} parent=1 // pred_check_branch
      %110 = sbr.rel (0) target = $region61
    $region60: #{_lambda_.1} parent=1 // pred_region
      _
    $region61: #{_lambda_.1} parent=1 // pred_fallthru
      _
    // Predicated region
    $region62: #{_lambda_.1} parent=1 // pred_check
      _
    $region63: #{_lambda_.1} parent=1 // pred_check_branch
      %112 = sbr.rel (0) target = $region65
    $region64: #{_lambda_.1} parent=1 // pred_region
      _
    $region65: #{_lambda_.1} parent=1 // pred_fallthru
      _
    // Predicated region
    $region66: #{_lambda_.1} parent=1 // pred_check
      _
    $region67: #{_lambda_.1} parent=1 // pred_check_branch
      %114 = sbr.rel (0) target = $region69
    $region68: #{_lambda_.1} parent=1 // pred_region
      _
    $region69: #{_lambda_.1} parent=1 // pred_fallthru
      _
    // Predicated region
    $region70: #{_lambda_.1} parent=1 // pred_check
      _
    $region71: #{_lambda_.1} parent=1 // pred_check_branch
      %116 = sbr.rel (0) target = $region73
    $region72: #{_lambda_.1} parent=1 // pred_region
      _
    $region73: #{_lambda_.1} parent=1 // pred_fallthru
      _
    // Predicated region
    $region74: #{_lambda_.1} parent=1 // pred_check
      _
    $region75: #{_lambda_.1} parent=1 // pred_check_branch
      %118 = sbr.rel (0) target = $region77
    $region76: #{_lambda_.1} parent=1 // pred_region
      _
    $region77: #{_lambda_.1} parent=1 // pred_fallthru
      _
    // Predicated region
    $region78: #{_lambda_.1} parent=1 // pred_check
      _
    $region79: #{_lambda_.1} parent=1 // pred_check_branch
      %120 = sbr.rel (0) target = $region81
    $region80: #{_lambda_.1} parent=1 // pred_region
      %121 = dma.done [#allocation7], 1024
    $region81: #{_lambda_.1} parent=1 // pred_fallthru
      _
    // Predicated region
    $region82: #{_lambda_.1} parent=1 // pred_check
      _
    $region83: #{_lambda_.1} parent=1 // pred_check_branch
      %123 = sbr.rel (0) target = $region85
    $region84: #{_lambda_.1} parent=1 // pred_region
      %124 = dma.done [#allocation9], 1024
    $region85: #{_lambda_.1} parent=1 // pred_fallthru
      _
    // Predicated region
    $region86: #{_lambda_.1} parent=1 // pred_check
      _
    $region87: #{_lambda_.1} parent=1 // pred_check_branch
      %126 = sbr.rel (0) target = $region89
    $region88: #{_lambda_.1} parent=1 // pred_region
      %127 = dma.done [#allocation9], 1024
    $region89: #{_lambda_.1} parent=1 // pred_fallthru
      _
    // Predicated region
    $region90: #{_lambda_.1} parent=1 // pred_check
      _
    $region91: #{_lambda_.1} parent=1 // pred_check_branch
      %129 = sbr.rel (0) target = $region93
    $region92: #{_lambda_.1} parent=1 // pred_region
      %130 = dma.done [#allocation12], 512
    $region93: #{_lambda_.1} parent=1 // pred_fallthru
      _
    // Predicated region
    $region94: #{_lambda_.1} parent=1 // pred_check
      _
    $region95: #{_lambda_.1} parent=1 // pred_check_branch
      %132 = sbr.rel (0) target = $region97
    $region96: #{_lambda_.1} parent=1 // pred_region
      %133 = dma.done [#allocation12], 1024
    $region97: #{_lambda_.1} parent=1 // pred_fallthru
      _
    %v134 = vld [vmem:[%s0] sm:$0xff]
    %v135 = vld [vmem:[%s0 + $0x8] sm:$0xff]
    %v136 = vld [vmem:[%s0 + $0x10] sm:$0xff]
    %v137 = vld [vmem:[%s0 + $0x18] sm:$0xff]
    %v138 = vld [vmem:[%s0 + $0x20] sm:$0xff]
    %v139 = vld [vmem:[%s0 + $0x28] sm:$0xff]
    %v140 = vld [vmem:[%s0 + $0x30] sm:$0xff]
    %v141 = vld [vmem:[%s0 + $0x38] sm:$0xff]
    %v142 = vld [vmem:[%s3] sm:$0xff]
    %v143 = vld [vmem:[%s3 + $0x8] sm:$0xff]
    %v144 = vld [vmem:[%s3 + $0x10] sm:$0xff]
    %v145 = vld [vmem:[%s3 + $0x18] sm:$0xff]
    %vm146 = vcmask 261120
    %v148 = vsel %vm146, %v134, 0
    %v151 = vsel %vm146, %v135, 0
    %v154 = vsel %vm146, %v136, 0
    %v157 = vsel %vm146, %v137, 0
    %v160 = vsel %vm146, %v138, 0
    %v163 = vsel %vm146, %v139, 0
    %v166 = vsel %vm146, %v140, 0
    %v169 = vsel %vm146, %v141, 0
    %171 = vmatprep.subr.mxu0 0.0
    %172 = vmatpush1.msra.mxu0 %v142
    %173 = vmatprep.subr.mxu0 0.0
    %174 = vmatpush1.msra.mxu0 %v143
    %175 = vmatprep.subr.mxu0 0.0
    %176 = vmatpush1.msra.mxu0 %v144
    %177 = vmatprep.subr.mxu0 0.0
    %178 = vmatpush1.msra.mxu0 %v145
    %179 = vmatprep.subr.mxu0 0.0
    %180 = vmatpush1.msra.mxu0 0.0
    %181 = vmatprep.subr.mxu0 0.0
    %182 = vmatpush1.msra.mxu0 0.0
    %183 = vmatprep.subr.mxu0 0.0
    %184 = vmatpush1.msra.mxu0 0.0
    %185 = vmatprep.subr.mxu0 0.0
    %186 = vmatpush1.msra.mxu0 0.0
    %187 = vmatprep.subr.mxu0 0.0
    %188 = vmatpush1.msra.mxu0 0.0
    %189 = vmatprep.subr.mxu0 0.0
    %190 = vmatpush1.msra.mxu0 0.0
    %191 = vmatprep.subr.mxu0 0.0
    %192 = vmatpush1.msra.mxu0 0.0
    %193 = vmatprep.subr.mxu0 0.0
    %194 = vmatpush1.msra.mxu0 0.0
    %195 = vmatprep.subr.mxu0 0.0
    %196 = vmatpush1.msra.mxu0 0.0
    %197 = vmatprep.subr.mxu0 0.0
    %198 = vmatpush1.msra.mxu0 0.0
    %199 = vmatprep.subr.mxu0 0.0
    %200 = vmatpush1.msra.mxu0 0.0
    %201 = vmatprep.subr.mxu0 0.0
    %202 = vmatpush1.msra.mxu0 0.0
    %203 = vmatprep.subr.mxu0 0.0
    %204 = vmatpush1.msra.mxu0 0.0
    %205 = vmatprep.subr.mxu0 0.0
    %206 = vmatpush1.msra.mxu0 0.0
    %207 = vmatprep.subr.mxu0 0.0
    %208 = vmatpush1.msra.mxu0 0.0
    %209 = vmatprep.subr.mxu0 0.0
    %210 = vmatpush1.msra.mxu0 0.0
    %211 = vmatprep.subr.mxu0 0.0
    %212 = vmatpush1.msra.mxu0 0.0
    %213 = vmatprep.subr.mxu0 0.0
    %214 = vmatpush1.msra.mxu0 0.0
    %215 = vmatprep.subr.mxu0 0.0
    %216 = vmatpush1.msra.mxu0 0.0
    %217 = vmatprep.subr.mxu0 0.0
    %218 = vmatpush1.msra.mxu0 0.0
    %219 = vmatprep.subr.mxu0 0.0
    %220 = vmatpush1.msra.mxu0 0.0
    %221 = vmatprep.subr.mxu0 0.0
    %222 = vmatpush1.msra.mxu0 0.0
    %223 = vmatprep.subr.mxu0 0.0
    %224 = vmatpush1.msra.mxu0 0.0
    %225 = vmatprep.subr.mxu0 0.0
    %226 = vmatpush1.msra.mxu0 0.0
    %227 = vmatprep.subr.mxu0 0.0
    %228 = vmatpush1.msra.mxu0 0.0
    %229 = vmatprep.subr.mxu0 0.0
    %230 = vmatpush1.msra.mxu0 0.0
    %231 = vmatprep.subr.mxu0 0.0
    %232 = vmatpush1.msra.mxu0 0.0
    %233 = vmatprep.subr.mxu0 0.0
    %234 = vmatpush1.msra.mxu0 0.0
    %235 = vmatprep.mubr.f32.mxu0 0.0
    %236 = vmatmul.mubr.f32.gmra.mrb[0].mxu0 %v148
    %v237 = vpop.f32.mrb[0].mxu0
    %v238 = vadd.f32 0.0, %v237
    %v239 = vpop.f32.mrb[0].mxu0
    %240 = vmatprep.mubr.f32.mxu0 0.0
    %241 = vmatmul.mubr.f32.gmra.mrb[0].mxu0 %v151
    %v242 = vpop.f32.mrb[0].mxu0
    %v243 = vadd.f32 0.0, %v242
    %v244 = vpop.f32.mrb[0].mxu0
    %245 = vmatprep.mubr.f32.mxu0 0.0
    %246 = vmatmul.mubr.f32.gmra.mrb[0].mxu0 %v154
    %v247 = vpop.f32.mrb[0].mxu0
    %v248 = vadd.f32 0.0, %v247
    %v249 = vpop.f32.mrb[0].mxu0
    %250 = vmatprep.mubr.f32.mxu0 0.0
    %251 = vmatmul.mubr.f32.gmra.mrb[0].mxu0 %v157
    %v252 = vpop.f32.mrb[0].mxu0
    %v253 = vadd.f32 0.0, %v252
    %v254 = vpop.f32.mrb[0].mxu0
    %255 = vmatprep.mubr.f32.mxu0 0.0
    %256 = vmatmul.mubr.f32.gmra.mrb[0].mxu0 %v160
    %v257 = vpop.f32.mrb[0].mxu0
    %v258 = vadd.f32 0.0, %v257
    %v259 = vpop.f32.mrb[0].mxu0
    %260 = vmatprep.mubr.f32.mxu0 0.0
    %261 = vmatmul.mubr.f32.gmra.mrb[0].mxu0 %v163
    %v262 = vpop.f32.mrb[0].mxu0
    %v263 = vadd.f32 0.0, %v262
    %v264 = vpop.f32.mrb[0].mxu0
    %265 = vmatprep.mubr.f32.mxu0 0.0
    %266 = vmatmul.mubr.f32.gmra.mrb[0].mxu0 %v166
    %v267 = vpop.f32.mrb[0].mxu0
    %v268 = vadd.f32 0.0, %v267
    %v269 = vpop.f32.mrb[0].mxu0
    %270 = vmatprep.mubr.f32.mxu0 0.0
    %271 = vmatmul.mubr.f32.gmra.mrb[0].mxu0 %v169
    %v272 = vpop.f32.mrb[0].mxu0
    %v273 = vadd.f32 0.0, %v272
    %v274 = vpop.f32.mrb[0].mxu0
    %275 = vdwg.mxu0
    %v276 = vld [vmem:[%s4] sm:$0xff]
    %v277 = vld [vmem:[%s4 + $0x8] sm:$0xff]
    %v278 = vld [vmem:[%s4 + $0x10] sm:$0xff]
    %v279 = vld [vmem:[%s4 + $0x18] sm:$0xff]
    %v280 = vld [vmem:[%s4 + $0x20] sm:$0xff]
    %v281 = vld [vmem:[%s4 + $0x28] sm:$0xff]
    %v282 = vld [vmem:[%s4 + $0x30] sm:$0xff]
    %v283 = vld [vmem:[%s4 + $0x38] sm:$0xff]
    %s284 = scalar_lea.vmem %s3, 32
    %v285 = vld [vmem:[%s284] sm:$0xff]
    %v286 = vld [vmem:[%s284 + $0x8] sm:$0xff]
    %v287 = vld [vmem:[%s284 + $0x10] sm:$0xff]
    %v288 = vld [vmem:[%s284 + $0x18] sm:$0xff]
    %289 = vmatprep.subr.mxu0 0.0
    %290 = vmatpush1.msra.mxu0 %v285
    %291 = vmatprep.subr.mxu0 0.0
    %292 = vmatpush1.msra.mxu0 %v286
    %293 = vmatprep.subr.mxu0 0.0
    %294 = vmatpush1.msra.mxu0 %v287
    %295 = vmatprep.subr.mxu0 0.0
    %296 = vmatpush1.msra.mxu0 %v288
    %297 = vmatprep.subr.mxu0 0.0
    %298 = vmatpush1.msra.mxu0 0.0
    %299 = vmatprep.subr.mxu0 0.0
    %300 = vmatpush1.msra.mxu0 0.0
    %301 = vmatprep.subr.mxu0 0.0
    %302 = vmatpush1.msra.mxu0 0.0
    %303 = vmatprep.subr.mxu0 0.0
    %304 = vmatpush1.msra.mxu0 0.0
    %305 = vmatprep.subr.mxu0 0.0
    %306 = vmatpush1.msra.mxu0 0.0
    %307 = vmatprep.subr.mxu0 0.0
    %308 = vmatpush1.msra.mxu0 0.0
    %309 = vmatprep.subr.mxu0 0.0
    %310 = vmatpush1.msra.mxu0 0.0
    %311 = vmatprep.subr.mxu0 0.0
    %312 = vmatpush1.msra.mxu0 0.0
    %313 = vmatprep.subr.mxu0 0.0
    %314 = vmatpush1.msra.mxu0 0.0
    %315 = vmatprep.subr.mxu0 0.0
    %316 = vmatpush1.msra.mxu0 0.0
    %317 = vmatprep.subr.mxu0 0.0
    %318 = vmatpush1.msra.mxu0 0.0
    %319 = vmatprep.subr.mxu0 0.0
    %320 = vmatpush1.msra.mxu0 0.0
    %321 = vmatprep.subr.mxu0 0.0
    %322 = vmatpush1.msra.mxu0 0.0
    %323 = vmatprep.subr.mxu0 0.0
    %324 = vmatpush1.msra.mxu0 0.0
    %325 = vmatprep.subr.mxu0 0.0
    %326 = vmatpush1.msra.mxu0 0.0
    %327 = vmatprep.subr.mxu0 0.0
    %328 = vmatpush1.msra.mxu0 0.0
    %329 = vmatprep.subr.mxu0 0.0
    %330 = vmatpush1.msra.mxu0 0.0
    %331 = vmatprep.subr.mxu0 0.0
    %332 = vmatpush1.msra.mxu0 0.0
    %333 = vmatprep.subr.mxu0 0.0
    %334 = vmatpush1.msra.mxu0 0.0
    %335 = vmatprep.subr.mxu0 0.0
    %336 = vmatpush1.msra.mxu0 0.0
    %337 = vmatprep.subr.mxu0 0.0
    %338 = vmatpush1.msra.mxu0 0.0
    %339 = vmatprep.subr.mxu0 0.0
    %340 = vmatpush1.msra.mxu0 0.0
    %341 = vmatprep.subr.mxu0 0.0
    %342 = vmatpush1.msra.mxu0 0.0
    %343 = vmatprep.subr.mxu0 0.0
    %344 = vmatpush1.msra.mxu0 0.0
    %345 = vmatprep.subr.mxu0 0.0
    %346 = vmatpush1.msra.mxu0 0.0
    %347 = vmatprep.subr.mxu0 0.0
    %348 = vmatpush1.msra.mxu0 0.0
    %349 = vmatprep.subr.mxu0 0.0
    %350 = vmatpush1.msra.mxu0 0.0
    %351 = vmatprep.subr.mxu0 0.0
    %352 = vmatpush1.msra.mxu0 0.0
    %353 = vmatprep.mubr.f32.mxu0 0.0
    %354 = vmatmul.mubr.f32.gmra.mrb[0].mxu0 %v148
    %v355 = vpop.f32.mrb[0].mxu0
    %v356 = vadd.f32 0.0, %v355
    %v357 = vpop.f32.mrb[0].mxu0
    %358 = vmatprep.mubr.f32.mxu0 0.0
    %359 = vmatmul.mubr.f32.gmra.mrb[0].mxu0 %v151
    %v360 = vpop.f32.mrb[0].mxu0
    %v361 = vadd.f32 0.0, %v360
    %v362 = vpop.f32.mrb[0].mxu0
    %363 = vmatprep.mubr.f32.mxu0 0.0
    %364 = vmatmul.mubr.f32.gmra.mrb[0].mxu0 %v154
    %v365 = vpop.f32.mrb[0].mxu0
    %v366 = vadd.f32 0.0, %v365
    %v367 = vpop.f32.mrb[0].mxu0
    %368 = vmatprep.mubr.f32.mxu0 0.0
    %369 = vmatmul.mubr.f32.gmra.mrb[0].mxu0 %v157
    %v370 = vpop.f32.mrb[0].mxu0
    %v371 = vadd.f32 0.0, %v370
    %v372 = vpop.f32.mrb[0].mxu0
    %373 = vmatprep.mubr.f32.mxu0 0.0
    %374 = vmatmul.mubr.f32.gmra.mrb[0].mxu0 %v160
    %v375 = vpop.f32.mrb[0].mxu0
    %v376 = vadd.f32 0.0, %v375
    %v377 = vpop.f32.mrb[0].mxu0
    %378 = vmatprep.mubr.f32.mxu0 0.0
    %379 = vmatmul.mubr.f32.gmra.mrb[0].mxu0 %v163
    %v380 = vpop.f32.mrb[0].mxu0
    %v381 = vadd.f32 0.0, %v380
    %v382 = vpop.f32.mrb[0].mxu0
    %383 = vmatprep.mubr.f32.mxu0 0.0
    %384 = vmatmul.mubr.f32.gmra.mrb[0].mxu0 %v166
    %v385 = vpop.f32.mrb[0].mxu0
    %v386 = vadd.f32 0.0, %v385
    %v387 = vpop.f32.mrb[0].mxu0
    %388 = vmatprep.mubr.f32.mxu0 0.0
    %389 = vmatmul.mubr.f32.gmra.mrb[0].mxu0 %v169
    %v390 = vpop.f32.mrb[0].mxu0
    %v391 = vadd.f32 0.0, %v390
    %v392 = vpop.f32.mrb[0].mxu0
    %393 = vdwg.mxu0
    %s394 = scalar_lea.vmem %s4, 64
    %v395 = vld [vmem:[%s394] sm:$0xff]
    %v396 = vld [vmem:[%s394 + $0x8] sm:$0xff]
    %v397 = vld [vmem:[%s394 + $0x10] sm:$0xff]
    %v398 = vld [vmem:[%s394 + $0x18] sm:$0xff]
    %v399 = vld [vmem:[%s394 + $0x20] sm:$0xff]
    %v400 = vld [vmem:[%s394 + $0x28] sm:$0xff]
    %v401 = vld [vmem:[%s394 + $0x30] sm:$0xff]
    %v402 = vld [vmem:[%s394 + $0x38] sm:$0xff]
    %vm403 = vcmask 523264
    %v405 = vsel %vm403, %v395, 0
    %v408 = vsel %vm403, %v396, 0
    %v411 = vsel %vm403, %v397, 0
    %v414 = vsel %vm403, %v398, 0
    %v417 = vsel %vm403, %v399, 0
    %v420 = vsel %vm403, %v400, 0
    %v423 = vsel %vm403, %v401, 0
    %v426 = vsel %vm403, %v402, 0
    %428 = vmatprep.subr.mxu0 0.0
    %429 = vmatpush1.msra.mxu0 %v356
    %430 = vmatprep.subr.mxu0 0.0
    %431 = vmatpush1.msra.mxu0 %v361
    %432 = vmatprep.subr.mxu0 0.0
    %433 = vmatpush1.msra.mxu0 %v366
    %434 = vmatprep.subr.mxu0 0.0
    %435 = vmatpush1.msra.mxu0 %v371
    %436 = vmatprep.subr.mxu0 0.0
    %437 = vmatpush1.msra.mxu0 %v376
    %438 = vmatprep.subr.mxu0 0.0
    %439 = vmatpush1.msra.mxu0 %v381
    %440 = vmatprep.subr.mxu0 0.0
    %441 = vmatpush1.msra.mxu0 %v386
    %442 = vmatprep.subr.mxu0 0.0
    %443 = vmatpush1.msra.mxu0 %v391
    %444 = vmatprep.subr.mxu0 0.0
    %445 = vmatpush1.msra.mxu0 0.0
    %446 = vmatprep.subr.mxu0 0.0
    %447 = vmatpush1.msra.mxu0 0.0
    %448 = vmatprep.subr.mxu0 0.0
    %449 = vmatpush1.msra.mxu0 0.0
    %450 = vmatprep.subr.mxu0 0.0
    %451 = vmatpush1.msra.mxu0 0.0
    %452 = vmatprep.subr.mxu0 0.0
    %453 = vmatpush1.msra.mxu0 0.0
    %454 = vmatprep.subr.mxu0 0.0
    %455 = vmatpush1.msra.mxu0 0.0
    %456 = vmatprep.subr.mxu0 0.0
    %457 = vmatpush1.msra.mxu0 0.0
    %458 = vmatprep.subr.mxu0 0.0
    %459 = vmatpush1.msra.mxu0 0.0
    %460 = vmatprep.subr.mxu0 0.0
    %461 = vmatpush1.msra.mxu0 0.0
    %462 = vmatprep.subr.mxu0 0.0
    %463 = vmatpush1.msra.mxu0 0.0
    %464 = vmatprep.subr.mxu0 0.0
    %465 = vmatpush1.msra.mxu0 0.0
    %466 = vmatprep.subr.mxu0 0.0
    %467 = vmatpush1.msra.mxu0 0.0
    %468 = vmatprep.subr.mxu0 0.0
    %469 = vmatpush1.msra.mxu0 0.0
    %470 = vmatprep.subr.mxu0 0.0
    %471 = vmatpush1.msra.mxu0 0.0
    %472 = vmatprep.subr.mxu0 0.0
    %473 = vmatpush1.msra.mxu0 0.0
    %474 = vmatprep.subr.mxu0 0.0
    %475 = vmatpush1.msra.mxu0 0.0
    %476 = vmatprep.subr.mxu0 0.0
    %477 = vmatpush1.msra.mxu0 0.0
    %478 = vmatprep.subr.mxu0 0.0
    %479 = vmatpush1.msra.mxu0 0.0
    %480 = vmatprep.subr.mxu0 0.0
    %481 = vmatpush1.msra.mxu0 0.0
    %482 = vmatprep.subr.mxu0 0.0
    %483 = vmatpush1.msra.mxu0 0.0
    %484 = vmatprep.subr.mxu0 0.0
    %485 = vmatpush1.msra.mxu0 0.0
    %486 = vmatprep.subr.mxu0 0.0
    %487 = vmatpush1.msra.mxu0 0.0
    %488 = vmatprep.subr.mxu0 0.0
    %489 = vmatpush1.msra.mxu0 0.0
    %490 = vmatprep.subr.mxu0 0.0
    %491 = vmatpush1.msra.mxu0 0.0
    %492 = vmatprep.mubr.f32.mxu0 0.0
    %493 = vmatmul.mubr.f32.gmra.mrb[0].mxu0 %v405
    %v494 = vpop.f32.mrb[0].mxu0
    %v495 = vadd.f32 0.0, %v494
    %v496 = vpop.f32.mrb[0].mxu0
    %497 = vmatprep.mubr.f32.mxu0 0.0
    %498 = vmatmul.mubr.f32.gmra.mrb[0].mxu0 %v408
    %v499 = vpop.f32.mrb[0].mxu0
    %v500 = vadd.f32 0.0, %v499
    %v501 = vpop.f32.mrb[0].mxu0
    %502 = vmatprep.mubr.f32.mxu0 0.0
    %503 = vmatmul.mubr.f32.gmra.mrb[0].mxu0 %v411
    %v504 = vpop.f32.mrb[0].mxu0
    %v505 = vadd.f32 0.0, %v504
    %v506 = vpop.f32.mrb[0].mxu0
    %507 = vmatprep.mubr.f32.mxu0 0.0
    %508 = vmatmul.mubr.f32.gmra.mrb[0].mxu0 %v414
    %v509 = vpop.f32.mrb[0].mxu0
    %v510 = vadd.f32 0.0, %v509
    %v511 = vpop.f32.mrb[0].mxu0
    %512 = vmatprep.mubr.f32.mxu0 0.0
    %513 = vmatmul.mubr.f32.gmra.mrb[0].mxu0 %v417
    %v514 = vpop.f32.mrb[0].mxu0
    %v515 = vadd.f32 0.0, %v514
    %v516 = vpop.f32.mrb[0].mxu0
    %517 = vmatprep.mubr.f32.mxu0 0.0
    %518 = vmatmul.mubr.f32.gmra.mrb[0].mxu0 %v420
    %v519 = vpop.f32.mrb[0].mxu0
    %v520 = vadd.f32 0.0, %v519
    %v521 = vpop.f32.mrb[0].mxu0
    %522 = vmatprep.mubr.f32.mxu0 0.0
    %523 = vmatmul.mubr.f32.gmra.mrb[0].mxu0 %v423
    %v524 = vpop.f32.mrb[0].mxu0
    %v525 = vadd.f32 0.0, %v524
    %v526 = vpop.f32.mrb[0].mxu0
    %527 = vmatprep.mubr.f32.mxu0 0.0
    %528 = vmatmul.mubr.f32.gmra.mrb[0].mxu0 %v426
    %v529 = vpop.f32.mrb[0].mxu0
    %v530 = vadd.f32 0.0, %v529
    %v531 = vpop.f32.mrb[0].mxu0
    %532 = vdwg.mxu0
    %v534 = vsel %vm403, %v276, 0
    %v537 = vsel %vm403, %v277, 0
    %v540 = vsel %vm403, %v278, 0
    %v543 = vsel %vm403, %v279, 0
    %v546 = vsel %vm403, %v280, 0
    %v549 = vsel %vm403, %v281, 0
    %v552 = vsel %vm403, %v282, 0
    %v555 = vsel %vm403, %v283, 0
    %557 = vmatprep.subr.mxu0 0.0
    %558 = vmatpush1.msra.mxu0 %v238
    %559 = vmatprep.subr.mxu0 0.0
    %560 = vmatpush1.msra.mxu0 %v243
    %561 = vmatprep.subr.mxu0 0.0
    %562 = vmatpush1.msra.mxu0 %v248
    %563 = vmatprep.subr.mxu0 0.0
    %564 = vmatpush1.msra.mxu0 %v253
    %565 = vmatprep.subr.mxu0 0.0
    %566 = vmatpush1.msra.mxu0 %v258
    %567 = vmatprep.subr.mxu0 0.0
    %568 = vmatpush1.msra.mxu0 %v263
    %569 = vmatprep.subr.mxu0 0.0
    %570 = vmatpush1.msra.mxu0 %v268
    %571 = vmatprep.subr.mxu0 0.0
    %572 = vmatpush1.msra.mxu0 %v273
    %573 = vmatprep.subr.mxu0 0.0
    %574 = vmatpush1.msra.mxu0 0.0
    %575 = vmatprep.subr.mxu0 0.0
    %576 = vmatpush1.msra.mxu0 0.0
    %577 = vmatprep.subr.mxu0 0.0
    %578 = vmatpush1.msra.mxu0 0.0
    %579 = vmatprep.subr.mxu0 0.0
    %580 = vmatpush1.msra.mxu0 0.0
    %581 = vmatprep.subr.mxu0 0.0
    %582 = vmatpush1.msra.mxu0 0.0
    %583 = vmatprep.subr.mxu0 0.0
    %584 = vmatpush1.msra.mxu0 0.0
    %585 = vmatprep.subr.mxu0 0.0
    %586 = vmatpush1.msra.mxu0 0.0
    %587 = vmatprep.subr.mxu0 0.0
    %588 = vmatpush1.msra.mxu0 0.0
    %589 = vmatprep.subr.mxu0 0.0
    %590 = vmatpush1.msra.mxu0 0.0
    %591 = vmatprep.subr.mxu0 0.0
    %592 = vmatpush1.msra.mxu0 0.0
    %593 = vmatprep.subr.mxu0 0.0
    %594 = vmatpush1.msra.mxu0 0.0
    %595 = vmatprep.subr.mxu0 0.0
    %596 = vmatpush1.msra.mxu0 0.0
    %597 = vmatprep.subr.mxu0 0.0
    %598 = vmatpush1.msra.mxu0 0.0
    %599 = vmatprep.subr.mxu0 0.0
    %600 = vmatpush1.msra.mxu0 0.0
    %601 = vmatprep.subr.mxu0 0.0
    %602 = vmatpush1.msra.mxu0 0.0
    %603 = vmatprep.subr.mxu0 0.0
    %604 = vmatpush1.msra.mxu0 0.0
    %605 = vmatprep.subr.mxu0 0.0
    %606 = vmatpush1.msra.mxu0 0.0
    %607 = vmatprep.subr.mxu0 0.0
    %608 = vmatpush1.msra.mxu0 0.0
    %609 = vmatprep.subr.mxu0 0.0
    %610 = vmatpush1.msra.mxu0 0.0
    %611 = vmatprep.subr.mxu0 0.0
    %612 = vmatpush1.msra.mxu0 0.0
    %613 = vmatprep.subr.mxu0 0.0
    %614 = vmatpush1.msra.mxu0 0.0
    %615 = vmatprep.subr.mxu0 0.0
    %616 = vmatpush1.msra.mxu0 0.0
    %617 = vmatprep.subr.mxu0 0.0
    %618 = vmatpush1.msra.mxu0 0.0
    %619 = vmatprep.subr.mxu0 0.0
    %620 = vmatpush1.msra.mxu0 0.0
    %621 = vmatprep.mubr.f32.mxu0 0.0
    %622 = vmatmul.mubr.f32.gmra.mrb[0].mxu0 %v534
    %v623 = vpop.f32.mrb[0].mxu0
    %v624 = vadd.f32 %v495, %v623
    %v625 = vpop.f32.mrb[0].mxu0
    %626 = vmatprep.mubr.f32.mxu0 0.0
    %627 = vmatmul.mubr.f32.gmra.mrb[0].mxu0 %v537
    %v628 = vpop.f32.mrb[0].mxu0
    %v629 = vadd.f32 %v500, %v628
    %v630 = vpop.f32.mrb[0].mxu0
    %631 = vmatprep.mubr.f32.mxu0 0.0
    %632 = vmatmul.mubr.f32.gmra.mrb[0].mxu0 %v540
    %v633 = vpop.f32.mrb[0].mxu0
    %v634 = vadd.f32 %v505, %v633
    %v635 = vpop.f32.mrb[0].mxu0
    %636 = vmatprep.mubr.f32.mxu0 0.0
    %637 = vmatmul.mubr.f32.gmra.mrb[0].mxu0 %v543
    %v638 = vpop.f32.mrb[0].mxu0
    %v639 = vadd.f32 %v510, %v638
    %v640 = vpop.f32.mrb[0].mxu0
    %641 = vmatprep.mubr.f32.mxu0 0.0
    %642 = vmatmul.mubr.f32.gmra.mrb[0].mxu0 %v546
    %v643 = vpop.f32.mrb[0].mxu0
    %v644 = vadd.f32 %v515, %v643
    %v645 = vpop.f32.mrb[0].mxu0
    %646 = vmatprep.mubr.f32.mxu0 0.0
    %647 = vmatmul.mubr.f32.gmra.mrb[0].mxu0 %v549
    %v648 = vpop.f32.mrb[0].mxu0
    %v649 = vadd.f32 %v520, %v648
    %v650 = vpop.f32.mrb[0].mxu0
    %651 = vmatprep.mubr.f32.mxu0 0.0
    %652 = vmatmul.mubr.f32.gmra.mrb[0].mxu0 %v552
    %v653 = vpop.f32.mrb[0].mxu0
    %v654 = vadd.f32 %v525, %v653
    %v655 = vpop.f32.mrb[0].mxu0
    %656 = vmatprep.mubr.f32.mxu0 0.0
    %657 = vmatmul.mubr.f32.gmra.mrb[0].mxu0 %v555
    %v658 = vpop.f32.mrb[0].mxu0
    %v659 = vadd.f32 %v530, %v658
    %v660 = vpop.f32.mrb[0].mxu0
    %661 = vdwg.mxu0
    %s662 = scalar_lea.vmem %s3, 64
    %v663 = vld [vmem:[%s662] sm:$0xff]
    %v664 = vld [vmem:[%s662 + $0x8] sm:$0xff]
    %v665 = vld [vmem:[%s662 + $0x10] sm:$0xff]
    %v666 = vld [vmem:[%s662 + $0x18] sm:$0xff]
    %667 = vmatprep.subr.mxu0 0.0
    %668 = vmatpush1.msra.mxu0 %v663
    %669 = vmatprep.subr.mxu0 0.0
    %670 = vmatpush1.msra.mxu0 %v664
    %671 = vmatprep.subr.mxu0 0.0
    %672 = vmatpush1.msra.mxu0 %v665
    %673 = vmatprep.subr.mxu0 0.0
    %674 = vmatpush1.msra.mxu0 %v666
    %675 = vmatprep.subr.mxu0 0.0
    %676 = vmatpush1.msra.mxu0 0.0
    %677 = vmatprep.subr.mxu0 0.0
    %678 = vmatpush1.msra.mxu0 0.0
    %679 = vmatprep.subr.mxu0 0.0
    %680 = vmatpush1.msra.mxu0 0.0
    %681 = vmatprep.subr.mxu0 0.0
    %682 = vmatpush1.msra.mxu0 0.0
    %683 = vmatprep.subr.mxu0 0.0
    %684 = vmatpush1.msra.mxu0 0.0
    %685 = vmatprep.subr.mxu0 0.0
    %686 = vmatpush1.msra.mxu0 0.0
    %687 = vmatprep.subr.mxu0 0.0
    %688 = vmatpush1.msra.mxu0 0.0
    %689 = vmatprep.subr.mxu0 0.0
    %690 = vmatpush1.msra.mxu0 0.0
    %691 = vmatprep.subr.mxu0 0.0
    %692 = vmatpush1.msra.mxu0 0.0
    %693 = vmatprep.subr.mxu0 0.0
    %694 = vmatpush1.msra.mxu0 0.0
    %695 = vmatprep.subr.mxu0 0.0
    %696 = vmatpush1.msra.mxu0 0.0
    %697 = vmatprep.subr.mxu0 0.0
    %698 = vmatpush1.msra.mxu0 0.0
    %699 = vmatprep.subr.mxu0 0.0
    %700 = vmatpush1.msra.mxu0 0.0
    %701 = vmatprep.subr.mxu0 0.0
    %702 = vmatpush1.msra.mxu0 0.0
    %703 = vmatprep.subr.mxu0 0.0
    %704 = vmatpush1.msra.mxu0 0.0
    %705 = vmatprep.subr.mxu0 0.0
    %706 = vmatpush1.msra.mxu0 0.0
    %707 = vmatprep.subr.mxu0 0.0
    %708 = vmatpush1.msra.mxu0 0.0
    %709 = vmatprep.subr.mxu0 0.0
    %710 = vmatpush1.msra.mxu0 0.0
    %711 = vmatprep.subr.mxu0 0.0
    %712 = vmatpush1.msra.mxu0 0.0
    %713 = vmatprep.subr.mxu0 0.0
    %714 = vmatpush1.msra.mxu0 0.0
    %715 = vmatprep.subr.mxu0 0.0
    %716 = vmatpush1.msra.mxu0 0.0
    %717 = vmatprep.subr.mxu0 0.0
    %718 = vmatpush1.msra.mxu0 0.0
    %719 = vmatprep.subr.mxu0 0.0
    %720 = vmatpush1.msra.mxu0 0.0
    %721 = vmatprep.subr.mxu0 0.0
    %722 = vmatpush1.msra.mxu0 0.0
    %723 = vmatprep.subr.mxu0 0.0
    %724 = vmatpush1.msra.mxu0 0.0
    %725 = vmatprep.subr.mxu0 0.0
    %726 = vmatpush1.msra.mxu0 0.0
    %727 = vmatprep.subr.mxu0 0.0
    %728 = vmatpush1.msra.mxu0 0.0
    %729 = vmatprep.subr.mxu0 0.0
    %730 = vmatpush1.msra.mxu0 0.0
    %731 = vmatprep.mubr.f32.mxu0 0.0
    %732 = vmatmul.mubr.f32.gmra.mrb[0].mxu0 %v148
    %v733 = vpop.f32.mrb[0].mxu0
    %v734 = vadd.f32 0.0, %v733
    %v735 = vpop.f32.mrb[0].mxu0
    %736 = vmatprep.mubr.f32.mxu0 0.0
    %737 = vmatmul.mubr.f32.gmra.mrb[0].mxu0 %v151
    %v738 = vpop.f32.mrb[0].mxu0
    %v739 = vadd.f32 0.0, %v738
    %v740 = vpop.f32.mrb[0].mxu0
    %741 = vmatprep.mubr.f32.mxu0 0.0
    %742 = vmatmul.mubr.f32.gmra.mrb[0].mxu0 %v154
    %v743 = vpop.f32.mrb[0].mxu0
    %v744 = vadd.f32 0.0, %v743
    %v745 = vpop.f32.mrb[0].mxu0
    %746 = vmatprep.mubr.f32.mxu0 0.0
    %747 = vmatmul.mubr.f32.gmra.mrb[0].mxu0 %v157
    %v748 = vpop.f32.mrb[0].mxu0
    %v749 = vadd.f32 0.0, %v748
    %v750 = vpop.f32.mrb[0].mxu0
    %751 = vmatprep.mubr.f32.mxu0 0.0
    %752 = vmatmul.mubr.f32.gmra.mrb[0].mxu0 %v160
    %v753 = vpop.f32.mrb[0].mxu0
    %v754 = vadd.f32 0.0, %v753
    %v755 = vpop.f32.mrb[0].mxu0
    %756 = vmatprep.mubr.f32.mxu0 0.0
    %757 = vmatmul.mubr.f32.gmra.mrb[0].mxu0 %v163
    %v758 = vpop.f32.mrb[0].mxu0
    %v759 = vadd.f32 0.0, %v758
    %v760 = vpop.f32.mrb[0].mxu0
    %761 = vmatprep.mubr.f32.mxu0 0.0
    %762 = vmatmul.mubr.f32.gmra.mrb[0].mxu0 %v166
    %v763 = vpop.f32.mrb[0].mxu0
    %v764 = vadd.f32 0.0, %v763
    %v765 = vpop.f32.mrb[0].mxu0
    %766 = vmatprep.mubr.f32.mxu0 0.0
    %767 = vmatmul.mubr.f32.gmra.mrb[0].mxu0 %v169
    %v768 = vpop.f32.mrb[0].mxu0
    %v769 = vadd.f32 0.0, %v768
    %v770 = vpop.f32.mrb[0].mxu0
    %771 = vdwg.mxu0
    %s772 = scalar_lea.vmem %s4, 128
    %v773 = vld [vmem:[%s772] sm:$0xff]
    %v774 = vld [vmem:[%s772 + $0x8] sm:$0xff]
    %v775 = vld [vmem:[%s772 + $0x10] sm:$0xff]
    %v776 = vld [vmem:[%s772 + $0x18] sm:$0xff]
    %v777 = vld [vmem:[%s772 + $0x20] sm:$0xff]
    %v778 = vld [vmem:[%s772 + $0x28] sm:$0xff]
    %v779 = vld [vmem:[%s772 + $0x30] sm:$0xff]
    %v780 = vld [vmem:[%s772 + $0x38] sm:$0xff]
    %v782 = vsel %vm403, %v773, 0
    %v785 = vsel %vm403, %v774, 0
    %v788 = vsel %vm403, %v775, 0
    %v791 = vsel %vm403, %v776, 0
    %v794 = vsel %vm403, %v777, 0
    %v797 = vsel %vm403, %v778, 0
    %v800 = vsel %vm403, %v779, 0
    %v803 = vsel %vm403, %v780, 0
    %805 = vmatprep.subr.mxu0 0.0
    %806 = vmatpush1.msra.mxu0 %v734
    %807 = vmatprep.subr.mxu0 0.0
    %808 = vmatpush1.msra.mxu0 %v739
    %809 = vmatprep.subr.mxu0 0.0
    %810 = vmatpush1.msra.mxu0 %v744
    %811 = vmatprep.subr.mxu0 0.0
    %812 = vmatpush1.msra.mxu0 %v749
    %813 = vmatprep.subr.mxu0 0.0
    %814 = vmatpush1.msra.mxu0 %v754
    %815 = vmatprep.subr.mxu0 0.0
    %816 = vmatpush1.msra.mxu0 %v759
    %817 = vmatprep.subr.mxu0 0.0
    %818 = vmatpush1.msra.mxu0 %v764
    %819 = vmatprep.subr.mxu0 0.0
    %820 = vmatpush1.msra.mxu0 %v769
    %821 = vmatprep.subr.mxu0 0.0
    %822 = vmatpush1.msra.mxu0 0.0
    %823 = vmatprep.subr.mxu0 0.0
    %824 = vmatpush1.msra.mxu0 0.0
    %825 = vmatprep.subr.mxu0 0.0
    %826 = vmatpush1.msra.mxu0 0.0
    %827 = vmatprep.subr.mxu0 0.0
    %828 = vmatpush1.msra.mxu0 0.0
    %829 = vmatprep.subr.mxu0 0.0
    %830 = vmatpush1.msra.mxu0 0.0
    %831 = vmatprep.subr.mxu0 0.0
    %832 = vmatpush1.msra.mxu0 0.0
    %833 = vmatprep.subr.mxu0 0.0
    %834 = vmatpush1.msra.mxu0 0.0
    %835 = vmatprep.subr.mxu0 0.0
    %836 = vmatpush1.msra.mxu0 0.0
    %837 = vmatprep.subr.mxu0 0.0
    %838 = vmatpush1.msra.mxu0 0.0
    %839 = vmatprep.subr.mxu0 0.0
    %840 = vmatpush1.msra.mxu0 0.0
    %841 = vmatprep.subr.mxu0 0.0
    %842 = vmatpush1.msra.mxu0 0.0
    %843 = vmatprep.subr.mxu0 0.0
    %844 = vmatpush1.msra.mxu0 0.0
    %845 = vmatprep.subr.mxu0 0.0
    %846 = vmatpush1.msra.mxu0 0.0
    %847 = vmatprep.subr.mxu0 0.0
    %848 = vmatpush1.msra.mxu0 0.0
    %849 = vmatprep.subr.mxu0 0.0
    %850 = vmatpush1.msra.mxu0 0.0
    %851 = vmatprep.subr.mxu0 0.0
    %852 = vmatpush1.msra.mxu0 0.0
    %853 = vmatprep.subr.mxu0 0.0
    %854 = vmatpush1.msra.mxu0 0.0
    %855 = vmatprep.subr.mxu0 0.0
    %856 = vmatpush1.msra.mxu0 0.0
    %857 = vmatprep.subr.mxu0 0.0
    %858 = vmatpush1.msra.mxu0 0.0
    %859 = vmatprep.subr.mxu0 0.0
    %860 = vmatpush1.msra.mxu0 0.0
    %861 = vmatprep.subr.mxu0 0.0
    %862 = vmatpush1.msra.mxu0 0.0
    %863 = vmatprep.subr.mxu0 0.0
    %864 = vmatpush1.msra.mxu0 0.0
    %865 = vmatprep.subr.mxu0 0.0
    %866 = vmatpush1.msra.mxu0 0.0
    %867 = vmatprep.subr.mxu0 0.0
    %868 = vmatpush1.msra.mxu0 0.0
    %869 = vmatprep.mubr.f32.mxu0 0.0
    %870 = vmatmul.mubr.f32.gmra.mrb[0].mxu0 %v782
    %v871 = vpop.f32.mrb[0].mxu0
    %v872 = vadd.f32 0.0, %v871
    %v873 = vpop.f32.mrb[0].mxu0
    %874 = vmatprep.mubr.f32.mxu0 0.0
    %875 = vmatmul.mubr.f32.gmra.mrb[0].mxu0 %v785
    %v876 = vpop.f32.mrb[0].mxu0
    %v877 = vadd.f32 0.0, %v876
    %v878 = vpop.f32.mrb[0].mxu0
    %879 = vmatprep.mubr.f32.mxu0 0.0
    %880 = vmatmul.mubr.f32.gmra.mrb[0].mxu0 %v788
    %v881 = vpop.f32.mrb[0].mxu0
    %v882 = vadd.f32 0.0, %v881
    %v883 = vpop.f32.mrb[0].mxu0
    %884 = vmatprep.mubr.f32.mxu0 0.0
    %885 = vmatmul.mubr.f32.gmra.mrb[0].mxu0 %v791
    %v886 = vpop.f32.mrb[0].mxu0
    %v887 = vadd.f32 0.0, %v886
    %v888 = vpop.f32.mrb[0].mxu0
    %889 = vmatprep.mubr.f32.mxu0 0.0
    %890 = vmatmul.mubr.f32.gmra.mrb[0].mxu0 %v794
    %v891 = vpop.f32.mrb[0].mxu0
    %v892 = vadd.f32 0.0, %v891
    %v893 = vpop.f32.mrb[0].mxu0
    %894 = vmatprep.mubr.f32.mxu0 0.0
    %895 = vmatmul.mubr.f32.gmra.mrb[0].mxu0 %v797
    %v896 = vpop.f32.mrb[0].mxu0
    %v897 = vadd.f32 0.0, %v896
    %v898 = vpop.f32.mrb[0].mxu0
    %899 = vmatprep.mubr.f32.mxu0 0.0
    %900 = vmatmul.mubr.f32.gmra.mrb[0].mxu0 %v800
    %v901 = vpop.f32.mrb[0].mxu0
    %v902 = vadd.f32 0.0, %v901
    %v903 = vpop.f32.mrb[0].mxu0
    %904 = vmatprep.mubr.f32.mxu0 0.0
    %905 = vmatmul.mubr.f32.gmra.mrb[0].mxu0 %v803
    %v906 = vpop.f32.mrb[0].mxu0
    %v907 = vadd.f32 0.0, %v906
    %v908 = vpop.f32.mrb[0].mxu0
    %909 = vdwg.mxu0
    %v910 = vadd.f32 %v624, %v872
    %v911 = vadd.f32 %v629, %v877
    %v912 = vadd.f32 %v634, %v882
    %v913 = vadd.f32 %v639, %v887
    %v914 = vadd.f32 %v644, %v892
    %v915 = vadd.f32 %v649, %v897
    %v916 = vadd.f32 %v654, %v902
    %v917 = vadd.f32 %v659, %v907
    %s918 = scalar_lea.vmem %s3, 96
    %v919 = vld [vmem:[%s918] sm:$0xff]
    %v920 = vld [vmem:[%s918 + $0x8] sm:$0xff]
    %v921 = vld [vmem:[%s918 + $0x10] sm:$0xff]
    %v922 = vld [vmem:[%s918 + $0x18] sm:$0xff]
    %923 = vmatprep.subr.mxu0 0.0
    %924 = vmatpush1.msra.mxu0 %v919
    %925 = vmatprep.subr.mxu0 0.0
    %926 = vmatpush1.msra.mxu0 %v920
    %927 = vmatprep.subr.mxu0 0.0
    %928 = vmatpush1.msra.mxu0 %v921
    %929 = vmatprep.subr.mxu0 0.0
    %930 = vmatpush1.msra.mxu0 %v922
    %931 = vmatprep.subr.mxu0 0.0
    %932 = vmatpush1.msra.mxu0 0.0
    %933 = vmatprep.subr.mxu0 0.0
    %934 = vmatpush1.msra.mxu0 0.0
    %935 = vmatprep.subr.mxu0 0.0
    %936 = vmatpush1.msra.mxu0 0.0
    %937 = vmatprep.subr.mxu0 0.0
    %938 = vmatpush1.msra.mxu0 0.0
    %939 = vmatprep.subr.mxu0 0.0
    %940 = vmatpush1.msra.mxu0 0.0
    %941 = vmatprep.subr.mxu0 0.0
    %942 = vmatpush1.msra.mxu0 0.0
    %943 = vmatprep.subr.mxu0 0.0
    %944 = vmatpush1.msra.mxu0 0.0
    %945 = vmatprep.subr.mxu0 0.0
    %946 = vmatpush1.msra.mxu0 0.0
    %947 = vmatprep.subr.mxu0 0.0
    %948 = vmatpush1.msra.mxu0 0.0
    %949 = vmatprep.subr.mxu0 0.0
    %950 = vmatpush1.msra.mxu0 0.0
    %951 = vmatprep.subr.mxu0 0.0
    %952 = vmatpush1.msra.mxu0 0.0
    %953 = vmatprep.subr.mxu0 0.0
    %954 = vmatpush1.msra.mxu0 0.0
    %955 = vmatprep.subr.mxu0 0.0
    %956 = vmatpush1.msra.mxu0 0.0
    %957 = vmatprep.subr.mxu0 0.0
    %958 = vmatpush1.msra.mxu0 0.0
    %959 = vmatprep.subr.mxu0 0.0
    %960 = vmatpush1.msra.mxu0 0.0
    %961 = vmatprep.subr.mxu0 0.0
    %962 = vmatpush1.msra.mxu0 0.0
    %963 = vmatprep.subr.mxu0 0.0
    %964 = vmatpush1.msra.mxu0 0.0
    %965 = vmatprep.subr.mxu0 0.0
    %966 = vmatpush1.msra.mxu0 0.0
    %967 = vmatprep.subr.mxu0 0.0
    %968 = vmatpush1.msra.mxu0 0.0
    %969 = vmatprep.subr.mxu0 0.0
    %970 = vmatpush1.msra.mxu0 0.0
    %971 = vmatprep.subr.mxu0 0.0
    %972 = vmatpush1.msra.mxu0 0.0
    %973 = vmatprep.subr.mxu0 0.0
    %974 = vmatpush1.msra.mxu0 0.0
    %975 = vmatprep.subr.mxu0 0.0
    %976 = vmatpush1.msra.mxu0 0.0
    %977 = vmatprep.subr.mxu0 0.0
    %978 = vmatpush1.msra.mxu0 0.0
    %979 = vmatprep.subr.mxu0 0.0
    %980 = vmatpush1.msra.mxu0 0.0
    %981 = vmatprep.subr.mxu0 0.0
    %982 = vmatpush1.msra.mxu0 0.0
    %983 = vmatprep.subr.mxu0 0.0
    %984 = vmatpush1.msra.mxu0 0.0
    %985 = vmatprep.subr.mxu0 0.0
    %986 = vmatpush1.msra.mxu0 0.0
    %987 = vmatprep.mubr.f32.mxu0 0.0
    %988 = vmatmul.mubr.f32.gmra.mrb[0].mxu0 %v148
    %v989 = vpop.f32.mrb[0].mxu0
    %v990 = vadd.f32 0.0, %v989
    %v991 = vpop.f32.mrb[0].mxu0
    %992 = vmatprep.mubr.f32.mxu0 0.0
    %993 = vmatmul.mubr.f32.gmra.mrb[0].mxu0 %v151
    %v994 = vpop.f32.mrb[0].mxu0
    %v995 = vadd.f32 0.0, %v994
    %v996 = vpop.f32.mrb[0].mxu0
    %997 = vmatprep.mubr.f32.mxu0 0.0
    %998 = vmatmul.mubr.f32.gmra.mrb[0].mxu0 %v154
    %v999 = vpop.f32.mrb[0].mxu0
    %v1000 = vadd.f32 0.0, %v999
    %v1001 = vpop.f32.mrb[0].mxu0
    %1002 = vmatprep.mubr.f32.mxu0 0.0
    %1003 = vmatmul.mubr.f32.gmra.mrb[0].mxu0 %v157
    %v1004 = vpop.f32.mrb[0].mxu0
    %v1005 = vadd.f32 0.0, %v1004
    %v1006 = vpop.f32.mrb[0].mxu0
    %1007 = vmatprep.mubr.f32.mxu0 0.0
    %1008 = vmatmul.mubr.f32.gmra.mrb[0].mxu0 %v160
    %v1009 = vpop.f32.mrb[0].mxu0
    %v1010 = vadd.f32 0.0, %v1009
    %v1011 = vpop.f32.mrb[0].mxu0
    %1012 = vmatprep.mubr.f32.mxu0 0.0
    %1013 = vmatmul.mubr.f32.gmra.mrb[0].mxu0 %v163
    %v1014 = vpop.f32.mrb[0].mxu0
    %v1015 = vadd.f32 0.0, %v1014
    %v1016 = vpop.f32.mrb[0].mxu0
    %1017 = vmatprep.mubr.f32.mxu0 0.0
    %1018 = vmatmul.mubr.f32.gmra.mrb[0].mxu0 %v166
    %v1019 = vpop.f32.mrb[0].mxu0
    %v1020 = vadd.f32 0.0, %v1019
    %v1021 = vpop.f32.mrb[0].mxu0
    %1022 = vmatprep.mubr.f32.mxu0 0.0
    %1023 = vmatmul.mubr.f32.gmra.mrb[0].mxu0 %v169
    %v1024 = vpop.f32.mrb[0].mxu0
    %v1025 = vadd.f32 0.0, %v1024
    %v1026 = vpop.f32.mrb[0].mxu0
    %1027 = vdwg.mxu0
    %s1028 = scalar_lea.vmem %s4, 192
    %v1029 = vld [vmem:[%s1028] sm:$0xff]
    %v1030 = vld [vmem:[%s1028 + $0x8] sm:$0xff]
    %v1031 = vld [vmem:[%s1028 + $0x10] sm:$0xff]
    %v1032 = vld [vmem:[%s1028 + $0x18] sm:$0xff]
    %v1033 = vld [vmem:[%s1028 + $0x20] sm:$0xff]
    %v1034 = vld [vmem:[%s1028 + $0x28] sm:$0xff]
    %v1035 = vld [vmem:[%s1028 + $0x30] sm:$0xff]
    %v1036 = vld [vmem:[%s1028 + $0x38] sm:$0xff]
    %v1038 = vsel %vm403, %v1029, 0
    %v1041 = vsel %vm403, %v1030, 0
    %v1044 = vsel %vm403, %v1031, 0
    %v1047 = vsel %vm403, %v1032, 0
    %v1050 = vsel %vm403, %v1033, 0
    %v1053 = vsel %vm403, %v1034, 0
    %v1056 = vsel %vm403, %v1035, 0
    %v1059 = vsel %vm403, %v1036, 0
    %1061 = vmatprep.subr.mxu0 0.0
    %1062 = vmatpush1.msra.mxu0 %v990
    %1063 = vmatprep.subr.mxu0 0.0
    %1064 = vmatpush1.msra.mxu0 %v995
    %1065 = vmatprep.subr.mxu0 0.0
    %1066 = vmatpush1.msra.mxu0 %v1000
    %1067 = vmatprep.subr.mxu0 0.0
    %1068 = vmatpush1.msra.mxu0 %v1005
    %1069 = vmatprep.subr.mxu0 0.0
    %1070 = vmatpush1.msra.mxu0 %v1010
    %1071 = vmatprep.subr.mxu0 0.0
    %1072 = vmatpush1.msra.mxu0 %v1015
    %1073 = vmatprep.subr.mxu0 0.0
    %1074 = vmatpush1.msra.mxu0 %v1020
    %1075 = vmatprep.subr.mxu0 0.0
    %1076 = vmatpush1.msra.mxu0 %v1025
    %1077 = vmatprep.subr.mxu0 0.0
    %1078 = vmatpush1.msra.mxu0 0.0
    %1079 = vmatprep.subr.mxu0 0.0
    %1080 = vmatpush1.msra.mxu0 0.0
    %1081 = vmatprep.subr.mxu0 0.0
    %1082 = vmatpush1.msra.mxu0 0.0
    %1083 = vmatprep.subr.mxu0 0.0
    %1084 = vmatpush1.msra.mxu0 0.0
    %1085 = vmatprep.subr.mxu0 0.0
    %1086 = vmatpush1.msra.mxu0 0.0
    %1087 = vmatprep.subr.mxu0 0.0
    %1088 = vmatpush1.msra.mxu0 0.0
    %1089 = vmatprep.subr.mxu0 0.0
    %1090 = vmatpush1.msra.mxu0 0.0
    %1091 = vmatprep.subr.mxu0 0.0
    %1092 = vmatpush1.msra.mxu0 0.0
    %1093 = vmatprep.subr.mxu0 0.0
    %1094 = vmatpush1.msra.mxu0 0.0
    %1095 = vmatprep.subr.mxu0 0.0
    %1096 = vmatpush1.msra.mxu0 0.0
    %1097 = vmatprep.subr.mxu0 0.0
    %1098 = vmatpush1.msra.mxu0 0.0
    %1099 = vmatprep.subr.mxu0 0.0
    %1100 = vmatpush1.msra.mxu0 0.0
    %1101 = vmatprep.subr.mxu0 0.0
    %1102 = vmatpush1.msra.mxu0 0.0
    %1103 = vmatprep.subr.mxu0 0.0
    %1104 = vmatpush1.msra.mxu0 0.0
    %1105 = vmatprep.subr.mxu0 0.0
    %1106 = vmatpush1.msra.mxu0 0.0
    %1107 = vmatprep.subr.mxu0 0.0
    %1108 = vmatpush1.msra.mxu0 0.0
    %1109 = vmatprep.subr.mxu0 0.0
    %1110 = vmatpush1.msra.mxu0 0.0
    %1111 = vmatprep.subr.mxu0 0.0
    %1112 = vmatpush1.msra.mxu0 0.0
    %1113 = vmatprep.subr.mxu0 0.0
    %1114 = vmatpush1.msra.mxu0 0.0
    %1115 = vmatprep.subr.mxu0 0.0
    %1116 = vmatpush1.msra.mxu0 0.0
    %1117 = vmatprep.subr.mxu0 0.0
    %1118 = vmatpush1.msra.mxu0 0.0
    %1119 = vmatprep.subr.mxu0 0.0
    %1120 = vmatpush1.msra.mxu0 0.0
    %1121 = vmatprep.subr.mxu0 0.0
    %1122 = vmatpush1.msra.mxu0 0.0
    %1123 = vmatprep.subr.mxu0 0.0
    %1124 = vmatpush1.msra.mxu0 0.0
    %1125 = vmatprep.mubr.f32.mxu0 0.0
    %1126 = vmatmul.mubr.f32.gmra.mrb[0].mxu0 %v1038
    %v1127 = vpop.f32.mrb[0].mxu0
    %v1128 = vadd.f32 0.0, %v1127
    %v1129 = vpop.f32.mrb[0].mxu0
    %1130 = vmatprep.mubr.f32.mxu0 0.0
    %1131 = vmatmul.mubr.f32.gmra.mrb[0].mxu0 %v1041
    %v1132 = vpop.f32.mrb[0].mxu0
    %v1133 = vadd.f32 0.0, %v1132
    %v1134 = vpop.f32.mrb[0].mxu0
    %1135 = vmatprep.mubr.f32.mxu0 0.0
    %1136 = vmatmul.mubr.f32.gmra.mrb[0].mxu0 %v1044
    %v1137 = vpop.f32.mrb[0].mxu0
    %v1138 = vadd.f32 0.0, %v1137
    %v1139 = vpop.f32.mrb[0].mxu0
    %1140 = vmatprep.mubr.f32.mxu0 0.0
    %1141 = vmatmul.mubr.f32.gmra.mrb[0].mxu0 %v1047
    %v1142 = vpop.f32.mrb[0].mxu0
    %v1143 = vadd.f32 0.0, %v1142
    %v1144 = vpop.f32.mrb[0].mxu0
    %1145 = vmatprep.mubr.f32.mxu0 0.0
    %1146 = vmatmul.mubr.f32.gmra.mrb[0].mxu0 %v1050
    %v1147 = vpop.f32.mrb[0].mxu0
    %v1148 = vadd.f32 0.0, %v1147
    %v1149 = vpop.f32.mrb[0].mxu0
    %1150 = vmatprep.mubr.f32.mxu0 0.0
    %1151 = vmatmul.mubr.f32.gmra.mrb[0].mxu0 %v1053
    %v1152 = vpop.f32.mrb[0].mxu0
    %v1153 = vadd.f32 0.0, %v1152
    %v1154 = vpop.f32.mrb[0].mxu0
    %1155 = vmatprep.mubr.f32.mxu0 0.0
    %1156 = vmatmul.mubr.f32.gmra.mrb[0].mxu0 %v1056
    %v1157 = vpop.f32.mrb[0].mxu0
    %v1158 = vadd.f32 0.0, %v1157
    %v1159 = vpop.f32.mrb[0].mxu0
    %1160 = vmatprep.mubr.f32.mxu0 0.0
    %1161 = vmatmul.mubr.f32.gmra.mrb[0].mxu0 %v1059
    %v1162 = vpop.f32.mrb[0].mxu0
    %v1163 = vadd.f32 0.0, %v1162
    %v1164 = vpop.f32.mrb[0].mxu0
    %1165 = vdwg.mxu0
    %v1166 = vadd.f32 %v910, %v1128
    %v1167 = vadd.f32 %v911, %v1133
    %v1168 = vadd.f32 %v912, %v1138
    %v1169 = vadd.f32 %v913, %v1143
    %v1170 = vadd.f32 %v914, %v1148
    %v1171 = vadd.f32 %v915, %v1153
    %v1172 = vadd.f32 %v916, %v1158
    %v1173 = vadd.f32 %v917, %v1163
    %v1174 = vld [vmem:[#allocation6] sm:$0xff]
    %v1175 = vld [vmem:[#allocation6 + $0x8] sm:$0xff]
    %v1176 = vld [vmem:[#allocation6 + $0x10] sm:$0xff]
    %v1177 = vld [vmem:[#allocation6 + $0x18] sm:$0xff]
    %v1178 = vld [vmem:[#allocation6 + $0x20] sm:$0xff]
    %v1179 = vld [vmem:[#allocation6 + $0x28] sm:$0xff]
    %v1180 = vld [vmem:[#allocation6 + $0x30] sm:$0xff]
    %v1181 = vld [vmem:[#allocation6 + $0x38] sm:$0xff]
    %1183 = vset.pattern.permute.xlu0 0
    %1184 = vperm.xlu0 %1183, %v1174
    %v1185 = vpop.permute.xlu0 %1184
    %1188 = vset.pattern.permute.xlu0 0
    %1189 = vperm.xlu0 %1188, %v1175
    %v1190 = vpop.permute.xlu0 %1189
    %1193 = vset.pattern.permute.xlu0 0
    %1194 = vperm.xlu0 %1193, %v1176
    %v1195 = vpop.permute.xlu0 %1194
    %1198 = vset.pattern.permute.xlu0 0
    %1199 = vperm.xlu0 %1198, %v1177
    %v1200 = vpop.permute.xlu0 %1199
    %1203 = vset.pattern.permute.xlu0 0
    %1204 = vperm.xlu0 %1203, %v1178
    %v1205 = vpop.permute.xlu0 %1204
    %1208 = vset.pattern.permute.xlu0 0
    %1209 = vperm.xlu0 %1208, %v1179
    %v1210 = vpop.permute.xlu0 %1209
    %1213 = vset.pattern.permute.xlu0 0
    %1214 = vperm.xlu0 %1213, %v1180
    %v1215 = vpop.permute.xlu0 %1214
    %1218 = vset.pattern.permute.xlu0 0
    %1219 = vperm.xlu0 %1218, %v1181
    %v1220 = vpop.permute.xlu0 %1219
    %v1222 = vadd.f32 %v1166, %v1185
    %v1223 = vadd.f32 %v1167, %v1190
    %v1224 = vadd.f32 %v1168, %v1195
    %v1225 = vadd.f32 %v1169, %v1200
    %v1226 = vadd.f32 %v1170, %v1205
    %v1227 = vadd.f32 %v1171, %v1210
    %v1228 = vadd.f32 %v1172, %v1215
    %v1229 = vadd.f32 %v1173, %v1220
    %s1230 = sld [smem:[#allocation2]]
    %vm1231 = vcmp.ge.f32.partialorder %v1222, 0.0
    %vm1232 = vcmp.ge.f32.partialorder %v1223, 0.0
    %vm1233 = vcmp.ge.f32.partialorder %v1224, 0.0
    %vm1234 = vcmp.ge.f32.partialorder %v1225, 0.0
    %vm1235 = vcmp.ge.f32.partialorder %v1226, 0.0
    %vm1236 = vcmp.ge.f32.partialorder %v1227, 0.0
    %vm1237 = vcmp.ge.f32.partialorder %v1228, 0.0
    %vm1238 = vcmp.ge.f32.partialorder %v1229, 0.0
    %v1239 = vstv %s1230
    %v1240 = vmul.f32 %v1239, %v1222
    %v1241 = vmul.f32 %v1239, %v1223
    %v1242 = vmul.f32 %v1239, %v1224
    %v1243 = vmul.f32 %v1239, %v1225
    %v1244 = vmul.f32 %v1239, %v1226
    %v1245 = vmul.f32 %v1239, %v1227
    %v1246 = vmul.f32 %v1239, %v1228
    %v1247 = vmul.f32 %v1239, %v1229
    %v1248 = vsel %vm1231, %v1222, %v1240
    %v1249 = vsel %vm1232, %v1223, %v1241
    %v1250 = vsel %vm1233, %v1224, %v1242
    %v1251 = vsel %vm1234, %v1225, %v1243
    %v1252 = vsel %vm1235, %v1226, %v1244
    %v1253 = vsel %vm1236, %v1227, %v1245
    %v1254 = vsel %vm1237, %v1228, %v1246
    %v1255 = vsel %vm1238, %v1229, %v1247
    %v1256 = vld [vmem:[#allocation8] sm:$0xff]
    %v1257 = vld [vmem:[#allocation8 + $0x8] sm:$0xff]
    %vm1258 = vcmask 130048
    %v1260 = vsel %vm1258, %v1248, 0
    %v1263 = vsel %vm1258, %v1249, 0
    %v1266 = vsel %vm1258, %v1250, 0
    %v1269 = vsel %vm1258, %v1251, 0
    %v1272 = vsel %vm1258, %v1252, 0
    %v1275 = vsel %vm1258, %v1253, 0
    %v1278 = vsel %vm1258, %v1254, 0
    %v1281 = vsel %vm1258, %v1255, 0
    %1283 = vmatprep.subr.mxu0 0.0
    %1284 = vmatpush1.msra.mxu0 %v1256
    %1285 = vmatprep.subr.mxu0 0.0
    %1286 = vmatpush1.msra.mxu0 %v1257
    %1287 = vmatprep.subr.mxu0 0.0
    %1288 = vmatpush1.msra.mxu0 0.0
    %1289 = vmatprep.subr.mxu0 0.0
    %1290 = vmatpush1.msra.mxu0 0.0
    %1291 = vmatprep.subr.mxu0 0.0
    %1292 = vmatpush1.msra.mxu0 0.0
    %1293 = vmatprep.subr.mxu0 0.0
    %1294 = vmatpush1.msra.mxu0 0.0
    %1295 = vmatprep.subr.mxu0 0.0
    %1296 = vmatpush1.msra.mxu0 0.0
    %1297 = vmatprep.subr.mxu0 0.0
    %1298 = vmatpush1.msra.mxu0 0.0
    %1299 = vmatprep.subr.mxu0 0.0
    %1300 = vmatpush1.msra.mxu0 0.0
    %1301 = vmatprep.subr.mxu0 0.0
    %1302 = vmatpush1.msra.mxu0 0.0
    %1303 = vmatprep.subr.mxu0 0.0
    %1304 = vmatpush1.msra.mxu0 0.0
    %1305 = vmatprep.subr.mxu0 0.0
    %1306 = vmatpush1.msra.mxu0 0.0
    %1307 = vmatprep.subr.mxu0 0.0
    %1308 = vmatpush1.msra.mxu0 0.0
    %1309 = vmatprep.subr.mxu0 0.0
    %1310 = vmatpush1.msra.mxu0 0.0
    %1311 = vmatprep.subr.mxu0 0.0
    %1312 = vmatpush1.msra.mxu0 0.0
    %1313 = vmatprep.subr.mxu0 0.0
    %1314 = vmatpush1.msra.mxu0 0.0
    %1315 = vmatprep.subr.mxu0 0.0
    %1316 = vmatpush1.msra.mxu0 0.0
    %1317 = vmatprep.subr.mxu0 0.0
    %1318 = vmatpush1.msra.mxu0 0.0
    %1319 = vmatprep.subr.mxu0 0.0
    %1320 = vmatpush1.msra.mxu0 0.0
    %1321 = vmatprep.subr.mxu0 0.0
    %1322 = vmatpush1.msra.mxu0 0.0
    %1323 = vmatprep.subr.mxu0 0.0
    %1324 = vmatpush1.msra.mxu0 0.0
    %1325 = vmatprep.subr.mxu0 0.0
    %1326 = vmatpush1.msra.mxu0 0.0
    %1327 = vmatprep.subr.mxu0 0.0
    %1328 = vmatpush1.msra.mxu0 0.0
    %1329 = vmatprep.subr.mxu0 0.0
    %1330 = vmatpush1.msra.mxu0 0.0
    %1331 = vmatprep.subr.mxu0 0.0
    %1332 = vmatpush1.msra.mxu0 0.0
    %1333 = vmatprep.subr.mxu0 0.0
    %1334 = vmatpush1.msra.mxu0 0.0
    %1335 = vmatprep.subr.mxu0 0.0
    %1336 = vmatpush1.msra.mxu0 0.0
    %1337 = vmatprep.subr.mxu0 0.0
    %1338 = vmatpush1.msra.mxu0 0.0
    %1339 = vmatprep.subr.mxu0 0.0
    %1340 = vmatpush1.msra.mxu0 0.0
    %1341 = vmatprep.subr.mxu0 0.0
    %1342 = vmatpush1.msra.mxu0 0.0
    %1343 = vmatprep.subr.mxu0 0.0
    %1344 = vmatpush1.msra.mxu0 0.0
    %1345 = vmatprep.subr.mxu0 0.0
    %1346 = vmatpush1.msra.mxu0 0.0
    %1347 = vmatprep.mubr.f32.mxu0 0.0
    %1348 = vmatmul.mubr.f32.gmra.mrb[0].mxu0 %v1260
    %v1349 = vpop.f32.mrb[0].mxu0
    %v1350 = vadd.f32 0.0, %v1349
    %v1351 = vpop.f32.mrb[0].mxu0
    %1352 = vmatprep.mubr.f32.mxu0 0.0
    %1353 = vmatmul.mubr.f32.gmra.mrb[0].mxu0 %v1263
    %v1354 = vpop.f32.mrb[0].mxu0
    %v1355 = vadd.f32 0.0, %v1354
    %v1356 = vpop.f32.mrb[0].mxu0
    %1357 = vmatprep.mubr.f32.mxu0 0.0
    %1358 = vmatmul.mubr.f32.gmra.mrb[0].mxu0 %v1266
    %v1359 = vpop.f32.mrb[0].mxu0
    %v1360 = vadd.f32 0.0, %v1359
    %v1361 = vpop.f32.mrb[0].mxu0
    %1362 = vmatprep.mubr.f32.mxu0 0.0
    %1363 = vmatmul.mubr.f32.gmra.mrb[0].mxu0 %v1269
    %v1364 = vpop.f32.mrb[0].mxu0
    %v1365 = vadd.f32 0.0, %v1364
    %v1366 = vpop.f32.mrb[0].mxu0
    %1367 = vmatprep.mubr.f32.mxu0 0.0
    %1368 = vmatmul.mubr.f32.gmra.mrb[0].mxu0 %v1272
    %v1369 = vpop.f32.mrb[0].mxu0
    %v1370 = vadd.f32 0.0, %v1369
    %v1371 = vpop.f32.mrb[0].mxu0
    %1372 = vmatprep.mubr.f32.mxu0 0.0
    %1373 = vmatmul.mubr.f32.gmra.mrb[0].mxu0 %v1275
    %v1374 = vpop.f32.mrb[0].mxu0
    %v1375 = vadd.f32 0.0, %v1374
    %v1376 = vpop.f32.mrb[0].mxu0
    %1377 = vmatprep.mubr.f32.mxu0 0.0
    %1378 = vmatmul.mubr.f32.gmra.mrb[0].mxu0 %v1278
    %v1379 = vpop.f32.mrb[0].mxu0
    %v1380 = vadd.f32 0.0, %v1379
    %v1381 = vpop.f32.mrb[0].mxu0
    %1382 = vmatprep.mubr.f32.mxu0 0.0
    %1383 = vmatmul.mubr.f32.gmra.mrb[0].mxu0 %v1281
    %v1384 = vpop.f32.mrb[0].mxu0
    %v1385 = vadd.f32 0.0, %v1384
    %v1386 = vpop.f32.mrb[0].mxu0
    %1387 = vdwg.mxu0
    %v1388 = vld [vmem:[%s8] sm:$0xff]
    %v1389 = vld [vmem:[%s8 + $0x8] sm:$0xff]
    %v1390 = vld [vmem:[%s8 + $0x10] sm:$0xff]
    %v1391 = vld [vmem:[%s8 + $0x18] sm:$0xff]
    %v1392 = vld [vmem:[%s8 + $0x20] sm:$0xff]
    %v1393 = vld [vmem:[%s8 + $0x28] sm:$0xff]
    %v1394 = vld [vmem:[%s8 + $0x30] sm:$0xff]
    %v1395 = vld [vmem:[%s8 + $0x38] sm:$0xff]
    %s1396 = scalar_lea.vmem [#allocation8], 16
    %v1397 = vld [vmem:[%s1396] sm:$0xff]
    %v1398 = vld [vmem:[%s1396 + $0x8] sm:$0xff]
    %1399 = vmatprep.subr.mxu0 0.0
    %1400 = vmatpush1.msra.mxu0 %v1397
    %1401 = vmatprep.subr.mxu0 0.0
    %1402 = vmatpush1.msra.mxu0 %v1398
    %1403 = vmatprep.subr.mxu0 0.0
    %1404 = vmatpush1.msra.mxu0 0.0
    %1405 = vmatprep.subr.mxu0 0.0
    %1406 = vmatpush1.msra.mxu0 0.0
    %1407 = vmatprep.subr.mxu0 0.0
    %1408 = vmatpush1.msra.mxu0 0.0
    %1409 = vmatprep.subr.mxu0 0.0
    %1410 = vmatpush1.msra.mxu0 0.0
    %1411 = vmatprep.subr.mxu0 0.0
    %1412 = vmatpush1.msra.mxu0 0.0
    %1413 = vmatprep.subr.mxu0 0.0
    %1414 = vmatpush1.msra.mxu0 0.0
    %1415 = vmatprep.subr.mxu0 0.0
    %1416 = vmatpush1.msra.mxu0 0.0
    %1417 = vmatprep.subr.mxu0 0.0
    %1418 = vmatpush1.msra.mxu0 0.0
    %1419 = vmatprep.subr.mxu0 0.0
    %1420 = vmatpush1.msra.mxu0 0.0
    %1421 = vmatprep.subr.mxu0 0.0
    %1422 = vmatpush1.msra.mxu0 0.0
    %1423 = vmatprep.subr.mxu0 0.0
    %1424 = vmatpush1.msra.mxu0 0.0
    %1425 = vmatprep.subr.mxu0 0.0
    %1426 = vmatpush1.msra.mxu0 0.0
    %1427 = vmatprep.subr.mxu0 0.0
    %1428 = vmatpush1.msra.mxu0 0.0
    %1429 = vmatprep.subr.mxu0 0.0
    %1430 = vmatpush1.msra.mxu0 0.0
    %1431 = vmatprep.subr.mxu0 0.0
    %1432 = vmatpush1.msra.mxu0 0.0
    %1433 = vmatprep.subr.mxu0 0.0
    %1434 = vmatpush1.msra.mxu0 0.0
    %1435 = vmatprep.subr.mxu0 0.0
    %1436 = vmatpush1.msra.mxu0 0.0
    %1437 = vmatprep.subr.mxu0 0.0
    %1438 = vmatpush1.msra.mxu0 0.0
    %1439 = vmatprep.subr.mxu0 0.0
    %1440 = vmatpush1.msra.mxu0 0.0
    %1441 = vmatprep.subr.mxu0 0.0
    %1442 = vmatpush1.msra.mxu0 0.0
    %1443 = vmatprep.subr.mxu0 0.0
    %1444 = vmatpush1.msra.mxu0 0.0
    %1445 = vmatprep.subr.mxu0 0.0
    %1446 = vmatpush1.msra.mxu0 0.0
    %1447 = vmatprep.subr.mxu0 0.0
    %1448 = vmatpush1.msra.mxu0 0.0
    %1449 = vmatprep.subr.mxu0 0.0
    %1450 = vmatpush1.msra.mxu0 0.0
    %1451 = vmatprep.subr.mxu0 0.0
    %1452 = vmatpush1.msra.mxu0 0.0
    %1453 = vmatprep.subr.mxu0 0.0
    %1454 = vmatpush1.msra.mxu0 0.0
    %1455 = vmatprep.subr.mxu0 0.0
    %1456 = vmatpush1.msra.mxu0 0.0
    %1457 = vmatprep.subr.mxu0 0.0
    %1458 = vmatpush1.msra.mxu0 0.0
    %1459 = vmatprep.subr.mxu0 0.0
    %1460 = vmatpush1.msra.mxu0 0.0
    %1461 = vmatprep.subr.mxu0 0.0
    %1462 = vmatpush1.msra.mxu0 0.0
    %1463 = vmatprep.mubr.f32.mxu0 0.0
    %1464 = vmatmul.mubr.f32.gmra.mrb[0].mxu0 %v1260
    %v1465 = vpop.f32.mrb[0].mxu0
    %v1466 = vadd.f32 0.0, %v1465
    %v1467 = vpop.f32.mrb[0].mxu0
    %1468 = vmatprep.mubr.f32.mxu0 0.0
    %1469 = vmatmul.mubr.f32.gmra.mrb[0].mxu0 %v1263
    %v1470 = vpop.f32.mrb[0].mxu0
    %v1471 = vadd.f32 0.0, %v1470
    %v1472 = vpop.f32.mrb[0].mxu0
    %1473 = vmatprep.mubr.f32.mxu0 0.0
    %1474 = vmatmul.mubr.f32.gmra.mrb[0].mxu0 %v1266
    %v1475 = vpop.f32.mrb[0].mxu0
    %v1476 = vadd.f32 0.0, %v1475
    %v1477 = vpop.f32.mrb[0].mxu0
    %1478 = vmatprep.mubr.f32.mxu0 0.0
    %1479 = vmatmul.mubr.f32.gmra.mrb[0].mxu0 %v1269
    %v1480 = vpop.f32.mrb[0].mxu0
    %v1481 = vadd.f32 0.0, %v1480
    %v1482 = vpop.f32.mrb[0].mxu0
    %1483 = vmatprep.mubr.f32.mxu0 0.0
    %1484 = vmatmul.mubr.f32.gmra.mrb[0].mxu0 %v1272
    %v1485 = vpop.f32.mrb[0].mxu0
    %v1486 = vadd.f32 0.0, %v1485
    %v1487 = vpop.f32.mrb[0].mxu0
    %1488 = vmatprep.mubr.f32.mxu0 0.0
    %1489 = vmatmul.mubr.f32.gmra.mrb[0].mxu0 %v1275
    %v1490 = vpop.f32.mrb[0].mxu0
    %v1491 = vadd.f32 0.0, %v1490
    %v1492 = vpop.f32.mrb[0].mxu0
    %1493 = vmatprep.mubr.f32.mxu0 0.0
    %1494 = vmatmul.mubr.f32.gmra.mrb[0].mxu0 %v1278
    %v1495 = vpop.f32.mrb[0].mxu0
    %v1496 = vadd.f32 0.0, %v1495
    %v1497 = vpop.f32.mrb[0].mxu0
    %1498 = vmatprep.mubr.f32.mxu0 0.0
    %1499 = vmatmul.mubr.f32.gmra.mrb[0].mxu0 %v1281
    %v1500 = vpop.f32.mrb[0].mxu0
    %v1501 = vadd.f32 0.0, %v1500
    %v1502 = vpop.f32.mrb[0].mxu0
    %1503 = vdwg.mxu0
    %s1504 = scalar_lea.vmem %s8, 64
    %v1505 = vld [vmem:[%s1504] sm:$0xff]
    %v1506 = vld [vmem:[%s1504 + $0x8] sm:$0xff]
    %v1507 = vld [vmem:[%s1504 + $0x10] sm:$0xff]
    %v1508 = vld [vmem:[%s1504 + $0x18] sm:$0xff]
    %v1509 = vld [vmem:[%s1504 + $0x20] sm:$0xff]
    %v1510 = vld [vmem:[%s1504 + $0x28] sm:$0xff]
    %v1511 = vld [vmem:[%s1504 + $0x30] sm:$0xff]
    %v1512 = vld [vmem:[%s1504 + $0x38] sm:$0xff]
    %v1514 = vsel %vm403, %v1505, 0
    %v1517 = vsel %vm403, %v1506, 0
    %v1520 = vsel %vm403, %v1507, 0
    %v1523 = vsel %vm403, %v1508, 0
    %v1526 = vsel %vm403, %v1509, 0
    %v1529 = vsel %vm403, %v1510, 0
    %v1532 = vsel %vm403, %v1511, 0
    %v1535 = vsel %vm403, %v1512, 0
    %1537 = vmatprep.subr.mxu0 0.0
    %1538 = vmatpush1.msra.mxu0 %v1466
    %1539 = vmatprep.subr.mxu0 0.0
    %1540 = vmatpush1.msra.mxu0 %v1471
    %1541 = vmatprep.subr.mxu0 0.0
    %1542 = vmatpush1.msra.mxu0 %v1476
    %1543 = vmatprep.subr.mxu0 0.0
    %1544 = vmatpush1.msra.mxu0 %v1481
    %1545 = vmatprep.subr.mxu0 0.0
    %1546 = vmatpush1.msra.mxu0 %v1486
    %1547 = vmatprep.subr.mxu0 0.0
    %1548 = vmatpush1.msra.mxu0 %v1491
    %1549 = vmatprep.subr.mxu0 0.0
    %1550 = vmatpush1.msra.mxu0 %v1496
    %1551 = vmatprep.subr.mxu0 0.0
    %1552 = vmatpush1.msra.mxu0 %v1501
    %1553 = vmatprep.subr.mxu0 0.0
    %1554 = vmatpush1.msra.mxu0 0.0
    %1555 = vmatprep.subr.mxu0 0.0
    %1556 = vmatpush1.msra.mxu0 0.0
    %1557 = vmatprep.subr.mxu0 0.0
    %1558 = vmatpush1.msra.mxu0 0.0
    %1559 = vmatprep.subr.mxu0 0.0
    %1560 = vmatpush1.msra.mxu0 0.0
    %1561 = vmatprep.subr.mxu0 0.0
    %1562 = vmatpush1.msra.mxu0 0.0
    %1563 = vmatprep.subr.mxu0 0.0
    %1564 = vmatpush1.msra.mxu0 0.0
    %1565 = vmatprep.subr.mxu0 0.0
    %1566 = vmatpush1.msra.mxu0 0.0
    %1567 = vmatprep.subr.mxu0 0.0
    %1568 = vmatpush1.msra.mxu0 0.0
    %1569 = vmatprep.subr.mxu0 0.0
    %1570 = vmatpush1.msra.mxu0 0.0
    %1571 = vmatprep.subr.mxu0 0.0
    %1572 = vmatpush1.msra.mxu0 0.0
    %1573 = vmatprep.subr.mxu0 0.0
    %1574 = vmatpush1.msra.mxu0 0.0
    %1575 = vmatprep.subr.mxu0 0.0
    %1576 = vmatpush1.msra.mxu0 0.0
    %1577 = vmatprep.subr.mxu0 0.0
    %1578 = vmatpush1.msra.mxu0 0.0
    %1579 = vmatprep.subr.mxu0 0.0
    %1580 = vmatpush1.msra.mxu0 0.0
    %1581 = vmatprep.subr.mxu0 0.0
    %1582 = vmatpush1.msra.mxu0 0.0
    %1583 = vmatprep.subr.mxu0 0.0
    %1584 = vmatpush1.msra.mxu0 0.0
    %1585 = vmatprep.subr.mxu0 0.0
    %1586 = vmatpush1.msra.mxu0 0.0
    %1587 = vmatprep.subr.mxu0 0.0
    %1588 = vmatpush1.msra.mxu0 0.0
    %1589 = vmatprep.subr.mxu0 0.0
    %1590 = vmatpush1.msra.mxu0 0.0
    %1591 = vmatprep.subr.mxu0 0.0
    %1592 = vmatpush1.msra.mxu0 0.0
    %1593 = vmatprep.subr.mxu0 0.0
    %1594 = vmatpush1.msra.mxu0 0.0
    %1595 = vmatprep.subr.mxu0 0.0
    %1596 = vmatpush1.msra.mxu0 0.0
    %1597 = vmatprep.subr.mxu0 0.0
    %1598 = vmatpush1.msra.mxu0 0.0
    %1599 = vmatprep.subr.mxu0 0.0
    %1600 = vmatpush1.msra.mxu0 0.0
    %1601 = vmatprep.mubr.f32.mxu0 0.0
    %1602 = vmatmul.mubr.f32.gmra.mrb[0].mxu0 %v1514
    %v1603 = vpop.f32.mrb[0].mxu0
    %v1604 = vadd.f32 0.0, %v1603
    %v1605 = vpop.f32.mrb[0].mxu0
    %1606 = vmatprep.mubr.f32.mxu0 0.0
    %1607 = vmatmul.mubr.f32.gmra.mrb[0].mxu0 %v1517
    %v1608 = vpop.f32.mrb[0].mxu0
    %v1609 = vadd.f32 0.0, %v1608
    %v1610 = vpop.f32.mrb[0].mxu0
    %1611 = vmatprep.mubr.f32.mxu0 0.0
    %1612 = vmatmul.mubr.f32.gmra.mrb[0].mxu0 %v1520
    %v1613 = vpop.f32.mrb[0].mxu0
    %v1614 = vadd.f32 0.0, %v1613
    %v1615 = vpop.f32.mrb[0].mxu0
    %1616 = vmatprep.mubr.f32.mxu0 0.0
    %1617 = vmatmul.mubr.f32.gmra.mrb[0].mxu0 %v1523
    %v1618 = vpop.f32.mrb[0].mxu0
    %v1619 = vadd.f32 0.0, %v1618
    %v1620 = vpop.f32.mrb[0].mxu0
    %1621 = vmatprep.mubr.f32.mxu0 0.0
    %1622 = vmatmul.mubr.f32.gmra.mrb[0].mxu0 %v1526
    %v1623 = vpop.f32.mrb[0].mxu0
    %v1624 = vadd.f32 0.0, %v1623
    %v1625 = vpop.f32.mrb[0].mxu0
    %1626 = vmatprep.mubr.f32.mxu0 0.0
    %1627 = vmatmul.mubr.f32.gmra.mrb[0].mxu0 %v1529
    %v1628 = vpop.f32.mrb[0].mxu0
    %v1629 = vadd.f32 0.0, %v1628
    %v1630 = vpop.f32.mrb[0].mxu0
    %1631 = vmatprep.mubr.f32.mxu0 0.0
    %1632 = vmatmul.mubr.f32.gmra.mrb[0].mxu0 %v1532
    %v1633 = vpop.f32.mrb[0].mxu0
    %v1634 = vadd.f32 0.0, %v1633
    %v1635 = vpop.f32.mrb[0].mxu0
    %1636 = vmatprep.mubr.f32.mxu0 0.0
    %1637 = vmatmul.mubr.f32.gmra.mrb[0].mxu0 %v1535
    %v1638 = vpop.f32.mrb[0].mxu0
    %v1639 = vadd.f32 0.0, %v1638
    %v1640 = vpop.f32.mrb[0].mxu0
    %1641 = vdwg.mxu0
    %v1643 = vsel %vm403, %v1388, 0
    %v1646 = vsel %vm403, %v1389, 0
    %v1649 = vsel %vm403, %v1390, 0
    %v1652 = vsel %vm403, %v1391, 0
    %v1655 = vsel %vm403, %v1392, 0
    %v1658 = vsel %vm403, %v1393, 0
    %v1661 = vsel %vm403, %v1394, 0
    %v1664 = vsel %vm403, %v1395, 0
    %1666 = vmatprep.subr.mxu0 0.0
    %1667 = vmatpush1.msra.mxu0 %v1350
    %1668 = vmatprep.subr.mxu0 0.0
    %1669 = vmatpush1.msra.mxu0 %v1355
    %1670 = vmatprep.subr.mxu0 0.0
    %1671 = vmatpush1.msra.mxu0 %v1360
    %1672 = vmatprep.subr.mxu0 0.0
    %1673 = vmatpush1.msra.mxu0 %v1365
    %1674 = vmatprep.subr.mxu0 0.0
    %1675 = vmatpush1.msra.mxu0 %v1370
    %1676 = vmatprep.subr.mxu0 0.0
    %1677 = vmatpush1.msra.mxu0 %v1375
    %1678 = vmatprep.subr.mxu0 0.0
    %1679 = vmatpush1.msra.mxu0 %v1380
    %1680 = vmatprep.subr.mxu0 0.0
    %1681 = vmatpush1.msra.mxu0 %v1385
    %1682 = vmatprep.subr.mxu0 0.0
    %1683 = vmatpush1.msra.mxu0 0.0
    %1684 = vmatprep.subr.mxu0 0.0
    %1685 = vmatpush1.msra.mxu0 0.0
    %1686 = vmatprep.subr.mxu0 0.0
    %1687 = vmatpush1.msra.mxu0 0.0
    %1688 = vmatprep.subr.mxu0 0.0
    %1689 = vmatpush1.msra.mxu0 0.0
    %1690 = vmatprep.subr.mxu0 0.0
    %1691 = vmatpush1.msra.mxu0 0.0
    %1692 = vmatprep.subr.mxu0 0.0
    %1693 = vmatpush1.msra.mxu0 0.0
    %1694 = vmatprep.subr.mxu0 0.0
    %1695 = vmatpush1.msra.mxu0 0.0
    %1696 = vmatprep.subr.mxu0 0.0
    %1697 = vmatpush1.msra.mxu0 0.0
    %1698 = vmatprep.subr.mxu0 0.0
    %1699 = vmatpush1.msra.mxu0 0.0
    %1700 = vmatprep.subr.mxu0 0.0
    %1701 = vmatpush1.msra.mxu0 0.0
    %1702 = vmatprep.subr.mxu0 0.0
    %1703 = vmatpush1.msra.mxu0 0.0
    %1704 = vmatprep.subr.mxu0 0.0
    %1705 = vmatpush1.msra.mxu0 0.0
    %1706 = vmatprep.subr.mxu0 0.0
    %1707 = vmatpush1.msra.mxu0 0.0
    %1708 = vmatprep.subr.mxu0 0.0
    %1709 = vmatpush1.msra.mxu0 0.0
    %1710 = vmatprep.subr.mxu0 0.0
    %1711 = vmatpush1.msra.mxu0 0.0
    %1712 = vmatprep.subr.mxu0 0.0
    %1713 = vmatpush1.msra.mxu0 0.0
    %1714 = vmatprep.subr.mxu0 0.0
    %1715 = vmatpush1.msra.mxu0 0.0
    %1716 = vmatprep.subr.mxu0 0.0
    %1717 = vmatpush1.msra.mxu0 0.0
    %1718 = vmatprep.subr.mxu0 0.0
    %1719 = vmatpush1.msra.mxu0 0.0
    %1720 = vmatprep.subr.mxu0 0.0
    %1721 = vmatpush1.msra.mxu0 0.0
    %1722 = vmatprep.subr.mxu0 0.0
    %1723 = vmatpush1.msra.mxu0 0.0
    %1724 = vmatprep.subr.mxu0 0.0
    %1725 = vmatpush1.msra.mxu0 0.0
    %1726 = vmatprep.subr.mxu0 0.0
    %1727 = vmatpush1.msra.mxu0 0.0
    %1728 = vmatprep.subr.mxu0 0.0
    %1729 = vmatpush1.msra.mxu0 0.0
    %1730 = vmatprep.mubr.f32.mxu0 0.0
    %1731 = vmatmul.mubr.f32.gmra.mrb[0].mxu0 %v1643
    %v1732 = vpop.f32.mrb[0].mxu0
    %v1733 = vadd.f32 %v1604, %v1732
    %v1734 = vpop.f32.mrb[0].mxu0
    %1735 = vmatprep.mubr.f32.mxu0 0.0
    %1736 = vmatmul.mubr.f32.gmra.mrb[0].mxu0 %v1646
    %v1737 = vpop.f32.mrb[0].mxu0
    %v1738 = vadd.f32 %v1609, %v1737
    %v1739 = vpop.f32.mrb[0].mxu0
    %1740 = vmatprep.mubr.f32.mxu0 0.0
    %1741 = vmatmul.mubr.f32.gmra.mrb[0].mxu0 %v1649
    %v1742 = vpop.f32.mrb[0].mxu0
    %v1743 = vadd.f32 %v1614, %v1742
    %v1744 = vpop.f32.mrb[0].mxu0
    %1745 = vmatprep.mubr.f32.mxu0 0.0
    %1746 = vmatmul.mubr.f32.gmra.mrb[0].mxu0 %v1652
    %v1747 = vpop.f32.mrb[0].mxu0
    %v1748 = vadd.f32 %v1619, %v1747
    %v1749 = vpop.f32.mrb[0].mxu0
    %1750 = vmatprep.mubr.f32.mxu0 0.0
    %1751 = vmatmul.mubr.f32.gmra.mrb[0].mxu0 %v1655
    %v1752 = vpop.f32.mrb[0].mxu0
    %v1753 = vadd.f32 %v1624, %v1752
    %v1754 = vpop.f32.mrb[0].mxu0
    %1755 = vmatprep.mubr.f32.mxu0 0.0
    %1756 = vmatmul.mubr.f32.gmra.mrb[0].mxu0 %v1658
    %v1757 = vpop.f32.mrb[0].mxu0
    %v1758 = vadd.f32 %v1629, %v1757
    %v1759 = vpop.f32.mrb[0].mxu0
    %1760 = vmatprep.mubr.f32.mxu0 0.0
    %1761 = vmatmul.mubr.f32.gmra.mrb[0].mxu0 %v1661
    %v1762 = vpop.f32.mrb[0].mxu0
    %v1763 = vadd.f32 %v1634, %v1762
    %v1764 = vpop.f32.mrb[0].mxu0
    %1765 = vmatprep.mubr.f32.mxu0 0.0
    %1766 = vmatmul.mubr.f32.gmra.mrb[0].mxu0 %v1664
    %v1767 = vpop.f32.mrb[0].mxu0
    %v1768 = vadd.f32 %v1639, %v1767
    %v1769 = vpop.f32.mrb[0].mxu0
    %1770 = vdwg.mxu0
    %s1771 = scalar_lea.vmem [#allocation8], 32
    %v1772 = vld [vmem:[%s1771] sm:$0xff]
    %v1773 = vld [vmem:[%s1771 + $0x8] sm:$0xff]
    %1774 = vmatprep.subr.mxu0 0.0
    %1775 = vmatpush1.msra.mxu0 %v1772
    %1776 = vmatprep.subr.mxu0 0.0
    %1777 = vmatpush1.msra.mxu0 %v1773
    %1778 = vmatprep.subr.mxu0 0.0
    %1779 = vmatpush1.msra.mxu0 0.0
    %1780 = vmatprep.subr.mxu0 0.0
    %1781 = vmatpush1.msra.mxu0 0.0
    %1782 = vmatprep.subr.mxu0 0.0
    %1783 = vmatpush1.msra.mxu0 0.0
    %1784 = vmatprep.subr.mxu0 0.0
    %1785 = vmatpush1.msra.mxu0 0.0
    %1786 = vmatprep.subr.mxu0 0.0
    %1787 = vmatpush1.msra.mxu0 0.0
    %1788 = vmatprep.subr.mxu0 0.0
    %1789 = vmatpush1.msra.mxu0 0.0
    %1790 = vmatprep.subr.mxu0 0.0
    %1791 = vmatpush1.msra.mxu0 0.0
    %1792 = vmatprep.subr.mxu0 0.0
    %1793 = vmatpush1.msra.mxu0 0.0
    %1794 = vmatprep.subr.mxu0 0.0
    %1795 = vmatpush1.msra.mxu0 0.0
    %1796 = vmatprep.subr.mxu0 0.0
    %1797 = vmatpush1.msra.mxu0 0.0
    %1798 = vmatprep.subr.mxu0 0.0
    %1799 = vmatpush1.msra.mxu0 0.0
    %1800 = vmatprep.subr.mxu0 0.0
    %1801 = vmatpush1.msra.mxu0 0.0
    %1802 = vmatprep.subr.mxu0 0.0
    %1803 = vmatpush1.msra.mxu0 0.0
    %1804 = vmatprep.subr.mxu0 0.0
    %1805 = vmatpush1.msra.mxu0 0.0
    %1806 = vmatprep.subr.mxu0 0.0
    %1807 = vmatpush1.msra.mxu0 0.0
    %1808 = vmatprep.subr.mxu0 0.0
    %1809 = vmatpush1.msra.mxu0 0.0
    %1810 = vmatprep.subr.mxu0 0.0
    %1811 = vmatpush1.msra.mxu0 0.0
    %1812 = vmatprep.subr.mxu0 0.0
    %1813 = vmatpush1.msra.mxu0 0.0
    %1814 = vmatprep.subr.mxu0 0.0
    %1815 = vmatpush1.msra.mxu0 0.0
    %1816 = vmatprep.subr.mxu0 0.0
    %1817 = vmatpush1.msra.mxu0 0.0
    %1818 = vmatprep.subr.mxu0 0.0
    %1819 = vmatpush1.msra.mxu0 0.0
    %1820 = vmatprep.subr.mxu0 0.0
    %1821 = vmatpush1.msra.mxu0 0.0
    %1822 = vmatprep.subr.mxu0 0.0
    %1823 = vmatpush1.msra.mxu0 0.0
    %1824 = vmatprep.subr.mxu0 0.0
    %1825 = vmatpush1.msra.mxu0 0.0
    %1826 = vmatprep.subr.mxu0 0.0
    %1827 = vmatpush1.msra.mxu0 0.0
    %1828 = vmatprep.subr.mxu0 0.0
    %1829 = vmatpush1.msra.mxu0 0.0
    %1830 = vmatprep.subr.mxu0 0.0
    %1831 = vmatpush1.msra.mxu0 0.0
    %1832 = vmatprep.subr.mxu0 0.0
    %1833 = vmatpush1.msra.mxu0 0.0
    %1834 = vmatprep.subr.mxu0 0.0
    %1835 = vmatpush1.msra.mxu0 0.0
    %1836 = vmatprep.subr.mxu0 0.0
    %1837 = vmatpush1.msra.mxu0 0.0
    %1838 = vmatprep.mubr.f32.mxu0 0.0
    %1839 = vmatmul.mubr.f32.gmra.mrb[0].mxu0 %v1260
    %v1840 = vpop.f32.mrb[0].mxu0
    %v1841 = vadd.f32 0.0, %v1840
    %v1842 = vpop.f32.mrb[0].mxu0
    %1843 = vmatprep.mubr.f32.mxu0 0.0
    %1844 = vmatmul.mubr.f32.gmra.mrb[0].mxu0 %v1263
    %v1845 = vpop.f32.mrb[0].mxu0
    %v1846 = vadd.f32 0.0, %v1845
    %v1847 = vpop.f32.mrb[0].mxu0
    %1848 = vmatprep.mubr.f32.mxu0 0.0
    %1849 = vmatmul.mubr.f32.gmra.mrb[0].mxu0 %v1266
    %v1850 = vpop.f32.mrb[0].mxu0
    %v1851 = vadd.f32 0.0, %v1850
    %v1852 = vpop.f32.mrb[0].mxu0
    %1853 = vmatprep.mubr.f32.mxu0 0.0
    %1854 = vmatmul.mubr.f32.gmra.mrb[0].mxu0 %v1269
    %v1855 = vpop.f32.mrb[0].mxu0
    %v1856 = vadd.f32 0.0, %v1855
    %v1857 = vpop.f32.mrb[0].mxu0
    %1858 = vmatprep.mubr.f32.mxu0 0.0
    %1859 = vmatmul.mubr.f32.gmra.mrb[0].mxu0 %v1272
    %v1860 = vpop.f32.mrb[0].mxu0
    %v1861 = vadd.f32 0.0, %v1860
    %v1862 = vpop.f32.mrb[0].mxu0
    %1863 = vmatprep.mubr.f32.mxu0 0.0
    %1864 = vmatmul.mubr.f32.gmra.mrb[0].mxu0 %v1275
    %v1865 = vpop.f32.mrb[0].mxu0
    %v1866 = vadd.f32 0.0, %v1865
    %v1867 = vpop.f32.mrb[0].mxu0
    %1868 = vmatprep.mubr.f32.mxu0 0.0
    %1869 = vmatmul.mubr.f32.gmra.mrb[0].mxu0 %v1278
    %v1870 = vpop.f32.mrb[0].mxu0
    %v1871 = vadd.f32 0.0, %v1870
    %v1872 = vpop.f32.mrb[0].mxu0
    %1873 = vmatprep.mubr.f32.mxu0 0.0
    %1874 = vmatmul.mubr.f32.gmra.mrb[0].mxu0 %v1281
    %v1875 = vpop.f32.mrb[0].mxu0
    %v1876 = vadd.f32 0.0, %v1875
    %v1877 = vpop.f32.mrb[0].mxu0
    %1878 = vdwg.mxu0
    %s1879 = scalar_lea.vmem %s8, 128
    %v1880 = vld [vmem:[%s1879] sm:$0xff]
    %v1881 = vld [vmem:[%s1879 + $0x8] sm:$0xff]
    %v1882 = vld [vmem:[%s1879 + $0x10] sm:$0xff]
    %v1883 = vld [vmem:[%s1879 + $0x18] sm:$0xff]
    %v1884 = vld [vmem:[%s1879 + $0x20] sm:$0xff]
    %v1885 = vld [vmem:[%s1879 + $0x28] sm:$0xff]
    %v1886 = vld [vmem:[%s1879 + $0x30] sm:$0xff]
    %v1887 = vld [vmem:[%s1879 + $0x38] sm:$0xff]
    %v1889 = vsel %vm403, %v1880, 0
    %v1892 = vsel %vm403, %v1881, 0
    %v1895 = vsel %vm403, %v1882, 0
    %v1898 = vsel %vm403, %v1883, 0
    %v1901 = vsel %vm403, %v1884, 0
    %v1904 = vsel %vm403, %v1885, 0
    %v1907 = vsel %vm403, %v1886, 0
    %v1910 = vsel %vm403, %v1887, 0
    %1912 = vmatprep.subr.mxu0 0.0
    %1913 = vmatpush1.msra.mxu0 %v1841
    %1914 = vmatprep.subr.mxu0 0.0
    %1915 = vmatpush1.msra.mxu0 %v1846
    %1916 = vmatprep.subr.mxu0 0.0
    %1917 = vmatpush1.msra.mxu0 %v1851
    %1918 = vmatprep.subr.mxu0 0.0
    %1919 = vmatpush1.msra.mxu0 %v1856
    %1920 = vmatprep.subr.mxu0 0.0
    %1921 = vmatpush1.msra.mxu0 %v1861
    %1922 = vmatprep.subr.mxu0 0.0
    %1923 = vmatpush1.msra.mxu0 %v1866
    %1924 = vmatprep.subr.mxu0 0.0
    %1925 = vmatpush1.msra.mxu0 %v1871
    %1926 = vmatprep.subr.mxu0 0.0
    %1927 = vmatpush1.msra.mxu0 %v1876
    %1928 = vmatprep.subr.mxu0 0.0
    %1929 = vmatpush1.msra.mxu0 0.0
    %1930 = vmatprep.subr.mxu0 0.0
    %1931 = vmatpush1.msra.mxu0 0.0
    %1932 = vmatprep.subr.mxu0 0.0
    %1933 = vmatpush1.msra.mxu0 0.0
    %1934 = vmatprep.subr.mxu0 0.0
    %1935 = vmatpush1.msra.mxu0 0.0
    %1936 = vmatprep.subr.mxu0 0.0
    %1937 = vmatpush1.msra.mxu0 0.0
    %1938 = vmatprep.subr.mxu0 0.0
    %1939 = vmatpush1.msra.mxu0 0.0
    %1940 = vmatprep.subr.mxu0 0.0
    %1941 = vmatpush1.msra.mxu0 0.0
    %1942 = vmatprep.subr.mxu0 0.0
    %1943 = vmatpush1.msra.mxu0 0.0
    %1944 = vmatprep.subr.mxu0 0.0
    %1945 = vmatpush1.msra.mxu0 0.0
    %1946 = vmatprep.subr.mxu0 0.0
    %1947 = vmatpush1.msra.mxu0 0.0
    %1948 = vmatprep.subr.mxu0 0.0
    %1949 = vmatpush1.msra.mxu0 0.0
    %1950 = vmatprep.subr.mxu0 0.0
    %1951 = vmatpush1.msra.mxu0 0.0
    %1952 = vmatprep.subr.mxu0 0.0
    %1953 = vmatpush1.msra.mxu0 0.0
    %1954 = vmatprep.subr.mxu0 0.0
    %1955 = vmatpush1.msra.mxu0 0.0
    %1956 = vmatprep.subr.mxu0 0.0
    %1957 = vmatpush1.msra.mxu0 0.0
    %1958 = vmatprep.subr.mxu0 0.0
    %1959 = vmatpush1.msra.mxu0 0.0
    %1960 = vmatprep.subr.mxu0 0.0
    %1961 = vmatpush1.msra.mxu0 0.0
    %1962 = vmatprep.subr.mxu0 0.0
    %1963 = vmatpush1.msra.mxu0 0.0
    %1964 = vmatprep.subr.mxu0 0.0
    %1965 = vmatpush1.msra.mxu0 0.0
    %1966 = vmatprep.subr.mxu0 0.0
    %1967 = vmatpush1.msra.mxu0 0.0
    %1968 = vmatprep.subr.mxu0 0.0
    %1969 = vmatpush1.msra.mxu0 0.0
    %1970 = vmatprep.subr.mxu0 0.0
    %1971 = vmatpush1.msra.mxu0 0.0
    %1972 = vmatprep.subr.mxu0 0.0
    %1973 = vmatpush1.msra.mxu0 0.0
    %1974 = vmatprep.subr.mxu0 0.0
    %1975 = vmatpush1.msra.mxu0 0.0
    %1976 = vmatprep.mubr.f32.mxu0 0.0
    %1977 = vmatmul.mubr.f32.gmra.mrb[0].mxu0 %v1889
    %v1978 = vpop.f32.mrb[0].mxu0
    %v1979 = vadd.f32 0.0, %v1978
    %v1980 = vpop.f32.mrb[0].mxu0
    %1981 = vmatprep.mubr.f32.mxu0 0.0
    %1982 = vmatmul.mubr.f32.gmra.mrb[0].mxu0 %v1892
    %v1983 = vpop.f32.mrb[0].mxu0
    %v1984 = vadd.f32 0.0, %v1983
    %v1985 = vpop.f32.mrb[0].mxu0
    %1986 = vmatprep.mubr.f32.mxu0 0.0
    %1987 = vmatmul.mubr.f32.gmra.mrb[0].mxu0 %v1895
    %v1988 = vpop.f32.mrb[0].mxu0
    %v1989 = vadd.f32 0.0, %v1988
    %v1990 = vpop.f32.mrb[0].mxu0
    %1991 = vmatprep.mubr.f32.mxu0 0.0
    %1992 = vmatmul.mubr.f32.gmra.mrb[0].mxu0 %v1898
    %v1993 = vpop.f32.mrb[0].mxu0
    %v1994 = vadd.f32 0.0, %v1993
    %v1995 = vpop.f32.mrb[0].mxu0
    %1996 = vmatprep.mubr.f32.mxu0 0.0
    %1997 = vmatmul.mubr.f32.gmra.mrb[0].mxu0 %v1901
    %v1998 = vpop.f32.mrb[0].mxu0
    %v1999 = vadd.f32 0.0, %v1998
    %v2000 = vpop.f32.mrb[0].mxu0
    %2001 = vmatprep.mubr.f32.mxu0 0.0
    %2002 = vmatmul.mubr.f32.gmra.mrb[0].mxu0 %v1904
    %v2003 = vpop.f32.mrb[0].mxu0
    %v2004 = vadd.f32 0.0, %v2003
    %v2005 = vpop.f32.mrb[0].mxu0
    %2006 = vmatprep.mubr.f32.mxu0 0.0
    %2007 = vmatmul.mubr.f32.gmra.mrb[0].mxu0 %v1907
    %v2008 = vpop.f32.mrb[0].mxu0
    %v2009 = vadd.f32 0.0, %v2008
    %v2010 = vpop.f32.mrb[0].mxu0
    %2011 = vmatprep.mubr.f32.mxu0 0.0
    %2012 = vmatmul.mubr.f32.gmra.mrb[0].mxu0 %v1910
    %v2013 = vpop.f32.mrb[0].mxu0
    %v2014 = vadd.f32 0.0, %v2013
    %v2015 = vpop.f32.mrb[0].mxu0
    %2016 = vdwg.mxu0
    %v2017 = vadd.f32 %v1733, %v1979
    %v2018 = vadd.f32 %v1738, %v1984
    %v2019 = vadd.f32 %v1743, %v1989
    %v2020 = vadd.f32 %v1748, %v1994
    %v2021 = vadd.f32 %v1753, %v1999
    %v2022 = vadd.f32 %v1758, %v2004
    %v2023 = vadd.f32 %v1763, %v2009
    %v2024 = vadd.f32 %v1768, %v2014
    %s2025 = scalar_lea.vmem [#allocation8], 48
    %v2026 = vld [vmem:[%s2025] sm:$0xff]
    %v2027 = vld [vmem:[%s2025 + $0x8] sm:$0xff]
    %2028 = vmatprep.subr.mxu0 0.0
    %2029 = vmatpush1.msra.mxu0 %v2026
    %2030 = vmatprep.subr.mxu0 0.0
    %2031 = vmatpush1.msra.mxu0 %v2027
    %2032 = vmatprep.subr.mxu0 0.0
    %2033 = vmatpush1.msra.mxu0 0.0
    %2034 = vmatprep.subr.mxu0 0.0
    %2035 = vmatpush1.msra.mxu0 0.0
    %2036 = vmatprep.subr.mxu0 0.0
    %2037 = vmatpush1.msra.mxu0 0.0
    %2038 = vmatprep.subr.mxu0 0.0
    %2039 = vmatpush1.msra.mxu0 0.0
    %2040 = vmatprep.subr.mxu0 0.0
    %2041 = vmatpush1.msra.mxu0 0.0
    %2042 = vmatprep.subr.mxu0 0.0
    %2043 = vmatpush1.msra.mxu0 0.0
    %2044 = vmatprep.subr.mxu0 0.0
    %2045 = vmatpush1.msra.mxu0 0.0
    %2046 = vmatprep.subr.mxu0 0.0
    %2047 = vmatpush1.msra.mxu0 0.0
    %2048 = vmatprep.subr.mxu0 0.0
    %2049 = vmatpush1.msra.mxu0 0.0
    %2050 = vmatprep.subr.mxu0 0.0
    %2051 = vmatpush1.msra.mxu0 0.0
    %2052 = vmatprep.subr.mxu0 0.0
    %2053 = vmatpush1.msra.mxu0 0.0
    %2054 = vmatprep.subr.mxu0 0.0
    %2055 = vmatpush1.msra.mxu0 0.0
    %2056 = vmatprep.subr.mxu0 0.0
    %2057 = vmatpush1.msra.mxu0 0.0
    %2058 = vmatprep.subr.mxu0 0.0
    %2059 = vmatpush1.msra.mxu0 0.0
    %2060 = vmatprep.subr.mxu0 0.0
    %2061 = vmatpush1.msra.mxu0 0.0
    %2062 = vmatprep.subr.mxu0 0.0
    %2063 = vmatpush1.msra.mxu0 0.0
    %2064 = vmatprep.subr.mxu0 0.0
    %2065 = vmatpush1.msra.mxu0 0.0
    %2066 = vmatprep.subr.mxu0 0.0
    %2067 = vmatpush1.msra.mxu0 0.0
    %2068 = vmatprep.subr.mxu0 0.0
    %2069 = vmatpush1.msra.mxu0 0.0
    %2070 = vmatprep.subr.mxu0 0.0
    %2071 = vmatpush1.msra.mxu0 0.0
    %2072 = vmatprep.subr.mxu0 0.0
    %2073 = vmatpush1.msra.mxu0 0.0
    %2074 = vmatprep.subr.mxu0 0.0
    %2075 = vmatpush1.msra.mxu0 0.0
    %2076 = vmatprep.subr.mxu0 0.0
    %2077 = vmatpush1.msra.mxu0 0.0
    %2078 = vmatprep.subr.mxu0 0.0
    %2079 = vmatpush1.msra.mxu0 0.0
    %2080 = vmatprep.subr.mxu0 0.0
    %2081 = vmatpush1.msra.mxu0 0.0
    %2082 = vmatprep.subr.mxu0 0.0
    %2083 = vmatpush1.msra.mxu0 0.0
    %2084 = vmatprep.subr.mxu0 0.0
    %2085 = vmatpush1.msra.mxu0 0.0
    %2086 = vmatprep.subr.mxu0 0.0
    %2087 = vmatpush1.msra.mxu0 0.0
    %2088 = vmatprep.subr.mxu0 0.0
    %2089 = vmatpush1.msra.mxu0 0.0
    %2090 = vmatprep.subr.mxu0 0.0
    %2091 = vmatpush1.msra.mxu0 0.0
    %2092 = vmatprep.mubr.f32.mxu0 0.0
    %2093 = vmatmul.mubr.f32.gmra.mrb[0].mxu0 %v1260
    %v2094 = vpop.f32.mrb[0].mxu0
    %v2095 = vadd.f32 0.0, %v2094
    %v2096 = vpop.f32.mrb[0].mxu0
    %2097 = vmatprep.mubr.f32.mxu0 0.0
    %2098 = vmatmul.mubr.f32.gmra.mrb[0].mxu0 %v1263
    %v2099 = vpop.f32.mrb[0].mxu0
    %v2100 = vadd.f32 0.0, %v2099
    %v2101 = vpop.f32.mrb[0].mxu0
    %2102 = vmatprep.mubr.f32.mxu0 0.0
    %2103 = vmatmul.mubr.f32.gmra.mrb[0].mxu0 %v1266
    %v2104 = vpop.f32.mrb[0].mxu0
    %v2105 = vadd.f32 0.0, %v2104
    %v2106 = vpop.f32.mrb[0].mxu0
    %2107 = vmatprep.mubr.f32.mxu0 0.0
    %2108 = vmatmul.mubr.f32.gmra.mrb[0].mxu0 %v1269
    %v2109 = vpop.f32.mrb[0].mxu0
    %v2110 = vadd.f32 0.0, %v2109
    %v2111 = vpop.f32.mrb[0].mxu0
    %2112 = vmatprep.mubr.f32.mxu0 0.0
    %2113 = vmatmul.mubr.f32.gmra.mrb[0].mxu0 %v1272
    %v2114 = vpop.f32.mrb[0].mxu0
    %v2115 = vadd.f32 0.0, %v2114
    %v2116 = vpop.f32.mrb[0].mxu0
    %2117 = vmatprep.mubr.f32.mxu0 0.0
    %2118 = vmatmul.mubr.f32.gmra.mrb[0].mxu0 %v1275
    %v2119 = vpop.f32.mrb[0].mxu0
    %v2120 = vadd.f32 0.0, %v2119
    %v2121 = vpop.f32.mrb[0].mxu0
    %2122 = vmatprep.mubr.f32.mxu0 0.0
    %2123 = vmatmul.mubr.f32.gmra.mrb[0].mxu0 %v1278
    %v2124 = vpop.f32.mrb[0].mxu0
    %v2125 = vadd.f32 0.0, %v2124
    %v2126 = vpop.f32.mrb[0].mxu0
    %2127 = vmatprep.mubr.f32.mxu0 0.0
    %2128 = vmatmul.mubr.f32.gmra.mrb[0].mxu0 %v1281
    %v2129 = vpop.f32.mrb[0].mxu0
    %v2130 = vadd.f32 0.0, %v2129
    %v2131 = vpop.f32.mrb[0].mxu0
    %2132 = vdwg.mxu0
    %s2133 = scalar_lea.vmem %s8, 192
    %v2134 = vld [vmem:[%s2133] sm:$0xff]
    %v2135 = vld [vmem:[%s2133 + $0x8] sm:$0xff]
    %v2136 = vld [vmem:[%s2133 + $0x10] sm:$0xff]
    %v2137 = vld [vmem:[%s2133 + $0x18] sm:$0xff]
    %v2138 = vld [vmem:[%s2133 + $0x20] sm:$0xff]
    %v2139 = vld [vmem:[%s2133 + $0x28] sm:$0xff]
    %v2140 = vld [vmem:[%s2133 + $0x30] sm:$0xff]
    %v2141 = vld [vmem:[%s2133 + $0x38] sm:$0xff]
    %v2143 = vsel %vm403, %v2134, 0
    %v2146 = vsel %vm403, %v2135, 0
    %v2149 = vsel %vm403, %v2136, 0
    %v2152 = vsel %vm403, %v2137, 0
    %v2155 = vsel %vm403, %v2138, 0
    %v2158 = vsel %vm403, %v2139, 0
    %v2161 = vsel %vm403, %v2140, 0
    %v2164 = vsel %vm403, %v2141, 0
    %2166 = vmatprep.subr.mxu0 0.0
    %2167 = vmatpush1.msra.mxu0 %v2095
    %2168 = vmatprep.subr.mxu0 0.0
    %2169 = vmatpush1.msra.mxu0 %v2100
    %2170 = vmatprep.subr.mxu0 0.0
    %2171 = vmatpush1.msra.mxu0 %v2105
    %2172 = vmatprep.subr.mxu0 0.0
    %2173 = vmatpush1.msra.mxu0 %v2110
    %2174 = vmatprep.subr.mxu0 0.0
    %2175 = vmatpush1.msra.mxu0 %v2115
    %2176 = vmatprep.subr.mxu0 0.0
    %2177 = vmatpush1.msra.mxu0 %v2120
    %2178 = vmatprep.subr.mxu0 0.0
    %2179 = vmatpush1.msra.mxu0 %v2125
    %2180 = vmatprep.subr.mxu0 0.0
    %2181 = vmatpush1.msra.mxu0 %v2130
    %2182 = vmatprep.subr.mxu0 0.0
    %2183 = vmatpush1.msra.mxu0 0.0
    %2184 = vmatprep.subr.mxu0 0.0
    %2185 = vmatpush1.msra.mxu0 0.0
    %2186 = vmatprep.subr.mxu0 0.0
    %2187 = vmatpush1.msra.mxu0 0.0
    %2188 = vmatprep.subr.mxu0 0.0
    %2189 = vmatpush1.msra.mxu0 0.0
    %2190 = vmatprep.subr.mxu0 0.0
    %2191 = vmatpush1.msra.mxu0 0.0
    %2192 = vmatprep.subr.mxu0 0.0
    %2193 = vmatpush1.msra.mxu0 0.0
    %2194 = vmatprep.subr.mxu0 0.0
    %2195 = vmatpush1.msra.mxu0 0.0
    %2196 = vmatprep.subr.mxu0 0.0
    %2197 = vmatpush1.msra.mxu0 0.0
    %2198 = vmatprep.subr.mxu0 0.0
    %2199 = vmatpush1.msra.mxu0 0.0
    %2200 = vmatprep.subr.mxu0 0.0
    %2201 = vmatpush1.msra.mxu0 0.0
    %2202 = vmatprep.subr.mxu0 0.0
    %2203 = vmatpush1.msra.mxu0 0.0
    %2204 = vmatprep.subr.mxu0 0.0
    %2205 = vmatpush1.msra.mxu0 0.0
    %2206 = vmatprep.subr.mxu0 0.0
    %2207 = vmatpush1.msra.mxu0 0.0
    %2208 = vmatprep.subr.mxu0 0.0
    %2209 = vmatpush1.msra.mxu0 0.0
    %2210 = vmatprep.subr.mxu0 0.0
    %2211 = vmatpush1.msra.mxu0 0.0
    %2212 = vmatprep.subr.mxu0 0.0
    %2213 = vmatpush1.msra.mxu0 0.0
    %2214 = vmatprep.subr.mxu0 0.0
    %2215 = vmatpush1.msra.mxu0 0.0
    %2216 = vmatprep.subr.mxu0 0.0
    %2217 = vmatpush1.msra.mxu0 0.0
    %2218 = vmatprep.subr.mxu0 0.0
    %2219 = vmatpush1.msra.mxu0 0.0
    %2220 = vmatprep.subr.mxu0 0.0
    %2221 = vmatpush1.msra.mxu0 0.0
    %2222 = vmatprep.subr.mxu0 0.0
    %2223 = vmatpush1.msra.mxu0 0.0
    %2224 = vmatprep.subr.mxu0 0.0
    %2225 = vmatpush1.msra.mxu0 0.0
    %2226 = vmatprep.subr.mxu0 0.0
    %2227 = vmatpush1.msra.mxu0 0.0
    %2228 = vmatprep.subr.mxu0 0.0
    %2229 = vmatpush1.msra.mxu0 0.0
    %2230 = vmatprep.mubr.f32.mxu0 0.0
    %2231 = vmatmul.mubr.f32.gmra.mrb[0].mxu0 %v2143
    %v2232 = vpop.f32.mrb[0].mxu0
    %v2233 = vadd.f32 0.0, %v2232
    %v2234 = vpop.f32.mrb[0].mxu0
    %2235 = vmatprep.mubr.f32.mxu0 0.0
    %2236 = vmatmul.mubr.f32.gmra.mrb[0].mxu0 %v2146
    %v2237 = vpop.f32.mrb[0].mxu0
    %v2238 = vadd.f32 0.0, %v2237
    %v2239 = vpop.f32.mrb[0].mxu0
    %2240 = vmatprep.mubr.f32.mxu0 0.0
    %2241 = vmatmul.mubr.f32.gmra.mrb[0].mxu0 %v2149
    %v2242 = vpop.f32.mrb[0].mxu0
    %v2243 = vadd.f32 0.0, %v2242
    %v2244 = vpop.f32.mrb[0].mxu0
    %2245 = vmatprep.mubr.f32.mxu0 0.0
    %2246 = vmatmul.mubr.f32.gmra.mrb[0].mxu0 %v2152
    %v2247 = vpop.f32.mrb[0].mxu0
    %v2248 = vadd.f32 0.0, %v2247
    %v2249 = vpop.f32.mrb[0].mxu0
    %2250 = vmatprep.mubr.f32.mxu0 0.0
    %2251 = vmatmul.mubr.f32.gmra.mrb[0].mxu0 %v2155
    %v2252 = vpop.f32.mrb[0].mxu0
    %v2253 = vadd.f32 0.0, %v2252
    %v2254 = vpop.f32.mrb[0].mxu0
    %2255 = vmatprep.mubr.f32.mxu0 0.0
    %2256 = vmatmul.mubr.f32.gmra.mrb[0].mxu0 %v2158
    %v2257 = vpop.f32.mrb[0].mxu0
    %v2258 = vadd.f32 0.0, %v2257
    %v2259 = vpop.f32.mrb[0].mxu0
    %2260 = vmatprep.mubr.f32.mxu0 0.0
    %2261 = vmatmul.mubr.f32.gmra.mrb[0].mxu0 %v2161
    %v2262 = vpop.f32.mrb[0].mxu0
    %v2263 = vadd.f32 0.0, %v2262
    %v2264 = vpop.f32.mrb[0].mxu0
    %2265 = vmatprep.mubr.f32.mxu0 0.0
    %2266 = vmatmul.mubr.f32.gmra.mrb[0].mxu0 %v2164
    %v2267 = vpop.f32.mrb[0].mxu0
    %v2268 = vadd.f32 0.0, %v2267
    %v2269 = vpop.f32.mrb[0].mxu0
    %2270 = vdwg.mxu0
    %v2271 = vadd.f32 %v2017, %v2233
    %v2272 = vadd.f32 %v2018, %v2238
    %v2273 = vadd.f32 %v2019, %v2243
    %v2274 = vadd.f32 %v2020, %v2248
    %v2275 = vadd.f32 %v2021, %v2253
    %v2276 = vadd.f32 %v2022, %v2258
    %v2277 = vadd.f32 %v2023, %v2263
    %v2278 = vadd.f32 %v2024, %v2268
    %v2279 = vld [vmem:[#allocation10] sm:$0xff]
    %v2280 = vld [vmem:[#allocation10 + $0x8] sm:$0xff]
    %v2281 = vld [vmem:[#allocation10 + $0x10] sm:$0xff]
    %v2282 = vld [vmem:[#allocation10 + $0x18] sm:$0xff]
    %v2283 = vld [vmem:[#allocation10 + $0x20] sm:$0xff]
    %v2284 = vld [vmem:[#allocation10 + $0x28] sm:$0xff]
    %v2285 = vld [vmem:[#allocation10 + $0x30] sm:$0xff]
    %v2286 = vld [vmem:[#allocation10 + $0x38] sm:$0xff]
    %2288 = vset.pattern.permute.xlu0 0
    %2289 = vperm.xlu0 %2288, %v2279
    %v2290 = vpop.permute.xlu0 %2289
    %2293 = vset.pattern.permute.xlu0 0
    %2294 = vperm.xlu0 %2293, %v2280
    %v2295 = vpop.permute.xlu0 %2294
    %2298 = vset.pattern.permute.xlu0 0
    %2299 = vperm.xlu0 %2298, %v2281
    %v2300 = vpop.permute.xlu0 %2299
    %2303 = vset.pattern.permute.xlu0 0
    %2304 = vperm.xlu0 %2303, %v2282
    %v2305 = vpop.permute.xlu0 %2304
    %2308 = vset.pattern.permute.xlu0 0
    %2309 = vperm.xlu0 %2308, %v2283
    %v2310 = vpop.permute.xlu0 %2309
    %2313 = vset.pattern.permute.xlu0 0
    %2314 = vperm.xlu0 %2313, %v2284
    %v2315 = vpop.permute.xlu0 %2314
    %2318 = vset.pattern.permute.xlu0 0
    %2319 = vperm.xlu0 %2318, %v2285
    %v2320 = vpop.permute.xlu0 %2319
    %2323 = vset.pattern.permute.xlu0 0
    %2324 = vperm.xlu0 %2323, %v2286
    %v2325 = vpop.permute.xlu0 %2324
    %v2327 = vadd.f32 %v2271, %v2290
    %v2328 = vadd.f32 %v2272, %v2295
    %v2329 = vadd.f32 %v2273, %v2300
    %v2330 = vadd.f32 %v2274, %v2305
    %v2331 = vadd.f32 %v2275, %v2310
    %v2332 = vadd.f32 %v2276, %v2315
    %v2333 = vadd.f32 %v2277, %v2320
    %v2334 = vadd.f32 %v2278, %v2325
    %s2335 = sld [smem:[#allocation3]]
    %vm2336 = vcmp.ge.f32.partialorder %v2327, 0.0
    %vm2337 = vcmp.ge.f32.partialorder %v2328, 0.0
    %vm2338 = vcmp.ge.f32.partialorder %v2329, 0.0
    %vm2339 = vcmp.ge.f32.partialorder %v2330, 0.0
    %vm2340 = vcmp.ge.f32.partialorder %v2331, 0.0
    %vm2341 = vcmp.ge.f32.partialorder %v2332, 0.0
    %vm2342 = vcmp.ge.f32.partialorder %v2333, 0.0
    %vm2343 = vcmp.ge.f32.partialorder %v2334, 0.0
    %v2344 = vstv %s2335
    %v2345 = vmul.f32 %v2344, %v2327
    %v2346 = vmul.f32 %v2344, %v2328
    %v2347 = vmul.f32 %v2344, %v2329
    %v2348 = vmul.f32 %v2344, %v2330
    %v2349 = vmul.f32 %v2344, %v2331
    %v2350 = vmul.f32 %v2344, %v2332
    %v2351 = vmul.f32 %v2344, %v2333
    %v2352 = vmul.f32 %v2344, %v2334
    %v2353 = vsel %vm2336, %v2327, %v2345
    %v2354 = vsel %vm2337, %v2328, %v2346
    %v2355 = vsel %vm2338, %v2329, %v2347
    %v2356 = vsel %vm2339, %v2330, %v2348
    %v2357 = vsel %vm2340, %v2331, %v2349
    %v2358 = vsel %vm2341, %v2332, %v2350
    %v2359 = vsel %vm2342, %v2333, %v2351
    %v2360 = vsel %vm2343, %v2334, %v2352
    %v2361 = vld [vmem:[%s1] sm:$0xff]
    %v2362 = vld [vmem:[%s1 + $0x8] sm:$0xff]
    %v2363 = vld [vmem:[%s1 + $0x10] sm:$0xff]
    %v2364 = vld [vmem:[%s1 + $0x18] sm:$0xff]
    %v2365 = vld [vmem:[%s1 + $0x20] sm:$0xff]
    %v2366 = vld [vmem:[%s1 + $0x28] sm:$0xff]
    %v2367 = vld [vmem:[%s1 + $0x30] sm:$0xff]
    %v2368 = vld [vmem:[%s1 + $0x38] sm:$0xff]
    %v2369 = vsub.f32 %v2353, %v2361
    %v2370 = vsub.f32 %v2354, %v2362
    %v2371 = vsub.f32 %v2355, %v2363
    %v2372 = vsub.f32 %v2356, %v2364
    %v2373 = vsub.f32 %v2357, %v2365
    %v2374 = vsub.f32 %v2358, %v2366
    %v2375 = vsub.f32 %v2359, %v2367
    %v2376 = vsub.f32 %v2360, %v2368
    %v2377 = vld [vmem:[#allocation11] sm:$0xff]
    %vm2378 = vcmask 64512
    %v2380 = vsel %vm2378, %v2369, 0
    %v2383 = vsel %vm2378, %v2370, 0
    %v2386 = vsel %vm2378, %v2371, 0
    %v2389 = vsel %vm2378, %v2372, 0
    %v2392 = vsel %vm2378, %v2373, 0
    %v2395 = vsel %vm2378, %v2374, 0
    %v2398 = vsel %vm2378, %v2375, 0
    %v2401 = vsel %vm2378, %v2376, 0
    %2403 = vmatprep.subr.mxu0 0.0
    %2404 = vmatpush1.msra.mxu0 %v2377
    %2405 = vmatprep.subr.mxu0 0.0
    %2406 = vmatpush1.msra.mxu0 0.0
    %2407 = vmatprep.subr.mxu0 0.0
    %2408 = vmatpush1.msra.mxu0 0.0
    %2409 = vmatprep.subr.mxu0 0.0
    %2410 = vmatpush1.msra.mxu0 0.0
    %2411 = vmatprep.subr.mxu0 0.0
    %2412 = vmatpush1.msra.mxu0 0.0
    %2413 = vmatprep.subr.mxu0 0.0
    %2414 = vmatpush1.msra.mxu0 0.0
    %2415 = vmatprep.subr.mxu0 0.0
    %2416 = vmatpush1.msra.mxu0 0.0
    %2417 = vmatprep.subr.mxu0 0.0
    %2418 = vmatpush1.msra.mxu0 0.0
    %2419 = vmatprep.subr.mxu0 0.0
    %2420 = vmatpush1.msra.mxu0 0.0
    %2421 = vmatprep.subr.mxu0 0.0
    %2422 = vmatpush1.msra.mxu0 0.0
    %2423 = vmatprep.subr.mxu0 0.0
    %2424 = vmatpush1.msra.mxu0 0.0
    %2425 = vmatprep.subr.mxu0 0.0
    %2426 = vmatpush1.msra.mxu0 0.0
    %2427 = vmatprep.subr.mxu0 0.0
    %2428 = vmatpush1.msra.mxu0 0.0
    %2429 = vmatprep.subr.mxu0 0.0
    %2430 = vmatpush1.msra.mxu0 0.0
    %2431 = vmatprep.subr.mxu0 0.0
    %2432 = vmatpush1.msra.mxu0 0.0
    %2433 = vmatprep.subr.mxu0 0.0
    %2434 = vmatpush1.msra.mxu0 0.0
    %2435 = vmatprep.subr.mxu0 0.0
    %2436 = vmatpush1.msra.mxu0 0.0
    %2437 = vmatprep.subr.mxu0 0.0
    %2438 = vmatpush1.msra.mxu0 0.0
    %2439 = vmatprep.subr.mxu0 0.0
    %2440 = vmatpush1.msra.mxu0 0.0
    %2441 = vmatprep.subr.mxu0 0.0
    %2442 = vmatpush1.msra.mxu0 0.0
    %2443 = vmatprep.subr.mxu0 0.0
    %2444 = vmatpush1.msra.mxu0 0.0
    %2445 = vmatprep.subr.mxu0 0.0
    %2446 = vmatpush1.msra.mxu0 0.0
    %2447 = vmatprep.subr.mxu0 0.0
    %2448 = vmatpush1.msra.mxu0 0.0
    %2449 = vmatprep.subr.mxu0 0.0
    %2450 = vmatpush1.msra.mxu0 0.0
    %2451 = vmatprep.subr.mxu0 0.0
    %2452 = vmatpush1.msra.mxu0 0.0
    %2453 = vmatprep.subr.mxu0 0.0
    %2454 = vmatpush1.msra.mxu0 0.0
    %2455 = vmatprep.subr.mxu0 0.0
    %2456 = vmatpush1.msra.mxu0 0.0
    %2457 = vmatprep.subr.mxu0 0.0
    %2458 = vmatpush1.msra.mxu0 0.0
    %2459 = vmatprep.subr.mxu0 0.0
    %2460 = vmatpush1.msra.mxu0 0.0
    %2461 = vmatprep.subr.mxu0 0.0
    %2462 = vmatpush1.msra.mxu0 0.0
    %2463 = vmatprep.subr.mxu0 0.0
    %2464 = vmatpush1.msra.mxu0 0.0
    %2465 = vmatprep.subr.mxu0 0.0
    %2466 = vmatpush1.msra.mxu0 0.0
    %2467 = vmatprep.mubr.f32.mxu0 0.0
    %2468 = vmatmul.mubr.f32.gmra.mrb[0].mxu0 %v2380
    %v2469 = vpop.f32.mrb[0].mxu0
    %v2470 = vadd.f32 0.0, %v2469
    %v2471 = vpop.f32.mrb[0].mxu0
    %2472 = vmatprep.mubr.f32.mxu0 0.0
    %2473 = vmatmul.mubr.f32.gmra.mrb[0].mxu0 %v2383
    %v2474 = vpop.f32.mrb[0].mxu0
    %v2475 = vadd.f32 0.0, %v2474
    %v2476 = vpop.f32.mrb[0].mxu0
    %2477 = vmatprep.mubr.f32.mxu0 0.0
    %2478 = vmatmul.mubr.f32.gmra.mrb[0].mxu0 %v2386
    %v2479 = vpop.f32.mrb[0].mxu0
    %v2480 = vadd.f32 0.0, %v2479
    %v2481 = vpop.f32.mrb[0].mxu0
    %2482 = vmatprep.mubr.f32.mxu0 0.0
    %2483 = vmatmul.mubr.f32.gmra.mrb[0].mxu0 %v2389
    %v2484 = vpop.f32.mrb[0].mxu0
    %v2485 = vadd.f32 0.0, %v2484
    %v2486 = vpop.f32.mrb[0].mxu0
    %2487 = vmatprep.mubr.f32.mxu0 0.0
    %2488 = vmatmul.mubr.f32.gmra.mrb[0].mxu0 %v2392
    %v2489 = vpop.f32.mrb[0].mxu0
    %v2490 = vadd.f32 0.0, %v2489
    %v2491 = vpop.f32.mrb[0].mxu0
    %2492 = vmatprep.mubr.f32.mxu0 0.0
    %2493 = vmatmul.mubr.f32.gmra.mrb[0].mxu0 %v2395
    %v2494 = vpop.f32.mrb[0].mxu0
    %v2495 = vadd.f32 0.0, %v2494
    %v2496 = vpop.f32.mrb[0].mxu0
    %2497 = vmatprep.mubr.f32.mxu0 0.0
    %2498 = vmatmul.mubr.f32.gmra.mrb[0].mxu0 %v2398
    %v2499 = vpop.f32.mrb[0].mxu0
    %v2500 = vadd.f32 0.0, %v2499
    %v2501 = vpop.f32.mrb[0].mxu0
    %2502 = vmatprep.mubr.f32.mxu0 0.0
    %2503 = vmatmul.mubr.f32.gmra.mrb[0].mxu0 %v2401
    %v2504 = vpop.f32.mrb[0].mxu0
    %v2505 = vadd.f32 0.0, %v2504
    %v2506 = vpop.f32.mrb[0].mxu0
    %2507 = vdwg.mxu0
    %v2508 = vld [vmem:[%s12] sm:$0xff]
    %v2509 = vld [vmem:[%s12 + $0x8] sm:$0xff]
    %v2510 = vld [vmem:[%s12 + $0x10] sm:$0xff]
    %v2511 = vld [vmem:[%s12 + $0x18] sm:$0xff]
    %v2512 = vld [vmem:[%s12 + $0x20] sm:$0xff]
    %v2513 = vld [vmem:[%s12 + $0x28] sm:$0xff]
    %v2514 = vld [vmem:[%s12 + $0x30] sm:$0xff]
    %v2515 = vld [vmem:[%s12 + $0x38] sm:$0xff]
    %s2516 = scalar_lea.vmem [#allocation11], 8
    %v2517 = vld [vmem:[%s2516] sm:$0xff]
    %2518 = vmatprep.subr.mxu0 0.0
    %2519 = vmatpush1.msra.mxu0 %v2517
    %2520 = vmatprep.subr.mxu0 0.0
    %2521 = vmatpush1.msra.mxu0 0.0
    %2522 = vmatprep.subr.mxu0 0.0
    %2523 = vmatpush1.msra.mxu0 0.0
    %2524 = vmatprep.subr.mxu0 0.0
    %2525 = vmatpush1.msra.mxu0 0.0
    %2526 = vmatprep.subr.mxu0 0.0
    %2527 = vmatpush1.msra.mxu0 0.0
    %2528 = vmatprep.subr.mxu0 0.0
    %2529 = vmatpush1.msra.mxu0 0.0
    %2530 = vmatprep.subr.mxu0 0.0
    %2531 = vmatpush1.msra.mxu0 0.0
    %2532 = vmatprep.subr.mxu0 0.0
    %2533 = vmatpush1.msra.mxu0 0.0
    %2534 = vmatprep.subr.mxu0 0.0
    %2535 = vmatpush1.msra.mxu0 0.0
    %2536 = vmatprep.subr.mxu0 0.0
    %2537 = vmatpush1.msra.mxu0 0.0
    %2538 = vmatprep.subr.mxu0 0.0
    %2539 = vmatpush1.msra.mxu0 0.0
    %2540 = vmatprep.subr.mxu0 0.0
    %2541 = vmatpush1.msra.mxu0 0.0
    %2542 = vmatprep.subr.mxu0 0.0
    %2543 = vmatpush1.msra.mxu0 0.0
    %2544 = vmatprep.subr.mxu0 0.0
    %2545 = vmatpush1.msra.mxu0 0.0
    %2546 = vmatprep.subr.mxu0 0.0
    %2547 = vmatpush1.msra.mxu0 0.0
    %2548 = vmatprep.subr.mxu0 0.0
    %2549 = vmatpush1.msra.mxu0 0.0
    %2550 = vmatprep.subr.mxu0 0.0
    %2551 = vmatpush1.msra.mxu0 0.0
    %2552 = vmatprep.subr.mxu0 0.0
    %2553 = vmatpush1.msra.mxu0 0.0
    %2554 = vmatprep.subr.mxu0 0.0
    %2555 = vmatpush1.msra.mxu0 0.0
    %2556 = vmatprep.subr.mxu0 0.0
    %2557 = vmatpush1.msra.mxu0 0.0
    %2558 = vmatprep.subr.mxu0 0.0
    %2559 = vmatpush1.msra.mxu0 0.0
    %2560 = vmatprep.subr.mxu0 0.0
    %2561 = vmatpush1.msra.mxu0 0.0
    %2562 = vmatprep.subr.mxu0 0.0
    %2563 = vmatpush1.msra.mxu0 0.0
    %2564 = vmatprep.subr.mxu0 0.0
    %2565 = vmatpush1.msra.mxu0 0.0
    %2566 = vmatprep.subr.mxu0 0.0
    %2567 = vmatpush1.msra.mxu0 0.0
    %2568 = vmatprep.subr.mxu0 0.0
    %2569 = vmatpush1.msra.mxu0 0.0
    %2570 = vmatprep.subr.mxu0 0.0
    %2571 = vmatpush1.msra.mxu0 0.0
    %2572 = vmatprep.subr.mxu0 0.0
    %2573 = vmatpush1.msra.mxu0 0.0
    %2574 = vmatprep.subr.mxu0 0.0
    %2575 = vmatpush1.msra.mxu0 0.0
    %2576 = vmatprep.subr.mxu0 0.0
    %2577 = vmatpush1.msra.mxu0 0.0
    %2578 = vmatprep.subr.mxu0 0.0
    %2579 = vmatpush1.msra.mxu0 0.0
    %2580 = vmatprep.subr.mxu0 0.0
    %2581 = vmatpush1.msra.mxu0 0.0
    %2582 = vmatprep.mubr.f32.mxu0 0.0
    %2583 = vmatmul.mubr.f32.gmra.mrb[0].mxu0 %v2380
    %v2584 = vpop.f32.mrb[0].mxu0
    %v2585 = vadd.f32 0.0, %v2584
    %v2586 = vpop.f32.mrb[0].mxu0
    %2587 = vmatprep.mubr.f32.mxu0 0.0
    %2588 = vmatmul.mubr.f32.gmra.mrb[0].mxu0 %v2383
    %v2589 = vpop.f32.mrb[0].mxu0
    %v2590 = vadd.f32 0.0, %v2589
    %v2591 = vpop.f32.mrb[0].mxu0
    %2592 = vmatprep.mubr.f32.mxu0 0.0
    %2593 = vmatmul.mubr.f32.gmra.mrb[0].mxu0 %v2386
    %v2594 = vpop.f32.mrb[0].mxu0
    %v2595 = vadd.f32 0.0, %v2594
    %v2596 = vpop.f32.mrb[0].mxu0
    %2597 = vmatprep.mubr.f32.mxu0 0.0
    %2598 = vmatmul.mubr.f32.gmra.mrb[0].mxu0 %v2389
    %v2599 = vpop.f32.mrb[0].mxu0
    %v2600 = vadd.f32 0.0, %v2599
    %v2601 = vpop.f32.mrb[0].mxu0
    %2602 = vmatprep.mubr.f32.mxu0 0.0
    %2603 = vmatmul.mubr.f32.gmra.mrb[0].mxu0 %v2392
    %v2604 = vpop.f32.mrb[0].mxu0
    %v2605 = vadd.f32 0.0, %v2604
    %v2606 = vpop.f32.mrb[0].mxu0
    %2607 = vmatprep.mubr.f32.mxu0 0.0
    %2608 = vmatmul.mubr.f32.gmra.mrb[0].mxu0 %v2395
    %v2609 = vpop.f32.mrb[0].mxu0
    %v2610 = vadd.f32 0.0, %v2609
    %v2611 = vpop.f32.mrb[0].mxu0
    %2612 = vmatprep.mubr.f32.mxu0 0.0
    %2613 = vmatmul.mubr.f32.gmra.mrb[0].mxu0 %v2398
    %v2614 = vpop.f32.mrb[0].mxu0
    %v2615 = vadd.f32 0.0, %v2614
    %v2616 = vpop.f32.mrb[0].mxu0
    %2617 = vmatprep.mubr.f32.mxu0 0.0
    %2618 = vmatmul.mubr.f32.gmra.mrb[0].mxu0 %v2401
    %v2619 = vpop.f32.mrb[0].mxu0
    %v2620 = vadd.f32 0.0, %v2619
    %v2621 = vpop.f32.mrb[0].mxu0
    %2622 = vdwg.mxu0
    %s2623 = scalar_lea.vmem %s12, 64
    %v2624 = vld [vmem:[%s2623] sm:$0xff]
    %v2625 = vld [vmem:[%s2623 + $0x8] sm:$0xff]
    %v2626 = vld [vmem:[%s2623 + $0x10] sm:$0xff]
    %v2627 = vld [vmem:[%s2623 + $0x18] sm:$0xff]
    %v2628 = vld [vmem:[%s2623 + $0x20] sm:$0xff]
    %v2629 = vld [vmem:[%s2623 + $0x28] sm:$0xff]
    %v2630 = vld [vmem:[%s2623 + $0x30] sm:$0xff]
    %v2631 = vld [vmem:[%s2623 + $0x38] sm:$0xff]
    %v2633 = vsel %vm403, %v2624, 0
    %v2636 = vsel %vm403, %v2625, 0
    %v2639 = vsel %vm403, %v2626, 0
    %v2642 = vsel %vm403, %v2627, 0
    %v2645 = vsel %vm403, %v2628, 0
    %v2648 = vsel %vm403, %v2629, 0
    %v2651 = vsel %vm403, %v2630, 0
    %v2654 = vsel %vm403, %v2631, 0
    %2656 = vmatprep.subr.mxu0 0.0
    %2657 = vmatpush1.msra.mxu0 %v2585
    %2658 = vmatprep.subr.mxu0 0.0
    %2659 = vmatpush1.msra.mxu0 %v2590
    %2660 = vmatprep.subr.mxu0 0.0
    %2661 = vmatpush1.msra.mxu0 %v2595
    %2662 = vmatprep.subr.mxu0 0.0
    %2663 = vmatpush1.msra.mxu0 %v2600
    %2664 = vmatprep.subr.mxu0 0.0
    %2665 = vmatpush1.msra.mxu0 %v2605
    %2666 = vmatprep.subr.mxu0 0.0
    %2667 = vmatpush1.msra.mxu0 %v2610
    %2668 = vmatprep.subr.mxu0 0.0
    %2669 = vmatpush1.msra.mxu0 %v2615
    %2670 = vmatprep.subr.mxu0 0.0
    %2671 = vmatpush1.msra.mxu0 %v2620
    %2672 = vmatprep.subr.mxu0 0.0
    %2673 = vmatpush1.msra.mxu0 0.0
    %2674 = vmatprep.subr.mxu0 0.0
    %2675 = vmatpush1.msra.mxu0 0.0
    %2676 = vmatprep.subr.mxu0 0.0
    %2677 = vmatpush1.msra.mxu0 0.0
    %2678 = vmatprep.subr.mxu0 0.0
    %2679 = vmatpush1.msra.mxu0 0.0
    %2680 = vmatprep.subr.mxu0 0.0
    %2681 = vmatpush1.msra.mxu0 0.0
    %2682 = vmatprep.subr.mxu0 0.0
    %2683 = vmatpush1.msra.mxu0 0.0
    %2684 = vmatprep.subr.mxu0 0.0
    %2685 = vmatpush1.msra.mxu0 0.0
    %2686 = vmatprep.subr.mxu0 0.0
    %2687 = vmatpush1.msra.mxu0 0.0
    %2688 = vmatprep.subr.mxu0 0.0
    %2689 = vmatpush1.msra.mxu0 0.0
    %2690 = vmatprep.subr.mxu0 0.0
    %2691 = vmatpush1.msra.mxu0 0.0
    %2692 = vmatprep.subr.mxu0 0.0
    %2693 = vmatpush1.msra.mxu0 0.0
    %2694 = vmatprep.subr.mxu0 0.0
    %2695 = vmatpush1.msra.mxu0 0.0
    %2696 = vmatprep.subr.mxu0 0.0
    %2697 = vmatpush1.msra.mxu0 0.0
    %2698 = vmatprep.subr.mxu0 0.0
    %2699 = vmatpush1.msra.mxu0 0.0
    %2700 = vmatprep.subr.mxu0 0.0
    %2701 = vmatpush1.msra.mxu0 0.0
    %2702 = vmatprep.subr.mxu0 0.0
    %2703 = vmatpush1.msra.mxu0 0.0
    %2704 = vmatprep.subr.mxu0 0.0
    %2705 = vmatpush1.msra.mxu0 0.0
    %2706 = vmatprep.subr.mxu0 0.0
    %2707 = vmatpush1.msra.mxu0 0.0
    %2708 = vmatprep.subr.mxu0 0.0
    %2709 = vmatpush1.msra.mxu0 0.0
    %2710 = vmatprep.subr.mxu0 0.0
    %2711 = vmatpush1.msra.mxu0 0.0
    %2712 = vmatprep.subr.mxu0 0.0
    %2713 = vmatpush1.msra.mxu0 0.0
    %2714 = vmatprep.subr.mxu0 0.0
    %2715 = vmatpush1.msra.mxu0 0.0
    %2716 = vmatprep.subr.mxu0 0.0
    %2717 = vmatpush1.msra.mxu0 0.0
    %2718 = vmatprep.subr.mxu0 0.0
    %2719 = vmatpush1.msra.mxu0 0.0
    %2720 = vmatprep.mubr.f32.mxu0 0.0
    %2721 = vmatmul.mubr.f32.gmra.mrb[0].mxu0 %v2633
    %v2722 = vpop.f32.mrb[0].mxu0
    %v2723 = vadd.f32 0.0, %v2722
    %v2724 = vpop.f32.mrb[0].mxu0
    %2725 = vmatprep.mubr.f32.mxu0 0.0
    %2726 = vmatmul.mubr.f32.gmra.mrb[0].mxu0 %v2636
    %v2727 = vpop.f32.mrb[0].mxu0
    %v2728 = vadd.f32 0.0, %v2727
    %v2729 = vpop.f32.mrb[0].mxu0
    %2730 = vmatprep.mubr.f32.mxu0 0.0
    %2731 = vmatmul.mubr.f32.gmra.mrb[0].mxu0 %v2639
    %v2732 = vpop.f32.mrb[0].mxu0
    %v2733 = vadd.f32 0.0, %v2732
    %v2734 = vpop.f32.mrb[0].mxu0
    %2735 = vmatprep.mubr.f32.mxu0 0.0
    %2736 = vmatmul.mubr.f32.gmra.mrb[0].mxu0 %v2642
    %v2737 = vpop.f32.mrb[0].mxu0
    %v2738 = vadd.f32 0.0, %v2737
    %v2739 = vpop.f32.mrb[0].mxu0
    %2740 = vmatprep.mubr.f32.mxu0 0.0
    %2741 = vmatmul.mubr.f32.gmra.mrb[0].mxu0 %v2645
    %v2742 = vpop.f32.mrb[0].mxu0
    %v2743 = vadd.f32 0.0, %v2742
    %v2744 = vpop.f32.mrb[0].mxu0
    %2745 = vmatprep.mubr.f32.mxu0 0.0
    %2746 = vmatmul.mubr.f32.gmra.mrb[0].mxu0 %v2648
    %v2747 = vpop.f32.mrb[0].mxu0
    %v2748 = vadd.f32 0.0, %v2747
    %v2749 = vpop.f32.mrb[0].mxu0
    %2750 = vmatprep.mubr.f32.mxu0 0.0
    %2751 = vmatmul.mubr.f32.gmra.mrb[0].mxu0 %v2651
    %v2752 = vpop.f32.mrb[0].mxu0
    %v2753 = vadd.f32 0.0, %v2752
    %v2754 = vpop.f32.mrb[0].mxu0
    %2755 = vmatprep.mubr.f32.mxu0 0.0
    %2756 = vmatmul.mubr.f32.gmra.mrb[0].mxu0 %v2654
    %v2757 = vpop.f32.mrb[0].mxu0
    %v2758 = vadd.f32 0.0, %v2757
    %v2759 = vpop.f32.mrb[0].mxu0
    %2760 = vdwg.mxu0
    %v2762 = vsel %vm403, %v2508, 0
    %v2765 = vsel %vm403, %v2509, 0
    %v2768 = vsel %vm403, %v2510, 0
    %v2771 = vsel %vm403, %v2511, 0
    %v2774 = vsel %vm403, %v2512, 0
    %v2777 = vsel %vm403, %v2513, 0
    %v2780 = vsel %vm403, %v2514, 0
    %v2783 = vsel %vm403, %v2515, 0
    %2785 = vmatprep.subr.mxu0 0.0
    %2786 = vmatpush1.msra.mxu0 %v2470
    %2787 = vmatprep.subr.mxu0 0.0
    %2788 = vmatpush1.msra.mxu0 %v2475
    %2789 = vmatprep.subr.mxu0 0.0
    %2790 = vmatpush1.msra.mxu0 %v2480
    %2791 = vmatprep.subr.mxu0 0.0
    %2792 = vmatpush1.msra.mxu0 %v2485
    %2793 = vmatprep.subr.mxu0 0.0
    %2794 = vmatpush1.msra.mxu0 %v2490
    %2795 = vmatprep.subr.mxu0 0.0
    %2796 = vmatpush1.msra.mxu0 %v2495
    %2797 = vmatprep.subr.mxu0 0.0
    %2798 = vmatpush1.msra.mxu0 %v2500
    %2799 = vmatprep.subr.mxu0 0.0
    %2800 = vmatpush1.msra.mxu0 %v2505
    %2801 = vmatprep.subr.mxu0 0.0
    %2802 = vmatpush1.msra.mxu0 0.0
    %2803 = vmatprep.subr.mxu0 0.0
    %2804 = vmatpush1.msra.mxu0 0.0
    %2805 = vmatprep.subr.mxu0 0.0
    %2806 = vmatpush1.msra.mxu0 0.0
    %2807 = vmatprep.subr.mxu0 0.0
    %2808 = vmatpush1.msra.mxu0 0.0
    %2809 = vmatprep.subr.mxu0 0.0
    %2810 = vmatpush1.msra.mxu0 0.0
    %2811 = vmatprep.subr.mxu0 0.0
    %2812 = vmatpush1.msra.mxu0 0.0
    %2813 = vmatprep.subr.mxu0 0.0
    %2814 = vmatpush1.msra.mxu0 0.0
    %2815 = vmatprep.subr.mxu0 0.0
    %2816 = vmatpush1.msra.mxu0 0.0
    %2817 = vmatprep.subr.mxu0 0.0
    %2818 = vmatpush1.msra.mxu0 0.0
    %2819 = vmatprep.subr.mxu0 0.0
    %2820 = vmatpush1.msra.mxu0 0.0
    %2821 = vmatprep.subr.mxu0 0.0
    %2822 = vmatpush1.msra.mxu0 0.0
    %2823 = vmatprep.subr.mxu0 0.0
    %2824 = vmatpush1.msra.mxu0 0.0
    %2825 = vmatprep.subr.mxu0 0.0
    %2826 = vmatpush1.msra.mxu0 0.0
    %2827 = vmatprep.subr.mxu0 0.0
    %2828 = vmatpush1.msra.mxu0 0.0
    %2829 = vmatprep.subr.mxu0 0.0
    %2830 = vmatpush1.msra.mxu0 0.0
    %2831 = vmatprep.subr.mxu0 0.0
    %2832 = vmatpush1.msra.mxu0 0.0
    %2833 = vmatprep.subr.mxu0 0.0
    %2834 = vmatpush1.msra.mxu0 0.0
    %2835 = vmatprep.subr.mxu0 0.0
    %2836 = vmatpush1.msra.mxu0 0.0
    %2837 = vmatprep.subr.mxu0 0.0
    %2838 = vmatpush1.msra.mxu0 0.0
    %2839 = vmatprep.subr.mxu0 0.0
    %2840 = vmatpush1.msra.mxu0 0.0
    %2841 = vmatprep.subr.mxu0 0.0
    %2842 = vmatpush1.msra.mxu0 0.0
    %2843 = vmatprep.subr.mxu0 0.0
    %2844 = vmatpush1.msra.mxu0 0.0
    %2845 = vmatprep.subr.mxu0 0.0
    %2846 = vmatpush1.msra.mxu0 0.0
    %2847 = vmatprep.subr.mxu0 0.0
    %2848 = vmatpush1.msra.mxu0 0.0
    %2849 = vmatprep.mubr.f32.mxu0 0.0
    %2850 = vmatmul.mubr.f32.gmra.mrb[0].mxu0 %v2762
    %v2851 = vpop.f32.mrb[0].mxu0
    %v2852 = vadd.f32 %v2723, %v2851
    %v2853 = vpop.f32.mrb[0].mxu0
    %2854 = vmatprep.mubr.f32.mxu0 0.0
    %2855 = vmatmul.mubr.f32.gmra.mrb[0].mxu0 %v2765
    %v2856 = vpop.f32.mrb[0].mxu0
    %v2857 = vadd.f32 %v2728, %v2856
    %v2858 = vpop.f32.mrb[0].mxu0
    %2859 = vmatprep.mubr.f32.mxu0 0.0
    %2860 = vmatmul.mubr.f32.gmra.mrb[0].mxu0 %v2768
    %v2861 = vpop.f32.mrb[0].mxu0
    %v2862 = vadd.f32 %v2733, %v2861
    %v2863 = vpop.f32.mrb[0].mxu0
    %2864 = vmatprep.mubr.f32.mxu0 0.0
    %2865 = vmatmul.mubr.f32.gmra.mrb[0].mxu0 %v2771
    %v2866 = vpop.f32.mrb[0].mxu0
    %v2867 = vadd.f32 %v2738, %v2866
    %v2868 = vpop.f32.mrb[0].mxu0
    %2869 = vmatprep.mubr.f32.mxu0 0.0
    %2870 = vmatmul.mubr.f32.gmra.mrb[0].mxu0 %v2774
    %v2871 = vpop.f32.mrb[0].mxu0
    %v2872 = vadd.f32 %v2743, %v2871
    %v2873 = vpop.f32.mrb[0].mxu0
    %2874 = vmatprep.mubr.f32.mxu0 0.0
    %2875 = vmatmul.mubr.f32.gmra.mrb[0].mxu0 %v2777
    %v2876 = vpop.f32.mrb[0].mxu0
    %v2877 = vadd.f32 %v2748, %v2876
    %v2878 = vpop.f32.mrb[0].mxu0
    %2879 = vmatprep.mubr.f32.mxu0 0.0
    %2880 = vmatmul.mubr.f32.gmra.mrb[0].mxu0 %v2780
    %v2881 = vpop.f32.mrb[0].mxu0
    %v2882 = vadd.f32 %v2753, %v2881
    %v2883 = vpop.f32.mrb[0].mxu0
    %2884 = vmatprep.mubr.f32.mxu0 0.0
    %2885 = vmatmul.mubr.f32.gmra.mrb[0].mxu0 %v2783
    %v2886 = vpop.f32.mrb[0].mxu0
    %v2887 = vadd.f32 %v2758, %v2886
    %v2888 = vpop.f32.mrb[0].mxu0
    %2889 = vdwg.mxu0
    %s2890 = scalar_lea.vmem [#allocation11], 16
    %v2891 = vld [vmem:[%s2890] sm:$0xff]
    %2892 = vmatprep.subr.mxu0 0.0
    %2893 = vmatpush1.msra.mxu0 %v2891
    %2894 = vmatprep.subr.mxu0 0.0
    %2895 = vmatpush1.msra.mxu0 0.0
    %2896 = vmatprep.subr.mxu0 0.0
    %2897 = vmatpush1.msra.mxu0 0.0
    %2898 = vmatprep.subr.mxu0 0.0
    %2899 = vmatpush1.msra.mxu0 0.0
    %2900 = vmatprep.subr.mxu0 0.0
    %2901 = vmatpush1.msra.mxu0 0.0
    %2902 = vmatprep.subr.mxu0 0.0
    %2903 = vmatpush1.msra.mxu0 0.0
    %2904 = vmatprep.subr.mxu0 0.0
    %2905 = vmatpush1.msra.mxu0 0.0
    %2906 = vmatprep.subr.mxu0 0.0
    %2907 = vmatpush1.msra.mxu0 0.0
    %2908 = vmatprep.subr.mxu0 0.0
    %2909 = vmatpush1.msra.mxu0 0.0
    %2910 = vmatprep.subr.mxu0 0.0
    %2911 = vmatpush1.msra.mxu0 0.0
    %2912 = vmatprep.subr.mxu0 0.0
    %2913 = vmatpush1.msra.mxu0 0.0
    %2914 = vmatprep.subr.mxu0 0.0
    %2915 = vmatpush1.msra.mxu0 0.0
    %2916 = vmatprep.subr.mxu0 0.0
    %2917 = vmatpush1.msra.mxu0 0.0
    %2918 = vmatprep.subr.mxu0 0.0
    %2919 = vmatpush1.msra.mxu0 0.0
    %2920 = vmatprep.subr.mxu0 0.0
    %2921 = vmatpush1.msra.mxu0 0.0
    %2922 = vmatprep.subr.mxu0 0.0
    %2923 = vmatpush1.msra.mxu0 0.0
    %2924 = vmatprep.subr.mxu0 0.0
    %2925 = vmatpush1.msra.mxu0 0.0
    %2926 = vmatprep.subr.mxu0 0.0
    %2927 = vmatpush1.msra.mxu0 0.0
    %2928 = vmatprep.subr.mxu0 0.0
    %2929 = vmatpush1.msra.mxu0 0.0
    %2930 = vmatprep.subr.mxu0 0.0
    %2931 = vmatpush1.msra.mxu0 0.0
    %2932 = vmatprep.subr.mxu0 0.0
    %2933 = vmatpush1.msra.mxu0 0.0
    %2934 = vmatprep.subr.mxu0 0.0
    %2935 = vmatpush1.msra.mxu0 0.0
    %2936 = vmatprep.subr.mxu0 0.0
    %2937 = vmatpush1.msra.mxu0 0.0
    %2938 = vmatprep.subr.mxu0 0.0
    %2939 = vmatpush1.msra.mxu0 0.0
    %2940 = vmatprep.subr.mxu0 0.0
    %2941 = vmatpush1.msra.mxu0 0.0
    %2942 = vmatprep.subr.mxu0 0.0
    %2943 = vmatpush1.msra.mxu0 0.0
    %2944 = vmatprep.subr.mxu0 0.0
    %2945 = vmatpush1.msra.mxu0 0.0
    %2946 = vmatprep.subr.mxu0 0.0
    %2947 = vmatpush1.msra.mxu0 0.0
    %2948 = vmatprep.subr.mxu0 0.0
    %2949 = vmatpush1.msra.mxu0 0.0
    %2950 = vmatprep.subr.mxu0 0.0
    %2951 = vmatpush1.msra.mxu0 0.0
    %2952 = vmatprep.subr.mxu0 0.0
    %2953 = vmatpush1.msra.mxu0 0.0
    %2954 = vmatprep.subr.mxu0 0.0
    %2955 = vmatpush1.msra.mxu0 0.0
    %2956 = vmatprep.mubr.f32.mxu0 0.0
    %2957 = vmatmul.mubr.f32.gmra.mrb[0].mxu0 %v2380
    %v2958 = vpop.f32.mrb[0].mxu0
    %v2959 = vadd.f32 0.0, %v2958
    %v2960 = vpop.f32.mrb[0].mxu0
    %2961 = vmatprep.mubr.f32.mxu0 0.0
    %2962 = vmatmul.mubr.f32.gmra.mrb[0].mxu0 %v2383
    %v2963 = vpop.f32.mrb[0].mxu0
    %v2964 = vadd.f32 0.0, %v2963
    %v2965 = vpop.f32.mrb[0].mxu0
    %2966 = vmatprep.mubr.f32.mxu0 0.0
    %2967 = vmatmul.mubr.f32.gmra.mrb[0].mxu0 %v2386
    %v2968 = vpop.f32.mrb[0].mxu0
    %v2969 = vadd.f32 0.0, %v2968
    %v2970 = vpop.f32.mrb[0].mxu0
    %2971 = vmatprep.mubr.f32.mxu0 0.0
    %2972 = vmatmul.mubr.f32.gmra.mrb[0].mxu0 %v2389
    %v2973 = vpop.f32.mrb[0].mxu0
    %v2974 = vadd.f32 0.0, %v2973
    %v2975 = vpop.f32.mrb[0].mxu0
    %2976 = vmatprep.mubr.f32.mxu0 0.0
    %2977 = vmatmul.mubr.f32.gmra.mrb[0].mxu0 %v2392
    %v2978 = vpop.f32.mrb[0].mxu0
    %v2979 = vadd.f32 0.0, %v2978
    %v2980 = vpop.f32.mrb[0].mxu0
    %2981 = vmatprep.mubr.f32.mxu0 0.0
    %2982 = vmatmul.mubr.f32.gmra.mrb[0].mxu0 %v2395
    %v2983 = vpop.f32.mrb[0].mxu0
    %v2984 = vadd.f32 0.0, %v2983
    %v2985 = vpop.f32.mrb[0].mxu0
    %2986 = vmatprep.mubr.f32.mxu0 0.0
    %2987 = vmatmul.mubr.f32.gmra.mrb[0].mxu0 %v2398
    %v2988 = vpop.f32.mrb[0].mxu0
    %v2989 = vadd.f32 0.0, %v2988
    %v2990 = vpop.f32.mrb[0].mxu0
    %2991 = vmatprep.mubr.f32.mxu0 0.0
    %2992 = vmatmul.mubr.f32.gmra.mrb[0].mxu0 %v2401
    %v2993 = vpop.f32.mrb[0].mxu0
    %v2994 = vadd.f32 0.0, %v2993
    %v2995 = vpop.f32.mrb[0].mxu0
    %2996 = vdwg.mxu0
    %s2997 = scalar_lea.vmem %s12, 128
    %v2998 = vld [vmem:[%s2997] sm:$0xff]
    %v2999 = vld [vmem:[%s2997 + $0x8] sm:$0xff]
    %v3000 = vld [vmem:[%s2997 + $0x10] sm:$0xff]
    %v3001 = vld [vmem:[%s2997 + $0x18] sm:$0xff]
    %v3002 = vld [vmem:[%s2997 + $0x20] sm:$0xff]
    %v3003 = vld [vmem:[%s2997 + $0x28] sm:$0xff]
    %v3004 = vld [vmem:[%s2997 + $0x30] sm:$0xff]
    %v3005 = vld [vmem:[%s2997 + $0x38] sm:$0xff]
    %v3007 = vsel %vm403, %v2998, 0
    %v3010 = vsel %vm403, %v2999, 0
    %v3013 = vsel %vm403, %v3000, 0
    %v3016 = vsel %vm403, %v3001, 0
    %v3019 = vsel %vm403, %v3002, 0
    %v3022 = vsel %vm403, %v3003, 0
    %v3025 = vsel %vm403, %v3004, 0
    %v3028 = vsel %vm403, %v3005, 0
    %3030 = vmatprep.subr.mxu0 0.0
    %3031 = vmatpush1.msra.mxu0 %v2959
    %3032 = vmatprep.subr.mxu0 0.0
    %3033 = vmatpush1.msra.mxu0 %v2964
    %3034 = vmatprep.subr.mxu0 0.0
    %3035 = vmatpush1.msra.mxu0 %v2969
    %3036 = vmatprep.subr.mxu0 0.0
    %3037 = vmatpush1.msra.mxu0 %v2974
    %3038 = vmatprep.subr.mxu0 0.0
    %3039 = vmatpush1.msra.mxu0 %v2979
    %3040 = vmatprep.subr.mxu0 0.0
    %3041 = vmatpush1.msra.mxu0 %v2984
    %3042 = vmatprep.subr.mxu0 0.0
    %3043 = vmatpush1.msra.mxu0 %v2989
    %3044 = vmatprep.subr.mxu0 0.0
    %3045 = vmatpush1.msra.mxu0 %v2994
    %3046 = vmatprep.subr.mxu0 0.0
    %3047 = vmatpush1.msra.mxu0 0.0
    %3048 = vmatprep.subr.mxu0 0.0
    %3049 = vmatpush1.msra.mxu0 0.0
    %3050 = vmatprep.subr.mxu0 0.0
    %3051 = vmatpush1.msra.mxu0 0.0
    %3052 = vmatprep.subr.mxu0 0.0
    %3053 = vmatpush1.msra.mxu0 0.0
    %3054 = vmatprep.subr.mxu0 0.0
    %3055 = vmatpush1.msra.mxu0 0.0
    %3056 = vmatprep.subr.mxu0 0.0
    %3057 = vmatpush1.msra.mxu0 0.0
    %3058 = vmatprep.subr.mxu0 0.0
    %3059 = vmatpush1.msra.mxu0 0.0
    %3060 = vmatprep.subr.mxu0 0.0
    %3061 = vmatpush1.msra.mxu0 0.0
    %3062 = vmatprep.subr.mxu0 0.0
    %3063 = vmatpush1.msra.mxu0 0.0
    %3064 = vmatprep.subr.mxu0 0.0
    %3065 = vmatpush1.msra.mxu0 0.0
    %3066 = vmatprep.subr.mxu0 0.0
    %3067 = vmatpush1.msra.mxu0 0.0
    %3068 = vmatprep.subr.mxu0 0.0
    %3069 = vmatpush1.msra.mxu0 0.0
    %3070 = vmatprep.subr.mxu0 0.0
    %3071 = vmatpush1.msra.mxu0 0.0
    %3072 = vmatprep.subr.mxu0 0.0
    %3073 = vmatpush1.msra.mxu0 0.0
    %3074 = vmatprep.subr.mxu0 0.0
    %3075 = vmatpush1.msra.mxu0 0.0
    %3076 = vmatprep.subr.mxu0 0.0
    %3077 = vmatpush1.msra.mxu0 0.0
    %3078 = vmatprep.subr.mxu0 0.0
    %3079 = vmatpush1.msra.mxu0 0.0
    %3080 = vmatprep.subr.mxu0 0.0
    %3081 = vmatpush1.msra.mxu0 0.0
    %3082 = vmatprep.subr.mxu0 0.0
    %3083 = vmatpush1.msra.mxu0 0.0
    %3084 = vmatprep.subr.mxu0 0.0
    %3085 = vmatpush1.msra.mxu0 0.0
    %3086 = vmatprep.subr.mxu0 0.0
    %3087 = vmatpush1.msra.mxu0 0.0
    %3088 = vmatprep.subr.mxu0 0.0
    %3089 = vmatpush1.msra.mxu0 0.0
    %3090 = vmatprep.subr.mxu0 0.0
    %3091 = vmatpush1.msra.mxu0 0.0
    %3092 = vmatprep.subr.mxu0 0.0
    %3093 = vmatpush1.msra.mxu0 0.0
    %3094 = vmatprep.mubr.f32.mxu0 0.0
    %3095 = vmatmul.mubr.f32.gmra.mrb[0].mxu0 %v3007
    %v3096 = vpop.f32.mrb[0].mxu0
    %v3097 = vadd.f32 0.0, %v3096
    %v3098 = vpop.f32.mrb[0].mxu0
    %3099 = vmatprep.mubr.f32.mxu0 0.0
    %3100 = vmatmul.mubr.f32.gmra.mrb[0].mxu0 %v3010
    %v3101 = vpop.f32.mrb[0].mxu0
    %v3102 = vadd.f32 0.0, %v3101
    %v3103 = vpop.f32.mrb[0].mxu0
    %3104 = vmatprep.mubr.f32.mxu0 0.0
    %3105 = vmatmul.mubr.f32.gmra.mrb[0].mxu0 %v3013
    %v3106 = vpop.f32.mrb[0].mxu0
    %v3107 = vadd.f32 0.0, %v3106
    %v3108 = vpop.f32.mrb[0].mxu0
    %3109 = vmatprep.mubr.f32.mxu0 0.0
    %3110 = vmatmul.mubr.f32.gmra.mrb[0].mxu0 %v3016
    %v3111 = vpop.f32.mrb[0].mxu0
    %v3112 = vadd.f32 0.0, %v3111
    %v3113 = vpop.f32.mrb[0].mxu0
    %3114 = vmatprep.mubr.f32.mxu0 0.0
    %3115 = vmatmul.mubr.f32.gmra.mrb[0].mxu0 %v3019
    %v3116 = vpop.f32.mrb[0].mxu0
    %v3117 = vadd.f32 0.0, %v3116
    %v3118 = vpop.f32.mrb[0].mxu0
    %3119 = vmatprep.mubr.f32.mxu0 0.0
    %3120 = vmatmul.mubr.f32.gmra.mrb[0].mxu0 %v3022
    %v3121 = vpop.f32.mrb[0].mxu0
    %v3122 = vadd.f32 0.0, %v3121
    %v3123 = vpop.f32.mrb[0].mxu0
    %3124 = vmatprep.mubr.f32.mxu0 0.0
    %3125 = vmatmul.mubr.f32.gmra.mrb[0].mxu0 %v3025
    %v3126 = vpop.f32.mrb[0].mxu0
    %v3127 = vadd.f32 0.0, %v3126
    %v3128 = vpop.f32.mrb[0].mxu0
    %3129 = vmatprep.mubr.f32.mxu0 0.0
    %3130 = vmatmul.mubr.f32.gmra.mrb[0].mxu0 %v3028
    %v3131 = vpop.f32.mrb[0].mxu0
    %v3132 = vadd.f32 0.0, %v3131
    %v3133 = vpop.f32.mrb[0].mxu0
    %3134 = vdwg.mxu0
    %v3135 = vadd.f32 %v2852, %v3097
    %v3136 = vadd.f32 %v2857, %v3102
    %v3137 = vadd.f32 %v2862, %v3107
    %v3138 = vadd.f32 %v2867, %v3112
    %v3139 = vadd.f32 %v2872, %v3117
    %v3140 = vadd.f32 %v2877, %v3122
    %v3141 = vadd.f32 %v2882, %v3127
    %v3142 = vadd.f32 %v2887, %v3132
    %s3143 = scalar_lea.vmem [#allocation11], 24
    %v3144 = vld [vmem:[%s3143] sm:$0xff]
    %3145 = vmatprep.subr.mxu0 0.0
    %3146 = vmatpush1.msra.mxu0 %v3144
    %3147 = vmatprep.subr.mxu0 0.0
    %3148 = vmatpush1.msra.mxu0 0.0
    %3149 = vmatprep.subr.mxu0 0.0
    %3150 = vmatpush1.msra.mxu0 0.0
    %3151 = vmatprep.subr.mxu0 0.0
    %3152 = vmatpush1.msra.mxu0 0.0
    %3153 = vmatprep.subr.mxu0 0.0
    %3154 = vmatpush1.msra.mxu0 0.0
    %3155 = vmatprep.subr.mxu0 0.0
    %3156 = vmatpush1.msra.mxu0 0.0
    %3157 = vmatprep.subr.mxu0 0.0
    %3158 = vmatpush1.msra.mxu0 0.0
    %3159 = vmatprep.subr.mxu0 0.0
    %3160 = vmatpush1.msra.mxu0 0.0
    %3161 = vmatprep.subr.mxu0 0.0
    %3162 = vmatpush1.msra.mxu0 0.0
    %3163 = vmatprep.subr.mxu0 0.0
    %3164 = vmatpush1.msra.mxu0 0.0
    %3165 = vmatprep.subr.mxu0 0.0
    %3166 = vmatpush1.msra.mxu0 0.0
    %3167 = vmatprep.subr.mxu0 0.0
    %3168 = vmatpush1.msra.mxu0 0.0
    %3169 = vmatprep.subr.mxu0 0.0
    %3170 = vmatpush1.msra.mxu0 0.0
    %3171 = vmatprep.subr.mxu0 0.0
    %3172 = vmatpush1.msra.mxu0 0.0
    %3173 = vmatprep.subr.mxu0 0.0
    %3174 = vmatpush1.msra.mxu0 0.0
    %3175 = vmatprep.subr.mxu0 0.0
    %3176 = vmatpush1.msra.mxu0 0.0
    %3177 = vmatprep.subr.mxu0 0.0
    %3178 = vmatpush1.msra.mxu0 0.0
    %3179 = vmatprep.subr.mxu0 0.0
    %3180 = vmatpush1.msra.mxu0 0.0
    %3181 = vmatprep.subr.mxu0 0.0
    %3182 = vmatpush1.msra.mxu0 0.0
    %3183 = vmatprep.subr.mxu0 0.0
    %3184 = vmatpush1.msra.mxu0 0.0
    %3185 = vmatprep.subr.mxu0 0.0
    %3186 = vmatpush1.msra.mxu0 0.0
    %3187 = vmatprep.subr.mxu0 0.0
    %3188 = vmatpush1.msra.mxu0 0.0
    %3189 = vmatprep.subr.mxu0 0.0
    %3190 = vmatpush1.msra.mxu0 0.0
    %3191 = vmatprep.subr.mxu0 0.0
    %3192 = vmatpush1.msra.mxu0 0.0
    %3193 = vmatprep.subr.mxu0 0.0
    %3194 = vmatpush1.msra.mxu0 0.0
    %3195 = vmatprep.subr.mxu0 0.0
    %3196 = vmatpush1.msra.mxu0 0.0
    %3197 = vmatprep.subr.mxu0 0.0
    %3198 = vmatpush1.msra.mxu0 0.0
    %3199 = vmatprep.subr.mxu0 0.0
    %3200 = vmatpush1.msra.mxu0 0.0
    %3201 = vmatprep.subr.mxu0 0.0
    %3202 = vmatpush1.msra.mxu0 0.0
    %3203 = vmatprep.subr.mxu0 0.0
    %3204 = vmatpush1.msra.mxu0 0.0
    %3205 = vmatprep.subr.mxu0 0.0
    %3206 = vmatpush1.msra.mxu0 0.0
    %3207 = vmatprep.subr.mxu0 0.0
    %3208 = vmatpush1.msra.mxu0 0.0
    %3209 = vmatprep.mubr.f32.mxu0 0.0
    %3210 = vmatmul.mubr.f32.gmra.mrb[0].mxu0 %v2380
    %v3211 = vpop.f32.mrb[0].mxu0
    %v3212 = vadd.f32 0.0, %v3211
    %v3213 = vpop.f32.mrb[0].mxu0
    %3214 = vmatprep.mubr.f32.mxu0 0.0
    %3215 = vmatmul.mubr.f32.gmra.mrb[0].mxu0 %v2383
    %v3216 = vpop.f32.mrb[0].mxu0
    %v3217 = vadd.f32 0.0, %v3216
    %v3218 = vpop.f32.mrb[0].mxu0
    %3219 = vmatprep.mubr.f32.mxu0 0.0
    %3220 = vmatmul.mubr.f32.gmra.mrb[0].mxu0 %v2386
    %v3221 = vpop.f32.mrb[0].mxu0
    %v3222 = vadd.f32 0.0, %v3221
    %v3223 = vpop.f32.mrb[0].mxu0
    %3224 = vmatprep.mubr.f32.mxu0 0.0
    %3225 = vmatmul.mubr.f32.gmra.mrb[0].mxu0 %v2389
    %v3226 = vpop.f32.mrb[0].mxu0
    %v3227 = vadd.f32 0.0, %v3226
    %v3228 = vpop.f32.mrb[0].mxu0
    %3229 = vmatprep.mubr.f32.mxu0 0.0
    %3230 = vmatmul.mubr.f32.gmra.mrb[0].mxu0 %v2392
    %v3231 = vpop.f32.mrb[0].mxu0
    %v3232 = vadd.f32 0.0, %v3231
    %v3233 = vpop.f32.mrb[0].mxu0
    %3234 = vmatprep.mubr.f32.mxu0 0.0
    %3235 = vmatmul.mubr.f32.gmra.mrb[0].mxu0 %v2395
    %v3236 = vpop.f32.mrb[0].mxu0
    %v3237 = vadd.f32 0.0, %v3236
    %v3238 = vpop.f32.mrb[0].mxu0
    %3239 = vmatprep.mubr.f32.mxu0 0.0
    %3240 = vmatmul.mubr.f32.gmra.mrb[0].mxu0 %v2398
    %v3241 = vpop.f32.mrb[0].mxu0
    %v3242 = vadd.f32 0.0, %v3241
    %v3243 = vpop.f32.mrb[0].mxu0
    %3244 = vmatprep.mubr.f32.mxu0 0.0
    %3245 = vmatmul.mubr.f32.gmra.mrb[0].mxu0 %v2401
    %v3246 = vpop.f32.mrb[0].mxu0
    %v3247 = vadd.f32 0.0, %v3246
    %v3248 = vpop.f32.mrb[0].mxu0
    %3249 = vdwg.mxu0
    %s3250 = scalar_lea.vmem %s12, 192
    %v3251 = vld [vmem:[%s3250] sm:$0xff]
    %v3252 = vld [vmem:[%s3250 + $0x8] sm:$0xff]
    %v3253 = vld [vmem:[%s3250 + $0x10] sm:$0xff]
    %v3254 = vld [vmem:[%s3250 + $0x18] sm:$0xff]
    %v3255 = vld [vmem:[%s3250 + $0x20] sm:$0xff]
    %v3256 = vld [vmem:[%s3250 + $0x28] sm:$0xff]
    %v3257 = vld [vmem:[%s3250 + $0x30] sm:$0xff]
    %v3258 = vld [vmem:[%s3250 + $0x38] sm:$0xff]
    %v3260 = vsel %vm403, %v3251, 0
    %v3263 = vsel %vm403, %v3252, 0
    %v3266 = vsel %vm403, %v3253, 0
    %v3269 = vsel %vm403, %v3254, 0
    %v3272 = vsel %vm403, %v3255, 0
    %v3275 = vsel %vm403, %v3256, 0
    %v3278 = vsel %vm403, %v3257, 0
    %v3281 = vsel %vm403, %v3258, 0
    %3283 = vmatprep.subr.mxu0 0.0
    %3284 = vmatpush1.msra.mxu0 %v3212
    %3285 = vmatprep.subr.mxu0 0.0
    %3286 = vmatpush1.msra.mxu0 %v3217
    %3287 = vmatprep.subr.mxu0 0.0
    %3288 = vmatpush1.msra.mxu0 %v3222
    %3289 = vmatprep.subr.mxu0 0.0
    %3290 = vmatpush1.msra.mxu0 %v3227
    %3291 = vmatprep.subr.mxu0 0.0
    %3292 = vmatpush1.msra.mxu0 %v3232
    %3293 = vmatprep.subr.mxu0 0.0
    %3294 = vmatpush1.msra.mxu0 %v3237
    %3295 = vmatprep.subr.mxu0 0.0
    %3296 = vmatpush1.msra.mxu0 %v3242
    %3297 = vmatprep.subr.mxu0 0.0
    %3298 = vmatpush1.msra.mxu0 %v3247
    %3299 = vmatprep.subr.mxu0 0.0
    %3300 = vmatpush1.msra.mxu0 0.0
    %3301 = vmatprep.subr.mxu0 0.0
    %3302 = vmatpush1.msra.mxu0 0.0
    %3303 = vmatprep.subr.mxu0 0.0
    %3304 = vmatpush1.msra.mxu0 0.0
    %3305 = vmatprep.subr.mxu0 0.0
    %3306 = vmatpush1.msra.mxu0 0.0
    %3307 = vmatprep.subr.mxu0 0.0
    %3308 = vmatpush1.msra.mxu0 0.0
    %3309 = vmatprep.subr.mxu0 0.0
    %3310 = vmatpush1.msra.mxu0 0.0
    %3311 = vmatprep.subr.mxu0 0.0
    %3312 = vmatpush1.msra.mxu0 0.0
    %3313 = vmatprep.subr.mxu0 0.0
    %3314 = vmatpush1.msra.mxu0 0.0
    %3315 = vmatprep.subr.mxu0 0.0
    %3316 = vmatpush1.msra.mxu0 0.0
    %3317 = vmatprep.subr.mxu0 0.0
    %3318 = vmatpush1.msra.mxu0 0.0
    %3319 = vmatprep.subr.mxu0 0.0
    %3320 = vmatpush1.msra.mxu0 0.0
    %3321 = vmatprep.subr.mxu0 0.0
    %3322 = vmatpush1.msra.mxu0 0.0
    %3323 = vmatprep.subr.mxu0 0.0
    %3324 = vmatpush1.msra.mxu0 0.0
    %3325 = vmatprep.subr.mxu0 0.0
    %3326 = vmatpush1.msra.mxu0 0.0
    %3327 = vmatprep.subr.mxu0 0.0
    %3328 = vmatpush1.msra.mxu0 0.0
    %3329 = vmatprep.subr.mxu0 0.0
    %3330 = vmatpush1.msra.mxu0 0.0
    %3331 = vmatprep.subr.mxu0 0.0
    %3332 = vmatpush1.msra.mxu0 0.0
    %3333 = vmatprep.subr.mxu0 0.0
    %3334 = vmatpush1.msra.mxu0 0.0
    %3335 = vmatprep.subr.mxu0 0.0
    %3336 = vmatpush1.msra.mxu0 0.0
    %3337 = vmatprep.subr.mxu0 0.0
    %3338 = vmatpush1.msra.mxu0 0.0
    %3339 = vmatprep.subr.mxu0 0.0
    %3340 = vmatpush1.msra.mxu0 0.0
    %3341 = vmatprep.subr.mxu0 0.0
    %3342 = vmatpush1.msra.mxu0 0.0
    %3343 = vmatprep.subr.mxu0 0.0
    %3344 = vmatpush1.msra.mxu0 0.0
    %3345 = vmatprep.subr.mxu0 0.0
    %3346 = vmatpush1.msra.mxu0 0.0
    %3347 = vmatprep.mubr.f32.mxu0 0.0
    %3348 = vmatmul.mubr.f32.gmra.mrb[0].mxu0 %v3260
    %v3349 = vpop.f32.mrb[0].mxu0
    %v3350 = vadd.f32 0.0, %v3349
    %v3351 = vpop.f32.mrb[0].mxu0
    %3352 = vmatprep.mubr.f32.mxu0 0.0
    %3353 = vmatmul.mubr.f32.gmra.mrb[0].mxu0 %v3263
    %v3354 = vpop.f32.mrb[0].mxu0
    %v3355 = vadd.f32 0.0, %v3354
    %v3356 = vpop.f32.mrb[0].mxu0
    %3357 = vmatprep.mubr.f32.mxu0 0.0
    %3358 = vmatmul.mubr.f32.gmra.mrb[0].mxu0 %v3266
    %v3359 = vpop.f32.mrb[0].mxu0
    %v3360 = vadd.f32 0.0, %v3359
    %v3361 = vpop.f32.mrb[0].mxu0
    %3362 = vmatprep.mubr.f32.mxu0 0.0
    %3363 = vmatmul.mubr.f32.gmra.mrb[0].mxu0 %v3269
    %v3364 = vpop.f32.mrb[0].mxu0
    %v3365 = vadd.f32 0.0, %v3364
    %v3366 = vpop.f32.mrb[0].mxu0
    %3367 = vmatprep.mubr.f32.mxu0 0.0
    %3368 = vmatmul.mubr.f32.gmra.mrb[0].mxu0 %v3272
    %v3369 = vpop.f32.mrb[0].mxu0
    %v3370 = vadd.f32 0.0, %v3369
    %v3371 = vpop.f32.mrb[0].mxu0
    %3372 = vmatprep.mubr.f32.mxu0 0.0
    %3373 = vmatmul.mubr.f32.gmra.mrb[0].mxu0 %v3275
    %v3374 = vpop.f32.mrb[0].mxu0
    %v3375 = vadd.f32 0.0, %v3374
    %v3376 = vpop.f32.mrb[0].mxu0
    %3377 = vmatprep.mubr.f32.mxu0 0.0
    %3378 = vmatmul.mubr.f32.gmra.mrb[0].mxu0 %v3278
    %v3379 = vpop.f32.mrb[0].mxu0
    %v3380 = vadd.f32 0.0, %v3379
    %v3381 = vpop.f32.mrb[0].mxu0
    %3382 = vmatprep.mubr.f32.mxu0 0.0
    %3383 = vmatmul.mubr.f32.gmra.mrb[0].mxu0 %v3281
    %v3384 = vpop.f32.mrb[0].mxu0
    %v3385 = vadd.f32 0.0, %v3384
    %v3386 = vpop.f32.mrb[0].mxu0
    %3387 = vdwg.mxu0
    %v3388 = vadd.f32 %v3135, %v3350
    %v3389 = vadd.f32 %v3136, %v3355
    %v3390 = vadd.f32 %v3137, %v3360
    %v3391 = vadd.f32 %v3138, %v3365
    %v3392 = vadd.f32 %v3139, %v3370
    %v3393 = vadd.f32 %v3140, %v3375
    %v3394 = vadd.f32 %v3141, %v3380
    %v3395 = vadd.f32 %v3142, %v3385
    %v3396 = vld [vmem:[#allocation13] sm:$0xff]
    %v3397 = vld [vmem:[#allocation13 + $0x8] sm:$0xff]
    %v3398 = vld [vmem:[#allocation13 + $0x10] sm:$0xff]
    %v3399 = vld [vmem:[#allocation13 + $0x18] sm:$0xff]
    %v3400 = vld [vmem:[#allocation13 + $0x20] sm:$0xff]
    %v3401 = vld [vmem:[#allocation13 + $0x28] sm:$0xff]
    %v3402 = vld [vmem:[#allocation13 + $0x30] sm:$0xff]
    %v3403 = vld [vmem:[#allocation13 + $0x38] sm:$0xff]
    %3405 = vset.pattern.permute.xlu0 0
    %3406 = vperm.xlu0 %3405, %v3396
    %v3407 = vpop.permute.xlu0 %3406
    %3410 = vset.pattern.permute.xlu0 0
    %3411 = vperm.xlu0 %3410, %v3397
    %v3412 = vpop.permute.xlu0 %3411
    %3415 = vset.pattern.permute.xlu0 0
    %3416 = vperm.xlu0 %3415, %v3398
    %v3417 = vpop.permute.xlu0 %3416
    %3420 = vset.pattern.permute.xlu0 0
    %3421 = vperm.xlu0 %3420, %v3399
    %v3422 = vpop.permute.xlu0 %3421
    %3425 = vset.pattern.permute.xlu0 0
    %3426 = vperm.xlu0 %3425, %v3400
    %v3427 = vpop.permute.xlu0 %3426
    %3430 = vset.pattern.permute.xlu0 0
    %3431 = vperm.xlu0 %3430, %v3401
    %v3432 = vpop.permute.xlu0 %3431
    %3435 = vset.pattern.permute.xlu0 0
    %3436 = vperm.xlu0 %3435, %v3402
    %v3437 = vpop.permute.xlu0 %3436
    %3440 = vset.pattern.permute.xlu0 0
    %3441 = vperm.xlu0 %3440, %v3403
    %v3442 = vpop.permute.xlu0 %3441
    %v3444 = vadd.f32 %v3388, %v3407
    %v3445 = vadd.f32 %v3389, %v3412
    %v3446 = vadd.f32 %v3390, %v3417
    %v3447 = vadd.f32 %v3391, %v3422
    %v3448 = vadd.f32 %v3392, %v3427
    %v3449 = vadd.f32 %v3393, %v3432
    %v3450 = vadd.f32 %v3394, %v3437
    %v3451 = vadd.f32 %v3395, %v3442
    %s3452 = sld [smem:[#allocation4]]
    %vm3453 = vcmp.ge.f32.partialorder %v3444, 0.0
    %vm3454 = vcmp.ge.f32.partialorder %v3445, 0.0
    %vm3455 = vcmp.ge.f32.partialorder %v3446, 0.0
    %vm3456 = vcmp.ge.f32.partialorder %v3447, 0.0
    %vm3457 = vcmp.ge.f32.partialorder %v3448, 0.0
    %vm3458 = vcmp.ge.f32.partialorder %v3449, 0.0
    %vm3459 = vcmp.ge.f32.partialorder %v3450, 0.0
    %vm3460 = vcmp.ge.f32.partialorder %v3451, 0.0
    %v3461 = vstv %s3452
    %v3462 = vmul.f32 %v3461, %v3444
    %v3463 = vmul.f32 %v3461, %v3445
    %v3464 = vmul.f32 %v3461, %v3446
    %v3465 = vmul.f32 %v3461, %v3447
    %v3466 = vmul.f32 %v3461, %v3448
    %v3467 = vmul.f32 %v3461, %v3449
    %v3468 = vmul.f32 %v3461, %v3450
    %v3469 = vmul.f32 %v3461, %v3451
    %v3470 = vsel %vm3453, %v3444, %v3462
    %v3471 = vsel %vm3454, %v3445, %v3463
    %v3472 = vsel %vm3455, %v3446, %v3464
    %v3473 = vsel %vm3456, %v3447, %v3465
    %v3474 = vsel %vm3457, %v3448, %v3466
    %v3475 = vsel %vm3458, %v3449, %v3467
    %v3476 = vsel %vm3459, %v3450, %v3468
    %v3477 = vsel %vm3460, %v3451, %v3469
    %v3478 = vadd.f32 %v3470, %v1248
    %v3479 = vadd.f32 %v3471, %v1249
    %v3480 = vadd.f32 %v3472, %v1250
    %v3481 = vadd.f32 %v3473, %v1251
    %v3482 = vadd.f32 %v3474, %v1252
    %v3483 = vadd.f32 %v3475, %v1253
    %v3484 = vadd.f32 %v3476, %v1254
    %v3485 = vadd.f32 %v3477, %v1255
    %v3486 = vld [vmem:[%s2] sm:$0xff]
    %v3487 = vld [vmem:[%s2 + $0x8] sm:$0xff]
    %v3488 = vld [vmem:[%s2 + $0x10] sm:$0xff]
    %v3489 = vld [vmem:[%s2 + $0x18] sm:$0xff]
    %v3490 = vld [vmem:[%s2 + $0x20] sm:$0xff]
    %v3491 = vld [vmem:[%s2 + $0x28] sm:$0xff]
    %v3492 = vld [vmem:[%s2 + $0x30] sm:$0xff]
    %v3493 = vld [vmem:[%s2 + $0x38] sm:$0xff]
    %v3494 = vsub.f32 %v3478, %v3486
    %v3495 = vsub.f32 %v3479, %v3487
    %v3496 = vsub.f32 %v3480, %v3488
    %v3497 = vsub.f32 %v3481, %v3489
    %v3498 = vsub.f32 %v3482, %v3490
    %v3499 = vsub.f32 %v3483, %v3491
    %v3500 = vsub.f32 %v3484, %v3492
    %v3501 = vsub.f32 %v3485, %v3493
    %v3502 = vld [vmem:[%s15] sm:$0xff]
    %v3503 = vld [vmem:[%s15 + $0x8] sm:$0xff]
    %v3505 = vsel %vm1258, %v3494, 0
    %v3508 = vsel %vm1258, %v3495, 0
    %v3511 = vsel %vm1258, %v3496, 0
    %v3514 = vsel %vm1258, %v3497, 0
    %v3517 = vsel %vm1258, %v3498, 0
    %v3520 = vsel %vm1258, %v3499, 0
    %v3523 = vsel %vm1258, %v3500, 0
    %v3526 = vsel %vm1258, %v3501, 0
    %3528 = vmatprep.subr.mxu0 0.0
    %3529 = vmatpush1.msra.mxu0 %v3502
    %3530 = vmatprep.subr.mxu0 0.0
    %3531 = vmatpush1.msra.mxu0 %v3503
    %3532 = vmatprep.subr.mxu0 0.0
    %3533 = vmatpush1.msra.mxu0 0.0
    %3534 = vmatprep.subr.mxu0 0.0
    %3535 = vmatpush1.msra.mxu0 0.0
    %3536 = vmatprep.subr.mxu0 0.0
    %3537 = vmatpush1.msra.mxu0 0.0
    %3538 = vmatprep.subr.mxu0 0.0
    %3539 = vmatpush1.msra.mxu0 0.0
    %3540 = vmatprep.subr.mxu0 0.0
    %3541 = vmatpush1.msra.mxu0 0.0
    %3542 = vmatprep.subr.mxu0 0.0
    %3543 = vmatpush1.msra.mxu0 0.0
    %3544 = vmatprep.subr.mxu0 0.0
    %3545 = vmatpush1.msra.mxu0 0.0
    %3546 = vmatprep.subr.mxu0 0.0
    %3547 = vmatpush1.msra.mxu0 0.0
    %3548 = vmatprep.subr.mxu0 0.0
    %3549 = vmatpush1.msra.mxu0 0.0
    %3550 = vmatprep.subr.mxu0 0.0
    %3551 = vmatpush1.msra.mxu0 0.0
    %3552 = vmatprep.subr.mxu0 0.0
    %3553 = vmatpush1.msra.mxu0 0.0
    %3554 = vmatprep.subr.mxu0 0.0
    %3555 = vmatpush1.msra.mxu0 0.0
    %3556 = vmatprep.subr.mxu0 0.0
    %3557 = vmatpush1.msra.mxu0 0.0
    %3558 = vmatprep.subr.mxu0 0.0
    %3559 = vmatpush1.msra.mxu0 0.0
    %3560 = vmatprep.subr.mxu0 0.0
    %3561 = vmatpush1.msra.mxu0 0.0
    %3562 = vmatprep.subr.mxu0 0.0
    %3563 = vmatpush1.msra.mxu0 0.0
    %3564 = vmatprep.subr.mxu0 0.0
    %3565 = vmatpush1.msra.mxu0 0.0
    %3566 = vmatprep.subr.mxu0 0.0
    %3567 = vmatpush1.msra.mxu0 0.0
    %3568 = vmatprep.subr.mxu0 0.0
    %3569 = vmatpush1.msra.mxu0 0.0
    %3570 = vmatprep.subr.mxu0 0.0
    %3571 = vmatpush1.msra.mxu0 0.0
    %3572 = vmatprep.subr.mxu0 0.0
    %3573 = vmatpush1.msra.mxu0 0.0
    %3574 = vmatprep.subr.mxu0 0.0
    %3575 = vmatpush1.msra.mxu0 0.0
    %3576 = vmatprep.subr.mxu0 0.0
    %3577 = vmatpush1.msra.mxu0 0.0
    %3578 = vmatprep.subr.mxu0 0.0
    %3579 = vmatpush1.msra.mxu0 0.0
    %3580 = vmatprep.subr.mxu0 0.0
    %3581 = vmatpush1.msra.mxu0 0.0
    %3582 = vmatprep.subr.mxu0 0.0
    %3583 = vmatpush1.msra.mxu0 0.0
    %3584 = vmatprep.subr.mxu0 0.0
    %3585 = vmatpush1.msra.mxu0 0.0
    %3586 = vmatprep.subr.mxu0 0.0
    %3587 = vmatpush1.msra.mxu0 0.0
    %3588 = vmatprep.subr.mxu0 0.0
    %3589 = vmatpush1.msra.mxu0 0.0
    %3590 = vmatprep.subr.mxu0 0.0
    %3591 = vmatpush1.msra.mxu0 0.0
    %3592 = vmatprep.mubr.f32.mxu0 0.0
    %3593 = vmatmul.mubr.f32.gmra.mrb[0].mxu0 %v3505
    %v3594 = vpop.f32.mrb[0].mxu0
    %v3595 = vadd.f32 0.0, %v3594
    %v3596 = vpop.f32.mrb[0].mxu0
    %3597 = vmatprep.mubr.f32.mxu0 0.0
    %3598 = vmatmul.mubr.f32.gmra.mrb[0].mxu0 %v3508
    %v3599 = vpop.f32.mrb[0].mxu0
    %v3600 = vadd.f32 0.0, %v3599
    %v3601 = vpop.f32.mrb[0].mxu0
    %3602 = vmatprep.mubr.f32.mxu0 0.0
    %3603 = vmatmul.mubr.f32.gmra.mrb[0].mxu0 %v3511
    %v3604 = vpop.f32.mrb[0].mxu0
    %v3605 = vadd.f32 0.0, %v3604
    %v3606 = vpop.f32.mrb[0].mxu0
    %3607 = vmatprep.mubr.f32.mxu0 0.0
    %3608 = vmatmul.mubr.f32.gmra.mrb[0].mxu0 %v3514
    %v3609 = vpop.f32.mrb[0].mxu0
    %v3610 = vadd.f32 0.0, %v3609
    %v3611 = vpop.f32.mrb[0].mxu0
    %3612 = vmatprep.mubr.f32.mxu0 0.0
    %3613 = vmatmul.mubr.f32.gmra.mrb[0].mxu0 %v3517
    %v3614 = vpop.f32.mrb[0].mxu0
    %v3615 = vadd.f32 0.0, %v3614
    %v3616 = vpop.f32.mrb[0].mxu0
    %3617 = vmatprep.mubr.f32.mxu0 0.0
    %3618 = vmatmul.mubr.f32.gmra.mrb[0].mxu0 %v3520
    %v3619 = vpop.f32.mrb[0].mxu0
    %v3620 = vadd.f32 0.0, %v3619
    %v3621 = vpop.f32.mrb[0].mxu0
    %3622 = vmatprep.mubr.f32.mxu0 0.0
    %3623 = vmatmul.mubr.f32.gmra.mrb[0].mxu0 %v3523
    %v3624 = vpop.f32.mrb[0].mxu0
    %v3625 = vadd.f32 0.0, %v3624
    %v3626 = vpop.f32.mrb[0].mxu0
    %3627 = vmatprep.mubr.f32.mxu0 0.0
    %3628 = vmatmul.mubr.f32.gmra.mrb[0].mxu0 %v3526
    %v3629 = vpop.f32.mrb[0].mxu0
    %v3630 = vadd.f32 0.0, %v3629
    %v3631 = vpop.f32.mrb[0].mxu0
    %3632 = vdwg.mxu0
    %v3633 = vld [vmem:[%s16] sm:$0xff]
    %v3634 = vld [vmem:[%s16 + $0x8] sm:$0xff]
    %v3635 = vld [vmem:[%s16 + $0x10] sm:$0xff]
    %v3636 = vld [vmem:[%s16 + $0x18] sm:$0xff]
    %v3637 = vld [vmem:[%s16 + $0x20] sm:$0xff]
    %v3638 = vld [vmem:[%s16 + $0x28] sm:$0xff]
    %v3639 = vld [vmem:[%s16 + $0x30] sm:$0xff]
    %v3640 = vld [vmem:[%s16 + $0x38] sm:$0xff]
    %s3641 = scalar_lea.vmem %s15, 16
    %v3642 = vld [vmem:[%s3641] sm:$0xff]
    %v3643 = vld [vmem:[%s3641 + $0x8] sm:$0xff]
    %3644 = vmatprep.subr.mxu0 0.0
    %3645 = vmatpush1.msra.mxu0 %v3642
    %3646 = vmatprep.subr.mxu0 0.0
    %3647 = vmatpush1.msra.mxu0 %v3643
    %3648 = vmatprep.subr.mxu0 0.0
    %3649 = vmatpush1.msra.mxu0 0.0
    %3650 = vmatprep.subr.mxu0 0.0
    %3651 = vmatpush1.msra.mxu0 0.0
    %3652 = vmatprep.subr.mxu0 0.0
    %3653 = vmatpush1.msra.mxu0 0.0
    %3654 = vmatprep.subr.mxu0 0.0
    %3655 = vmatpush1.msra.mxu0 0.0
    %3656 = vmatprep.subr.mxu0 0.0
    %3657 = vmatpush1.msra.mxu0 0.0
    %3658 = vmatprep.subr.mxu0 0.0
    %3659 = vmatpush1.msra.mxu0 0.0
    %3660 = vmatprep.subr.mxu0 0.0
    %3661 = vmatpush1.msra.mxu0 0.0
    %3662 = vmatprep.subr.mxu0 0.0
    %3663 = vmatpush1.msra.mxu0 0.0
    %3664 = vmatprep.subr.mxu0 0.0
    %3665 = vmatpush1.msra.mxu0 0.0
    %3666 = vmatprep.subr.mxu0 0.0
    %3667 = vmatpush1.msra.mxu0 0.0
    %3668 = vmatprep.subr.mxu0 0.0
    %3669 = vmatpush1.msra.mxu0 0.0
    %3670 = vmatprep.subr.mxu0 0.0
    %3671 = vmatpush1.msra.mxu0 0.0
    %3672 = vmatprep.subr.mxu0 0.0
    %3673 = vmatpush1.msra.mxu0 0.0
    %3674 = vmatprep.subr.mxu0 0.0
    %3675 = vmatpush1.msra.mxu0 0.0
    %3676 = vmatprep.subr.mxu0 0.0
    %3677 = vmatpush1.msra.mxu0 0.0
    %3678 = vmatprep.subr.mxu0 0.0
    %3679 = vmatpush1.msra.mxu0 0.0
    %3680 = vmatprep.subr.mxu0 0.0
    %3681 = vmatpush1.msra.mxu0 0.0
    %3682 = vmatprep.subr.mxu0 0.0
    %3683 = vmatpush1.msra.mxu0 0.0
    %3684 = vmatprep.subr.mxu0 0.0
    %3685 = vmatpush1.msra.mxu0 0.0
    %3686 = vmatprep.subr.mxu0 0.0
    %3687 = vmatpush1.msra.mxu0 0.0
    %3688 = vmatprep.subr.mxu0 0.0
    %3689 = vmatpush1.msra.mxu0 0.0
    %3690 = vmatprep.subr.mxu0 0.0
    %3691 = vmatpush1.msra.mxu0 0.0
    %3692 = vmatprep.subr.mxu0 0.0
    %3693 = vmatpush1.msra.mxu0 0.0
    %3694 = vmatprep.subr.mxu0 0.0
    %3695 = vmatpush1.msra.mxu0 0.0
    %3696 = vmatprep.subr.mxu0 0.0
    %3697 = vmatpush1.msra.mxu0 0.0
    %3698 = vmatprep.subr.mxu0 0.0
    %3699 = vmatpush1.msra.mxu0 0.0
    %3700 = vmatprep.subr.mxu0 0.0
    %3701 = vmatpush1.msra.mxu0 0.0
    %3702 = vmatprep.subr.mxu0 0.0
    %3703 = vmatpush1.msra.mxu0 0.0
    %3704 = vmatprep.subr.mxu0 0.0
    %3705 = vmatpush1.msra.mxu0 0.0
    %3706 = vmatprep.subr.mxu0 0.0
    %3707 = vmatpush1.msra.mxu0 0.0
    %3708 = vmatprep.mubr.f32.mxu0 0.0
    %3709 = vmatmul.mubr.f32.gmra.mrb[0].mxu0 %v3505
    %v3710 = vpop.f32.mrb[0].mxu0
    %v3711 = vadd.f32 0.0, %v3710
    %v3712 = vpop.f32.mrb[0].mxu0
    %3713 = vmatprep.mubr.f32.mxu0 0.0
    %3714 = vmatmul.mubr.f32.gmra.mrb[0].mxu0 %v3508
    %v3715 = vpop.f32.mrb[0].mxu0
    %v3716 = vadd.f32 0.0, %v3715
    %v3717 = vpop.f32.mrb[0].mxu0
    %3718 = vmatprep.mubr.f32.mxu0 0.0
    %3719 = vmatmul.mubr.f32.gmra.mrb[0].mxu0 %v3511
    %v3720 = vpop.f32.mrb[0].mxu0
    %v3721 = vadd.f32 0.0, %v3720
    %v3722 = vpop.f32.mrb[0].mxu0
    %3723 = vmatprep.mubr.f32.mxu0 0.0
    %3724 = vmatmul.mubr.f32.gmra.mrb[0].mxu0 %v3514
    %v3725 = vpop.f32.mrb[0].mxu0
    %v3726 = vadd.f32 0.0, %v3725
    %v3727 = vpop.f32.mrb[0].mxu0
    %3728 = vmatprep.mubr.f32.mxu0 0.0
    %3729 = vmatmul.mubr.f32.gmra.mrb[0].mxu0 %v3517
    %v3730 = vpop.f32.mrb[0].mxu0
    %v3731 = vadd.f32 0.0, %v3730
    %v3732 = vpop.f32.mrb[0].mxu0
    %3733 = vmatprep.mubr.f32.mxu0 0.0
    %3734 = vmatmul.mubr.f32.gmra.mrb[0].mxu0 %v3520
    %v3735 = vpop.f32.mrb[0].mxu0
    %v3736 = vadd.f32 0.0, %v3735
    %v3737 = vpop.f32.mrb[0].mxu0
    %3738 = vmatprep.mubr.f32.mxu0 0.0
    %3739 = vmatmul.mubr.f32.gmra.mrb[0].mxu0 %v3523
    %v3740 = vpop.f32.mrb[0].mxu0
    %v3741 = vadd.f32 0.0, %v3740
    %v3742 = vpop.f32.mrb[0].mxu0
    %3743 = vmatprep.mubr.f32.mxu0 0.0
    %3744 = vmatmul.mubr.f32.gmra.mrb[0].mxu0 %v3526
    %v3745 = vpop.f32.mrb[0].mxu0
    %v3746 = vadd.f32 0.0, %v3745
    %v3747 = vpop.f32.mrb[0].mxu0
    %3748 = vdwg.mxu0
    %s3749 = scalar_lea.vmem %s16, 64
    %v3750 = vld [vmem:[%s3749] sm:$0xff]
    %v3751 = vld [vmem:[%s3749 + $0x8] sm:$0xff]
    %v3752 = vld [vmem:[%s3749 + $0x10] sm:$0xff]
    %v3753 = vld [vmem:[%s3749 + $0x18] sm:$0xff]
    %v3754 = vld [vmem:[%s3749 + $0x20] sm:$0xff]
    %v3755 = vld [vmem:[%s3749 + $0x28] sm:$0xff]
    %v3756 = vld [vmem:[%s3749 + $0x30] sm:$0xff]
    %v3757 = vld [vmem:[%s3749 + $0x38] sm:$0xff]
    %v3759 = vsel %vm403, %v3750, 0
    %v3762 = vsel %vm403, %v3751, 0
    %v3765 = vsel %vm403, %v3752, 0
    %v3768 = vsel %vm403, %v3753, 0
    %v3771 = vsel %vm403, %v3754, 0
    %v3774 = vsel %vm403, %v3755, 0
    %v3777 = vsel %vm403, %v3756, 0
    %v3780 = vsel %vm403, %v3757, 0
    %3782 = vmatprep.subr.mxu0 0.0
    %3783 = vmatpush1.msra.mxu0 %v3711
    %3784 = vmatprep.subr.mxu0 0.0
    %3785 = vmatpush1.msra.mxu0 %v3716
    %3786 = vmatprep.subr.mxu0 0.0
    %3787 = vmatpush1.msra.mxu0 %v3721
    %3788 = vmatprep.subr.mxu0 0.0
    %3789 = vmatpush1.msra.mxu0 %v3726
    %3790 = vmatprep.subr.mxu0 0.0
    %3791 = vmatpush1.msra.mxu0 %v3731
    %3792 = vmatprep.subr.mxu0 0.0
    %3793 = vmatpush1.msra.mxu0 %v3736
    %3794 = vmatprep.subr.mxu0 0.0
    %3795 = vmatpush1.msra.mxu0 %v3741
    %3796 = vmatprep.subr.mxu0 0.0
    %3797 = vmatpush1.msra.mxu0 %v3746
    %3798 = vmatprep.subr.mxu0 0.0
    %3799 = vmatpush1.msra.mxu0 0.0
    %3800 = vmatprep.subr.mxu0 0.0
    %3801 = vmatpush1.msra.mxu0 0.0
    %3802 = vmatprep.subr.mxu0 0.0
    %3803 = vmatpush1.msra.mxu0 0.0
    %3804 = vmatprep.subr.mxu0 0.0
    %3805 = vmatpush1.msra.mxu0 0.0
    %3806 = vmatprep.subr.mxu0 0.0
    %3807 = vmatpush1.msra.mxu0 0.0
    %3808 = vmatprep.subr.mxu0 0.0
    %3809 = vmatpush1.msra.mxu0 0.0
    %3810 = vmatprep.subr.mxu0 0.0
    %3811 = vmatpush1.msra.mxu0 0.0
    %3812 = vmatprep.subr.mxu0 0.0
    %3813 = vmatpush1.msra.mxu0 0.0
    %3814 = vmatprep.subr.mxu0 0.0
    %3815 = vmatpush1.msra.mxu0 0.0
    %3816 = vmatprep.subr.mxu0 0.0
    %3817 = vmatpush1.msra.mxu0 0.0
    %3818 = vmatprep.subr.mxu0 0.0
    %3819 = vmatpush1.msra.mxu0 0.0
    %3820 = vmatprep.subr.mxu0 0.0
    %3821 = vmatpush1.msra.mxu0 0.0
    %3822 = vmatprep.subr.mxu0 0.0
    %3823 = vmatpush1.msra.mxu0 0.0
    %3824 = vmatprep.subr.mxu0 0.0
    %3825 = vmatpush1.msra.mxu0 0.0
    %3826 = vmatprep.subr.mxu0 0.0
    %3827 = vmatpush1.msra.mxu0 0.0
    %3828 = vmatprep.subr.mxu0 0.0
    %3829 = vmatpush1.msra.mxu0 0.0
    %3830 = vmatprep.subr.mxu0 0.0
    %3831 = vmatpush1.msra.mxu0 0.0
    %3832 = vmatprep.subr.mxu0 0.0
    %3833 = vmatpush1.msra.mxu0 0.0
    %3834 = vmatprep.subr.mxu0 0.0
    %3835 = vmatpush1.msra.mxu0 0.0
    %3836 = vmatprep.subr.mxu0 0.0
    %3837 = vmatpush1.msra.mxu0 0.0
    %3838 = vmatprep.subr.mxu0 0.0
    %3839 = vmatpush1.msra.mxu0 0.0
    %3840 = vmatprep.subr.mxu0 0.0
    %3841 = vmatpush1.msra.mxu0 0.0
    %3842 = vmatprep.subr.mxu0 0.0
    %3843 = vmatpush1.msra.mxu0 0.0
    %3844 = vmatprep.subr.mxu0 0.0
    %3845 = vmatpush1.msra.mxu0 0.0
    %3846 = vmatprep.mubr.f32.mxu0 0.0
    %3847 = vmatmul.mubr.f32.gmra.mrb[0].mxu0 %v3759
    %v3848 = vpop.f32.mrb[0].mxu0
    %v3849 = vadd.f32 0.0, %v3848
    %v3850 = vpop.f32.mrb[0].mxu0
    %3851 = vmatprep.mubr.f32.mxu0 0.0
    %3852 = vmatmul.mubr.f32.gmra.mrb[0].mxu0 %v3762
    %v3853 = vpop.f32.mrb[0].mxu0
    %v3854 = vadd.f32 0.0, %v3853
    %v3855 = vpop.f32.mrb[0].mxu0
    %3856 = vmatprep.mubr.f32.mxu0 0.0
    %3857 = vmatmul.mubr.f32.gmra.mrb[0].mxu0 %v3765
    %v3858 = vpop.f32.mrb[0].mxu0
    %v3859 = vadd.f32 0.0, %v3858
    %v3860 = vpop.f32.mrb[0].mxu0
    %3861 = vmatprep.mubr.f32.mxu0 0.0
    %3862 = vmatmul.mubr.f32.gmra.mrb[0].mxu0 %v3768
    %v3863 = vpop.f32.mrb[0].mxu0
    %v3864 = vadd.f32 0.0, %v3863
    %v3865 = vpop.f32.mrb[0].mxu0
    %3866 = vmatprep.mubr.f32.mxu0 0.0
    %3867 = vmatmul.mubr.f32.gmra.mrb[0].mxu0 %v3771
    %v3868 = vpop.f32.mrb[0].mxu0
    %v3869 = vadd.f32 0.0, %v3868
    %v3870 = vpop.f32.mrb[0].mxu0
    %3871 = vmatprep.mubr.f32.mxu0 0.0
    %3872 = vmatmul.mubr.f32.gmra.mrb[0].mxu0 %v3774
    %v3873 = vpop.f32.mrb[0].mxu0
    %v3874 = vadd.f32 0.0, %v3873
    %v3875 = vpop.f32.mrb[0].mxu0
    %3876 = vmatprep.mubr.f32.mxu0 0.0
    %3877 = vmatmul.mubr.f32.gmra.mrb[0].mxu0 %v3777
    %v3878 = vpop.f32.mrb[0].mxu0
    %v3879 = vadd.f32 0.0, %v3878
    %v3880 = vpop.f32.mrb[0].mxu0
    %3881 = vmatprep.mubr.f32.mxu0 0.0
    %3882 = vmatmul.mubr.f32.gmra.mrb[0].mxu0 %v3780
    %v3883 = vpop.f32.mrb[0].mxu0
    %v3884 = vadd.f32 0.0, %v3883
    %v3885 = vpop.f32.mrb[0].mxu0
    %3886 = vdwg.mxu0
    %v3888 = vsel %vm403, %v3633, 0
    %v3891 = vsel %vm403, %v3634, 0
    %v3894 = vsel %vm403, %v3635, 0
    %v3897 = vsel %vm403, %v3636, 0
    %v3900 = vsel %vm403, %v3637, 0
    %v3903 = vsel %vm403, %v3638, 0
    %v3906 = vsel %vm403, %v3639, 0
    %v3909 = vsel %vm403, %v3640, 0
    %3911 = vmatprep.subr.mxu0 0.0
    %3912 = vmatpush1.msra.mxu0 %v3595
    %3913 = vmatprep.subr.mxu0 0.0
    %3914 = vmatpush1.msra.mxu0 %v3600
    %3915 = vmatprep.subr.mxu0 0.0
    %3916 = vmatpush1.msra.mxu0 %v3605
    %3917 = vmatprep.subr.mxu0 0.0
    %3918 = vmatpush1.msra.mxu0 %v3610
    %3919 = vmatprep.subr.mxu0 0.0
    %3920 = vmatpush1.msra.mxu0 %v3615
    %3921 = vmatprep.subr.mxu0 0.0
    %3922 = vmatpush1.msra.mxu0 %v3620
    %3923 = vmatprep.subr.mxu0 0.0
    %3924 = vmatpush1.msra.mxu0 %v3625
    %3925 = vmatprep.subr.mxu0 0.0
    %3926 = vmatpush1.msra.mxu0 %v3630
    %3927 = vmatprep.subr.mxu0 0.0
    %3928 = vmatpush1.msra.mxu0 0.0
    %3929 = vmatprep.subr.mxu0 0.0
    %3930 = vmatpush1.msra.mxu0 0.0
    %3931 = vmatprep.subr.mxu0 0.0
    %3932 = vmatpush1.msra.mxu0 0.0
    %3933 = vmatprep.subr.mxu0 0.0
    %3934 = vmatpush1.msra.mxu0 0.0
    %3935 = vmatprep.subr.mxu0 0.0
    %3936 = vmatpush1.msra.mxu0 0.0
    %3937 = vmatprep.subr.mxu0 0.0
    %3938 = vmatpush1.msra.mxu0 0.0
    %3939 = vmatprep.subr.mxu0 0.0
    %3940 = vmatpush1.msra.mxu0 0.0
    %3941 = vmatprep.subr.mxu0 0.0
    %3942 = vmatpush1.msra.mxu0 0.0
    %3943 = vmatprep.subr.mxu0 0.0
    %3944 = vmatpush1.msra.mxu0 0.0
    %3945 = vmatprep.subr.mxu0 0.0
    %3946 = vmatpush1.msra.mxu0 0.0
    %3947 = vmatprep.subr.mxu0 0.0
    %3948 = vmatpush1.msra.mxu0 0.0
    %3949 = vmatprep.subr.mxu0 0.0
    %3950 = vmatpush1.msra.mxu0 0.0
    %3951 = vmatprep.subr.mxu0 0.0
    %3952 = vmatpush1.msra.mxu0 0.0
    %3953 = vmatprep.subr.mxu0 0.0
    %3954 = vmatpush1.msra.mxu0 0.0
    %3955 = vmatprep.subr.mxu0 0.0
    %3956 = vmatpush1.msra.mxu0 0.0
    %3957 = vmatprep.subr.mxu0 0.0
    %3958 = vmatpush1.msra.mxu0 0.0
    %3959 = vmatprep.subr.mxu0 0.0
    %3960 = vmatpush1.msra.mxu0 0.0
    %3961 = vmatprep.subr.mxu0 0.0
    %3962 = vmatpush1.msra.mxu0 0.0
    %3963 = vmatprep.subr.mxu0 0.0
    %3964 = vmatpush1.msra.mxu0 0.0
    %3965 = vmatprep.subr.mxu0 0.0
    %3966 = vmatpush1.msra.mxu0 0.0
    %3967 = vmatprep.subr.mxu0 0.0
    %3968 = vmatpush1.msra.mxu0 0.0
    %3969 = vmatprep.subr.mxu0 0.0
    %3970 = vmatpush1.msra.mxu0 0.0
    %3971 = vmatprep.subr.mxu0 0.0
    %3972 = vmatpush1.msra.mxu0 0.0
    %3973 = vmatprep.subr.mxu0 0.0
    %3974 = vmatpush1.msra.mxu0 0.0
    %3975 = vmatprep.mubr.f32.mxu0 0.0
    %3976 = vmatmul.mubr.f32.gmra.mrb[0].mxu0 %v3888
    %v3977 = vpop.f32.mrb[0].mxu0
    %v3978 = vadd.f32 %v3849, %v3977
    %v3979 = vpop.f32.mrb[0].mxu0
    %3980 = vmatprep.mubr.f32.mxu0 0.0
    %3981 = vmatmul.mubr.f32.gmra.mrb[0].mxu0 %v3891
    %v3982 = vpop.f32.mrb[0].mxu0
    %v3983 = vadd.f32 %v3854, %v3982
    %v3984 = vpop.f32.mrb[0].mxu0
    %3985 = vmatprep.mubr.f32.mxu0 0.0
    %3986 = vmatmul.mubr.f32.gmra.mrb[0].mxu0 %v3894
    %v3987 = vpop.f32.mrb[0].mxu0
    %v3988 = vadd.f32 %v3859, %v3987
    %v3989 = vpop.f32.mrb[0].mxu0
    %3990 = vmatprep.mubr.f32.mxu0 0.0
    %3991 = vmatmul.mubr.f32.gmra.mrb[0].mxu0 %v3897
    %v3992 = vpop.f32.mrb[0].mxu0
    %v3993 = vadd.f32 %v3864, %v3992
    %v3994 = vpop.f32.mrb[0].mxu0
    %3995 = vmatprep.mubr.f32.mxu0 0.0
    %3996 = vmatmul.mubr.f32.gmra.mrb[0].mxu0 %v3900
    %v3997 = vpop.f32.mrb[0].mxu0
    %v3998 = vadd.f32 %v3869, %v3997
    %v3999 = vpop.f32.mrb[0].mxu0
    %4000 = vmatprep.mubr.f32.mxu0 0.0
    %4001 = vmatmul.mubr.f32.gmra.mrb[0].mxu0 %v3903
    %v4002 = vpop.f32.mrb[0].mxu0
    %v4003 = vadd.f32 %v3874, %v4002
    %v4004 = vpop.f32.mrb[0].mxu0
    %4005 = vmatprep.mubr.f32.mxu0 0.0
    %4006 = vmatmul.mubr.f32.gmra.mrb[0].mxu0 %v3906
    %v4007 = vpop.f32.mrb[0].mxu0
    %v4008 = vadd.f32 %v3879, %v4007
    %v4009 = vpop.f32.mrb[0].mxu0
    %4010 = vmatprep.mubr.f32.mxu0 0.0
    %4011 = vmatmul.mubr.f32.gmra.mrb[0].mxu0 %v3909
    %v4012 = vpop.f32.mrb[0].mxu0
    %v4013 = vadd.f32 %v3884, %v4012
    %v4014 = vpop.f32.mrb[0].mxu0
    %4015 = vdwg.mxu0
    %s4016 = scalar_lea.vmem %s15, 32
    %v4017 = vld [vmem:[%s4016] sm:$0xff]
    %v4018 = vld [vmem:[%s4016 + $0x8] sm:$0xff]
    %4019 = vmatprep.subr.mxu0 0.0
    %4020 = vmatpush1.msra.mxu0 %v4017
    %4021 = vmatprep.subr.mxu0 0.0
    %4022 = vmatpush1.msra.mxu0 %v4018
    %4023 = vmatprep.subr.mxu0 0.0
    %4024 = vmatpush1.msra.mxu0 0.0
    %4025 = vmatprep.subr.mxu0 0.0
    %4026 = vmatpush1.msra.mxu0 0.0
    %4027 = vmatprep.subr.mxu0 0.0
    %4028 = vmatpush1.msra.mxu0 0.0
    %4029 = vmatprep.subr.mxu0 0.0
    %4030 = vmatpush1.msra.mxu0 0.0
    %4031 = vmatprep.subr.mxu0 0.0
    %4032 = vmatpush1.msra.mxu0 0.0
    %4033 = vmatprep.subr.mxu0 0.0
    %4034 = vmatpush1.msra.mxu0 0.0
    %4035 = vmatprep.subr.mxu0 0.0
    %4036 = vmatpush1.msra.mxu0 0.0
    %4037 = vmatprep.subr.mxu0 0.0
    %4038 = vmatpush1.msra.mxu0 0.0
    %4039 = vmatprep.subr.mxu0 0.0
    %4040 = vmatpush1.msra.mxu0 0.0
    %4041 = vmatprep.subr.mxu0 0.0
    %4042 = vmatpush1.msra.mxu0 0.0
    %4043 = vmatprep.subr.mxu0 0.0
    %4044 = vmatpush1.msra.mxu0 0.0
    %4045 = vmatprep.subr.mxu0 0.0
    %4046 = vmatpush1.msra.mxu0 0.0
    %4047 = vmatprep.subr.mxu0 0.0
    %4048 = vmatpush1.msra.mxu0 0.0
    %4049 = vmatprep.subr.mxu0 0.0
    %4050 = vmatpush1.msra.mxu0 0.0
    %4051 = vmatprep.subr.mxu0 0.0
    %4052 = vmatpush1.msra.mxu0 0.0
    %4053 = vmatprep.subr.mxu0 0.0
    %4054 = vmatpush1.msra.mxu0 0.0
    %4055 = vmatprep.subr.mxu0 0.0
    %4056 = vmatpush1.msra.mxu0 0.0
    %4057 = vmatprep.subr.mxu0 0.0
    %4058 = vmatpush1.msra.mxu0 0.0
    %4059 = vmatprep.subr.mxu0 0.0
    %4060 = vmatpush1.msra.mxu0 0.0
    %4061 = vmatprep.subr.mxu0 0.0
    %4062 = vmatpush1.msra.mxu0 0.0
    %4063 = vmatprep.subr.mxu0 0.0
    %4064 = vmatpush1.msra.mxu0 0.0
    %4065 = vmatprep.subr.mxu0 0.0
    %4066 = vmatpush1.msra.mxu0 0.0
    %4067 = vmatprep.subr.mxu0 0.0
    %4068 = vmatpush1.msra.mxu0 0.0
    %4069 = vmatprep.subr.mxu0 0.0
    %4070 = vmatpush1.msra.mxu0 0.0
    %4071 = vmatprep.subr.mxu0 0.0
    %4072 = vmatpush1.msra.mxu0 0.0
    %4073 = vmatprep.subr.mxu0 0.0
    %4074 = vmatpush1.msra.mxu0 0.0
    %4075 = vmatprep.subr.mxu0 0.0
    %4076 = vmatpush1.msra.mxu0 0.0
    %4077 = vmatprep.subr.mxu0 0.0
    %4078 = vmatpush1.msra.mxu0 0.0
    %4079 = vmatprep.subr.mxu0 0.0
    %4080 = vmatpush1.msra.mxu0 0.0
    %4081 = vmatprep.subr.mxu0 0.0
    %4082 = vmatpush1.msra.mxu0 0.0
    %4083 = vmatprep.mubr.f32.mxu0 0.0
    %4084 = vmatmul.mubr.f32.gmra.mrb[0].mxu0 %v3505
    %v4085 = vpop.f32.mrb[0].mxu0
    %v4086 = vadd.f32 0.0, %v4085
    %v4087 = vpop.f32.mrb[0].mxu0
    %4088 = vmatprep.mubr.f32.mxu0 0.0
    %4089 = vmatmul.mubr.f32.gmra.mrb[0].mxu0 %v3508
    %v4090 = vpop.f32.mrb[0].mxu0
    %v4091 = vadd.f32 0.0, %v4090
    %v4092 = vpop.f32.mrb[0].mxu0
    %4093 = vmatprep.mubr.f32.mxu0 0.0
    %4094 = vmatmul.mubr.f32.gmra.mrb[0].mxu0 %v3511
    %v4095 = vpop.f32.mrb[0].mxu0
    %v4096 = vadd.f32 0.0, %v4095
    %v4097 = vpop.f32.mrb[0].mxu0
    %4098 = vmatprep.mubr.f32.mxu0 0.0
    %4099 = vmatmul.mubr.f32.gmra.mrb[0].mxu0 %v3514
    %v4100 = vpop.f32.mrb[0].mxu0
    %v4101 = vadd.f32 0.0, %v4100
    %v4102 = vpop.f32.mrb[0].mxu0
    %4103 = vmatprep.mubr.f32.mxu0 0.0
    %4104 = vmatmul.mubr.f32.gmra.mrb[0].mxu0 %v3517
    %v4105 = vpop.f32.mrb[0].mxu0
    %v4106 = vadd.f32 0.0, %v4105
    %v4107 = vpop.f32.mrb[0].mxu0
    %4108 = vmatprep.mubr.f32.mxu0 0.0
    %4109 = vmatmul.mubr.f32.gmra.mrb[0].mxu0 %v3520
    %v4110 = vpop.f32.mrb[0].mxu0
    %v4111 = vadd.f32 0.0, %v4110
    %v4112 = vpop.f32.mrb[0].mxu0
    %4113 = vmatprep.mubr.f32.mxu0 0.0
    %4114 = vmatmul.mubr.f32.gmra.mrb[0].mxu0 %v3523
    %v4115 = vpop.f32.mrb[0].mxu0
    %v4116 = vadd.f32 0.0, %v4115
    %v4117 = vpop.f32.mrb[0].mxu0
    %4118 = vmatprep.mubr.f32.mxu0 0.0
    %4119 = vmatmul.mubr.f32.gmra.mrb[0].mxu0 %v3526
    %v4120 = vpop.f32.mrb[0].mxu0
    %v4121 = vadd.f32 0.0, %v4120
    %v4122 = vpop.f32.mrb[0].mxu0
    %4123 = vdwg.mxu0
    %s4124 = scalar_lea.vmem %s16, 128
    %v4125 = vld [vmem:[%s4124] sm:$0xff]
    %v4126 = vld [vmem:[%s4124 + $0x8] sm:$0xff]
    %v4127 = vld [vmem:[%s4124 + $0x10] sm:$0xff]
    %v4128 = vld [vmem:[%s4124 + $0x18] sm:$0xff]
    %v4129 = vld [vmem:[%s4124 + $0x20] sm:$0xff]
    %v4130 = vld [vmem:[%s4124 + $0x28] sm:$0xff]
    %v4131 = vld [vmem:[%s4124 + $0x30] sm:$0xff]
    %v4132 = vld [vmem:[%s4124 + $0x38] sm:$0xff]
    %v4134 = vsel %vm403, %v4125, 0
    %v4137 = vsel %vm403, %v4126, 0
    %v4140 = vsel %vm403, %v4127, 0
    %v4143 = vsel %vm403, %v4128, 0
    %v4146 = vsel %vm403, %v4129, 0
    %v4149 = vsel %vm403, %v4130, 0
    %v4152 = vsel %vm403, %v4131, 0
    %v4155 = vsel %vm403, %v4132, 0
    %4157 = vmatprep.subr.mxu0 0.0
    %4158 = vmatpush1.msra.mxu0 %v4086
    %4159 = vmatprep.subr.mxu0 0.0
    %4160 = vmatpush1.msra.mxu0 %v4091
    %4161 = vmatprep.subr.mxu0 0.0
    %4162 = vmatpush1.msra.mxu0 %v4096
    %4163 = vmatprep.subr.mxu0 0.0
    %4164 = vmatpush1.msra.mxu0 %v4101
    %4165 = vmatprep.subr.mxu0 0.0
    %4166 = vmatpush1.msra.mxu0 %v4106
    %4167 = vmatprep.subr.mxu0 0.0
    %4168 = vmatpush1.msra.mxu0 %v4111
    %4169 = vmatprep.subr.mxu0 0.0
    %4170 = vmatpush1.msra.mxu0 %v4116
    %4171 = vmatprep.subr.mxu0 0.0
    %4172 = vmatpush1.msra.mxu0 %v4121
    %4173 = vmatprep.subr.mxu0 0.0
    %4174 = vmatpush1.msra.mxu0 0.0
    %4175 = vmatprep.subr.mxu0 0.0
    %4176 = vmatpush1.msra.mxu0 0.0
    %4177 = vmatprep.subr.mxu0 0.0
    %4178 = vmatpush1.msra.mxu0 0.0
    %4179 = vmatprep.subr.mxu0 0.0
    %4180 = vmatpush1.msra.mxu0 0.0
    %4181 = vmatprep.subr.mxu0 0.0
    %4182 = vmatpush1.msra.mxu0 0.0
    %4183 = vmatprep.subr.mxu0 0.0
    %4184 = vmatpush1.msra.mxu0 0.0
    %4185 = vmatprep.subr.mxu0 0.0
    %4186 = vmatpush1.msra.mxu0 0.0
    %4187 = vmatprep.subr.mxu0 0.0
    %4188 = vmatpush1.msra.mxu0 0.0
    %4189 = vmatprep.subr.mxu0 0.0
    %4190 = vmatpush1.msra.mxu0 0.0
    %4191 = vmatprep.subr.mxu0 0.0
    %4192 = vmatpush1.msra.mxu0 0.0
    %4193 = vmatprep.subr.mxu0 0.0
    %4194 = vmatpush1.msra.mxu0 0.0
    %4195 = vmatprep.subr.mxu0 0.0
    %4196 = vmatpush1.msra.mxu0 0.0
    %4197 = vmatprep.subr.mxu0 0.0
    %4198 = vmatpush1.msra.mxu0 0.0
    %4199 = vmatprep.subr.mxu0 0.0
    %4200 = vmatpush1.msra.mxu0 0.0
    %4201 = vmatprep.subr.mxu0 0.0
    %4202 = vmatpush1.msra.mxu0 0.0
    %4203 = vmatprep.subr.mxu0 0.0
    %4204 = vmatpush1.msra.mxu0 0.0
    %4205 = vmatprep.subr.mxu0 0.0
    %4206 = vmatpush1.msra.mxu0 0.0
    %4207 = vmatprep.subr.mxu0 0.0
    %4208 = vmatpush1.msra.mxu0 0.0
    %4209 = vmatprep.subr.mxu0 0.0
    %4210 = vmatpush1.msra.mxu0 0.0
    %4211 = vmatprep.subr.mxu0 0.0
    %4212 = vmatpush1.msra.mxu0 0.0
    %4213 = vmatprep.subr.mxu0 0.0
    %4214 = vmatpush1.msra.mxu0 0.0
    %4215 = vmatprep.subr.mxu0 0.0
    %4216 = vmatpush1.msra.mxu0 0.0
    %4217 = vmatprep.subr.mxu0 0.0
    %4218 = vmatpush1.msra.mxu0 0.0
    %4219 = vmatprep.subr.mxu0 0.0
    %4220 = vmatpush1.msra.mxu0 0.0
    %4221 = vmatprep.mubr.f32.mxu0 0.0
    %4222 = vmatmul.mubr.f32.gmra.mrb[0].mxu0 %v4134
    %v4223 = vpop.f32.mrb[0].mxu0
    %v4224 = vadd.f32 0.0, %v4223
    %v4225 = vpop.f32.mrb[0].mxu0
    %4226 = vmatprep.mubr.f32.mxu0 0.0
    %4227 = vmatmul.mubr.f32.gmra.mrb[0].mxu0 %v4137
    %v4228 = vpop.f32.mrb[0].mxu0
    %v4229 = vadd.f32 0.0, %v4228
    %v4230 = vpop.f32.mrb[0].mxu0
    %4231 = vmatprep.mubr.f32.mxu0 0.0
    %4232 = vmatmul.mubr.f32.gmra.mrb[0].mxu0 %v4140
    %v4233 = vpop.f32.mrb[0].mxu0
    %v4234 = vadd.f32 0.0, %v4233
    %v4235 = vpop.f32.mrb[0].mxu0
    %4236 = vmatprep.mubr.f32.mxu0 0.0
    %4237 = vmatmul.mubr.f32.gmra.mrb[0].mxu0 %v4143
    %v4238 = vpop.f32.mrb[0].mxu0
    %v4239 = vadd.f32 0.0, %v4238
    %v4240 = vpop.f32.mrb[0].mxu0
    %4241 = vmatprep.mubr.f32.mxu0 0.0
    %4242 = vmatmul.mubr.f32.gmra.mrb[0].mxu0 %v4146
    %v4243 = vpop.f32.mrb[0].mxu0
    %v4244 = vadd.f32 0.0, %v4243
    %v4245 = vpop.f32.mrb[0].mxu0
    %4246 = vmatprep.mubr.f32.mxu0 0.0
    %4247 = vmatmul.mubr.f32.gmra.mrb[0].mxu0 %v4149
    %v4248 = vpop.f32.mrb[0].mxu0
    %v4249 = vadd.f32 0.0, %v4248
    %v4250 = vpop.f32.mrb[0].mxu0
    %4251 = vmatprep.mubr.f32.mxu0 0.0
    %4252 = vmatmul.mubr.f32.gmra.mrb[0].mxu0 %v4152
    %v4253 = vpop.f32.mrb[0].mxu0
    %v4254 = vadd.f32 0.0, %v4253
    %v4255 = vpop.f32.mrb[0].mxu0
    %4256 = vmatprep.mubr.f32.mxu0 0.0
    %4257 = vmatmul.mubr.f32.gmra.mrb[0].mxu0 %v4155
    %v4258 = vpop.f32.mrb[0].mxu0
    %v4259 = vadd.f32 0.0, %v4258
    %v4260 = vpop.f32.mrb[0].mxu0
    %4261 = vdwg.mxu0
    %v4262 = vadd.f32 %v3978, %v4224
    %v4263 = vadd.f32 %v3983, %v4229
    %v4264 = vadd.f32 %v3988, %v4234
    %v4265 = vadd.f32 %v3993, %v4239
    %v4266 = vadd.f32 %v3998, %v4244
    %v4267 = vadd.f32 %v4003, %v4249
    %v4268 = vadd.f32 %v4008, %v4254
    %v4269 = vadd.f32 %v4013, %v4259
    %s4270 = scalar_lea.vmem %s15, 48
    %v4271 = vld [vmem:[%s4270] sm:$0xff]
    %v4272 = vld [vmem:[%s4270 + $0x8] sm:$0xff]
    %4273 = vmatprep.subr.mxu0 0.0
    %4274 = vmatpush1.msra.mxu0 %v4271
    %4275 = vmatprep.subr.mxu0 0.0
    %4276 = vmatpush1.msra.mxu0 %v4272
    %4277 = vmatprep.subr.mxu0 0.0
    %4278 = vmatpush1.msra.mxu0 0.0
    %4279 = vmatprep.subr.mxu0 0.0
    %4280 = vmatpush1.msra.mxu0 0.0
    %4281 = vmatprep.subr.mxu0 0.0
    %4282 = vmatpush1.msra.mxu0 0.0
    %4283 = vmatprep.subr.mxu0 0.0
    %4284 = vmatpush1.msra.mxu0 0.0
    %4285 = vmatprep.subr.mxu0 0.0
    %4286 = vmatpush1.msra.mxu0 0.0
    %4287 = vmatprep.subr.mxu0 0.0
    %4288 = vmatpush1.msra.mxu0 0.0
    %4289 = vmatprep.subr.mxu0 0.0
    %4290 = vmatpush1.msra.mxu0 0.0
    %4291 = vmatprep.subr.mxu0 0.0
    %4292 = vmatpush1.msra.mxu0 0.0
    %4293 = vmatprep.subr.mxu0 0.0
    %4294 = vmatpush1.msra.mxu0 0.0
    %4295 = vmatprep.subr.mxu0 0.0
    %4296 = vmatpush1.msra.mxu0 0.0
    %4297 = vmatprep.subr.mxu0 0.0
    %4298 = vmatpush1.msra.mxu0 0.0
    %4299 = vmatprep.subr.mxu0 0.0
    %4300 = vmatpush1.msra.mxu0 0.0
    %4301 = vmatprep.subr.mxu0 0.0
    %4302 = vmatpush1.msra.mxu0 0.0
    %4303 = vmatprep.subr.mxu0 0.0
    %4304 = vmatpush1.msra.mxu0 0.0
    %4305 = vmatprep.subr.mxu0 0.0
    %4306 = vmatpush1.msra.mxu0 0.0
    %4307 = vmatprep.subr.mxu0 0.0
    %4308 = vmatpush1.msra.mxu0 0.0
    %4309 = vmatprep.subr.mxu0 0.0
    %4310 = vmatpush1.msra.mxu0 0.0
    %4311 = vmatprep.subr.mxu0 0.0
    %4312 = vmatpush1.msra.mxu0 0.0
    %4313 = vmatprep.subr.mxu0 0.0
    %4314 = vmatpush1.msra.mxu0 0.0
    %4315 = vmatprep.subr.mxu0 0.0
    %4316 = vmatpush1.msra.mxu0 0.0
    %4317 = vmatprep.subr.mxu0 0.0
    %4318 = vmatpush1.msra.mxu0 0.0
    %4319 = vmatprep.subr.mxu0 0.0
    %4320 = vmatpush1.msra.mxu0 0.0
    %4321 = vmatprep.subr.mxu0 0.0
    %4322 = vmatpush1.msra.mxu0 0.0
    %4323 = vmatprep.subr.mxu0 0.0
    %4324 = vmatpush1.msra.mxu0 0.0
    %4325 = vmatprep.subr.mxu0 0.0
    %4326 = vmatpush1.msra.mxu0 0.0
    %4327 = vmatprep.subr.mxu0 0.0
    %4328 = vmatpush1.msra.mxu0 0.0
    %4329 = vmatprep.subr.mxu0 0.0
    %4330 = vmatpush1.msra.mxu0 0.0
    %4331 = vmatprep.subr.mxu0 0.0
    %4332 = vmatpush1.msra.mxu0 0.0
    %4333 = vmatprep.subr.mxu0 0.0
    %4334 = vmatpush1.msra.mxu0 0.0
    %4335 = vmatprep.subr.mxu0 0.0
    %4336 = vmatpush1.msra.mxu0 0.0
    %4337 = vmatprep.mubr.f32.mxu0 0.0
    %4338 = vmatmul.mubr.f32.gmra.mrb[0].mxu0 %v3505
    %v4339 = vpop.f32.mrb[0].mxu0
    %v4340 = vadd.f32 0.0, %v4339
    %v4341 = vpop.f32.mrb[0].mxu0
    %4342 = vmatprep.mubr.f32.mxu0 0.0
    %4343 = vmatmul.mubr.f32.gmra.mrb[0].mxu0 %v3508
    %v4344 = vpop.f32.mrb[0].mxu0
    %v4345 = vadd.f32 0.0, %v4344
    %v4346 = vpop.f32.mrb[0].mxu0
    %4347 = vmatprep.mubr.f32.mxu0 0.0
    %4348 = vmatmul.mubr.f32.gmra.mrb[0].mxu0 %v3511
    %v4349 = vpop.f32.mrb[0].mxu0
    %v4350 = vadd.f32 0.0, %v4349
    %v4351 = vpop.f32.mrb[0].mxu0
    %4352 = vmatprep.mubr.f32.mxu0 0.0
    %4353 = vmatmul.mubr.f32.gmra.mrb[0].mxu0 %v3514
    %v4354 = vpop.f32.mrb[0].mxu0
    %v4355 = vadd.f32 0.0, %v4354
    %v4356 = vpop.f32.mrb[0].mxu0
    %4357 = vmatprep.mubr.f32.mxu0 0.0
    %4358 = vmatmul.mubr.f32.gmra.mrb[0].mxu0 %v3517
    %v4359 = vpop.f32.mrb[0].mxu0
    %v4360 = vadd.f32 0.0, %v4359
    %v4361 = vpop.f32.mrb[0].mxu0
    %4362 = vmatprep.mubr.f32.mxu0 0.0
    %4363 = vmatmul.mubr.f32.gmra.mrb[0].mxu0 %v3520
    %v4364 = vpop.f32.mrb[0].mxu0
    %v4365 = vadd.f32 0.0, %v4364
    %v4366 = vpop.f32.mrb[0].mxu0
    %4367 = vmatprep.mubr.f32.mxu0 0.0
    %4368 = vmatmul.mubr.f32.gmra.mrb[0].mxu0 %v3523
    %v4369 = vpop.f32.mrb[0].mxu0
    %v4370 = vadd.f32 0.0, %v4369
    %v4371 = vpop.f32.mrb[0].mxu0
    %4372 = vmatprep.mubr.f32.mxu0 0.0
    %4373 = vmatmul.mubr.f32.gmra.mrb[0].mxu0 %v3526
    %v4374 = vpop.f32.mrb[0].mxu0
    %v4375 = vadd.f32 0.0, %v4374
    %v4376 = vpop.f32.mrb[0].mxu0
    %4377 = vdwg.mxu0
    %s4378 = scalar_lea.vmem %s16, 192
    %v4379 = vld [vmem:[%s4378] sm:$0xff]
    %v4380 = vld [vmem:[%s4378 + $0x8] sm:$0xff]
    %v4381 = vld [vmem:[%s4378 + $0x10] sm:$0xff]
    %v4382 = vld [vmem:[%s4378 + $0x18] sm:$0xff]
    %v4383 = vld [vmem:[%s4378 + $0x20] sm:$0xff]
    %v4384 = vld [vmem:[%s4378 + $0x28] sm:$0xff]
    %v4385 = vld [vmem:[%s4378 + $0x30] sm:$0xff]
    %v4386 = vld [vmem:[%s4378 + $0x38] sm:$0xff]
    %v4388 = vsel %vm403, %v4379, 0
    %v4391 = vsel %vm403, %v4380, 0
    %v4394 = vsel %vm403, %v4381, 0
    %v4397 = vsel %vm403, %v4382, 0
    %v4400 = vsel %vm403, %v4383, 0
    %v4403 = vsel %vm403, %v4384, 0
    %v4406 = vsel %vm403, %v4385, 0
    %v4409 = vsel %vm403, %v4386, 0
    %4411 = vmatprep.subr.mxu0 0.0
    %4412 = vmatpush1.msra.mxu0 %v4340
    %4413 = vmatprep.subr.mxu0 0.0
    %4414 = vmatpush1.msra.mxu0 %v4345
    %4415 = vmatprep.subr.mxu0 0.0
    %4416 = vmatpush1.msra.mxu0 %v4350
    %4417 = vmatprep.subr.mxu0 0.0
    %4418 = vmatpush1.msra.mxu0 %v4355
    %4419 = vmatprep.subr.mxu0 0.0
    %4420 = vmatpush1.msra.mxu0 %v4360
    %4421 = vmatprep.subr.mxu0 0.0
    %4422 = vmatpush1.msra.mxu0 %v4365
    %4423 = vmatprep.subr.mxu0 0.0
    %4424 = vmatpush1.msra.mxu0 %v4370
    %4425 = vmatprep.subr.mxu0 0.0
    %4426 = vmatpush1.msra.mxu0 %v4375
    %4427 = vmatprep.subr.mxu0 0.0
    %4428 = vmatpush1.msra.mxu0 0.0
    %4429 = vmatprep.subr.mxu0 0.0
    %4430 = vmatpush1.msra.mxu0 0.0
    %4431 = vmatprep.subr.mxu0 0.0
    %4432 = vmatpush1.msra.mxu0 0.0
    %4433 = vmatprep.subr.mxu0 0.0
    %4434 = vmatpush1.msra.mxu0 0.0
    %4435 = vmatprep.subr.mxu0 0.0
    %4436 = vmatpush1.msra.mxu0 0.0
    %4437 = vmatprep.subr.mxu0 0.0
    %4438 = vmatpush1.msra.mxu0 0.0
    %4439 = vmatprep.subr.mxu0 0.0
    %4440 = vmatpush1.msra.mxu0 0.0
    %4441 = vmatprep.subr.mxu0 0.0
    %4442 = vmatpush1.msra.mxu0 0.0
    %4443 = vmatprep.subr.mxu0 0.0
    %4444 = vmatpush1.msra.mxu0 0.0
    %4445 = vmatprep.subr.mxu0 0.0
    %4446 = vmatpush1.msra.mxu0 0.0
    %4447 = vmatprep.subr.mxu0 0.0
    %4448 = vmatpush1.msra.mxu0 0.0
    %4449 = vmatprep.subr.mxu0 0.0
    %4450 = vmatpush1.msra.mxu0 0.0
    %4451 = vmatprep.subr.mxu0 0.0
    %4452 = vmatpush1.msra.mxu0 0.0
    %4453 = vmatprep.subr.mxu0 0.0
    %4454 = vmatpush1.msra.mxu0 0.0
    %4455 = vmatprep.subr.mxu0 0.0
    %4456 = vmatpush1.msra.mxu0 0.0
    %4457 = vmatprep.subr.mxu0 0.0
    %4458 = vmatpush1.msra.mxu0 0.0
    %4459 = vmatprep.subr.mxu0 0.0
    %4460 = vmatpush1.msra.mxu0 0.0
    %4461 = vmatprep.subr.mxu0 0.0
    %4462 = vmatpush1.msra.mxu0 0.0
    %4463 = vmatprep.subr.mxu0 0.0
    %4464 = vmatpush1.msra.mxu0 0.0
    %4465 = vmatprep.subr.mxu0 0.0
    %4466 = vmatpush1.msra.mxu0 0.0
    %4467 = vmatprep.subr.mxu0 0.0
    %4468 = vmatpush1.msra.mxu0 0.0
    %4469 = vmatprep.subr.mxu0 0.0
    %4470 = vmatpush1.msra.mxu0 0.0
    %4471 = vmatprep.subr.mxu0 0.0
    %4472 = vmatpush1.msra.mxu0 0.0
    %4473 = vmatprep.subr.mxu0 0.0
    %4474 = vmatpush1.msra.mxu0 0.0
    %4475 = vmatprep.mubr.f32.mxu0 0.0
    %4476 = vmatmul.mubr.f32.gmra.mrb[0].mxu0 %v4388
    %v4477 = vpop.f32.mrb[0].mxu0
    %v4478 = vadd.f32 0.0, %v4477
    %v4479 = vpop.f32.mrb[0].mxu0
    %4480 = vmatprep.mubr.f32.mxu0 0.0
    %4481 = vmatmul.mubr.f32.gmra.mrb[0].mxu0 %v4391
    %v4482 = vpop.f32.mrb[0].mxu0
    %v4483 = vadd.f32 0.0, %v4482
    %v4484 = vpop.f32.mrb[0].mxu0
    %4485 = vmatprep.mubr.f32.mxu0 0.0
    %4486 = vmatmul.mubr.f32.gmra.mrb[0].mxu0 %v4394
    %v4487 = vpop.f32.mrb[0].mxu0
    %v4488 = vadd.f32 0.0, %v4487
    %v4489 = vpop.f32.mrb[0].mxu0
    %4490 = vmatprep.mubr.f32.mxu0 0.0
    %4491 = vmatmul.mubr.f32.gmra.mrb[0].mxu0 %v4397
    %v4492 = vpop.f32.mrb[0].mxu0
    %v4493 = vadd.f32 0.0, %v4492
    %v4494 = vpop.f32.mrb[0].mxu0
    %4495 = vmatprep.mubr.f32.mxu0 0.0
    %4496 = vmatmul.mubr.f32.gmra.mrb[0].mxu0 %v4400
    %v4497 = vpop.f32.mrb[0].mxu0
    %v4498 = vadd.f32 0.0, %v4497
    %v4499 = vpop.f32.mrb[0].mxu0
    %4500 = vmatprep.mubr.f32.mxu0 0.0
    %4501 = vmatmul.mubr.f32.gmra.mrb[0].mxu0 %v4403
    %v4502 = vpop.f32.mrb[0].mxu0
    %v4503 = vadd.f32 0.0, %v4502
    %v4504 = vpop.f32.mrb[0].mxu0
    %4505 = vmatprep.mubr.f32.mxu0 0.0
    %4506 = vmatmul.mubr.f32.gmra.mrb[0].mxu0 %v4406
    %v4507 = vpop.f32.mrb[0].mxu0
    %v4508 = vadd.f32 0.0, %v4507
    %v4509 = vpop.f32.mrb[0].mxu0
    %4510 = vmatprep.mubr.f32.mxu0 0.0
    %4511 = vmatmul.mubr.f32.gmra.mrb[0].mxu0 %v4409
    %v4512 = vpop.f32.mrb[0].mxu0
    %v4513 = vadd.f32 0.0, %v4512
    %v4514 = vpop.f32.mrb[0].mxu0
    %4515 = vdwg.mxu0
    %v4516 = vadd.f32 %v4262, %v4478
    %v4517 = vadd.f32 %v4263, %v4483
    %v4518 = vadd.f32 %v4264, %v4488
    %v4519 = vadd.f32 %v4265, %v4493
    %v4520 = vadd.f32 %v4266, %v4498
    %v4521 = vadd.f32 %v4267, %v4503
    %v4522 = vadd.f32 %v4268, %v4508
    %v4523 = vadd.f32 %v4269, %v4513
    %v4524 = vld [vmem:[%s17] sm:$0xff]
    %v4525 = vld [vmem:[%s17 + $0x8] sm:$0xff]
    %v4526 = vld [vmem:[%s17 + $0x10] sm:$0xff]
    %v4527 = vld [vmem:[%s17 + $0x18] sm:$0xff]
    %v4528 = vld [vmem:[%s17 + $0x20] sm:$0xff]
    %v4529 = vld [vmem:[%s17 + $0x28] sm:$0xff]
    %v4530 = vld [vmem:[%s17 + $0x30] sm:$0xff]
    %v4531 = vld [vmem:[%s17 + $0x38] sm:$0xff]
    %4533 = vset.pattern.permute.xlu0 0
    %4534 = vperm.xlu0 %4533, %v4524
    %v4535 = vpop.permute.xlu0 %4534
    %4538 = vset.pattern.permute.xlu0 0
    %4539 = vperm.xlu0 %4538, %v4525
    %v4540 = vpop.permute.xlu0 %4539
    %4543 = vset.pattern.permute.xlu0 0
    %4544 = vperm.xlu0 %4543, %v4526
    %v4545 = vpop.permute.xlu0 %4544
    %4548 = vset.pattern.permute.xlu0 0
    %4549 = vperm.xlu0 %4548, %v4527
    %v4550 = vpop.permute.xlu0 %4549
    %4553 = vset.pattern.permute.xlu0 0
    %4554 = vperm.xlu0 %4553, %v4528
    %v4555 = vpop.permute.xlu0 %4554
    %4558 = vset.pattern.permute.xlu0 0
    %4559 = vperm.xlu0 %4558, %v4529
    %v4560 = vpop.permute.xlu0 %4559
    %4563 = vset.pattern.permute.xlu0 0
    %4564 = vperm.xlu0 %4563, %v4530
    %v4565 = vpop.permute.xlu0 %4564
    %4568 = vset.pattern.permute.xlu0 0
    %4569 = vperm.xlu0 %4568, %v4531
    %v4570 = vpop.permute.xlu0 %4569
    %v4572 = vadd.f32 %v4516, %v4535
    %v4573 = vadd.f32 %v4517, %v4540
    %v4574 = vadd.f32 %v4518, %v4545
    %v4575 = vadd.f32 %v4519, %v4550
    %v4576 = vadd.f32 %v4520, %v4555
    %v4577 = vadd.f32 %v4521, %v4560
    %v4578 = vadd.f32 %v4522, %v4565
    %v4579 = vadd.f32 %v4523, %v4570
    %s4580 = sld [smem:[#allocation5]]
    %vm4581 = vcmp.ge.f32.partialorder %v4572, 0.0
    %vm4582 = vcmp.ge.f32.partialorder %v4573, 0.0
    %vm4583 = vcmp.ge.f32.partialorder %v4574, 0.0
    %vm4584 = vcmp.ge.f32.partialorder %v4575, 0.0
    %vm4585 = vcmp.ge.f32.partialorder %v4576, 0.0
    %vm4586 = vcmp.ge.f32.partialorder %v4577, 0.0
    %vm4587 = vcmp.ge.f32.partialorder %v4578, 0.0
    %vm4588 = vcmp.ge.f32.partialorder %v4579, 0.0
    %v4589 = vstv %s4580
    %v4590 = vmul.f32 %v4589, %v4572
    %v4591 = vmul.f32 %v4589, %v4573
    %v4592 = vmul.f32 %v4589, %v4574
    %v4593 = vmul.f32 %v4589, %v4575
    %v4594 = vmul.f32 %v4589, %v4576
    %v4595 = vmul.f32 %v4589, %v4577
    %v4596 = vmul.f32 %v4589, %v4578
    %v4597 = vmul.f32 %v4589, %v4579
    %v4598 = vsel %vm4581, %v4572, %v4590
    %v4599 = vsel %vm4582, %v4573, %v4591
    %v4600 = vsel %vm4583, %v4574, %v4592
    %v4601 = vsel %vm4584, %v4575, %v4593
    %v4602 = vsel %vm4585, %v4576, %v4594
    %v4603 = vsel %vm4586, %v4577, %v4595
    %v4604 = vsel %vm4587, %v4578, %v4596
    %v4605 = vsel %vm4588, %v4579, %v4597
    %v4606 = vadd.f32 %v4598, %v134
    %v4607 = vadd.f32 %v4599, %v135
    %v4608 = vadd.f32 %v4600, %v136
    %v4609 = vadd.f32 %v4601, %v137
    %v4610 = vadd.f32 %v4602, %v138
    %v4611 = vadd.f32 %v4603, %v139
    %v4612 = vadd.f32 %v4604, %v140
    %v4613 = vadd.f32 %v4605, %v141
    %4614 = vst.msk [vmem:[%s19] sm:$0xff] %vm146, %v4606
    %4615 = vst.msk [vmem:[%s19 + $0x8] sm:$0xff] %vm146, %v4607
    %4616 = vst.msk [vmem:[%s19 + $0x10] sm:$0xff] %vm146, %v4608
    %4617 = vst.msk [vmem:[%s19 + $0x18] sm:$0xff] %vm146, %v4609
    %4618 = vst.msk [vmem:[%s19 + $0x20] sm:$0xff] %vm146, %v4610
    %4619 = vst.msk [vmem:[%s19 + $0x28] sm:$0xff] %vm146, %v4611
    %4620 = vst.msk [vmem:[%s19 + $0x30] sm:$0xff] %vm146, %v4612
    %4621 = vst.msk [vmem:[%s19 + $0x38] sm:$0xff] %vm146, %v4613
    // Predicated region
    $region98: #{_lambda_.1} parent=1 // pred_check
      _
    $region99: #{_lambda_.1} parent=1 // pred_check_branch
      %4623 = sbr.rel (0) target = $region101
    $region100: #{_lambda_.1} parent=1 // pred_region
      _
    $region101: #{_lambda_.1} parent=1 // pred_fallthru
      _
    // Predicated region
    $region102: #{_lambda_.1} parent=1 // pred_check
      _
    $region103: #{_lambda_.1} parent=1 // pred_check_branch
      %4625 = sbr.rel (0) target = $region105
    $region104: #{_lambda_.1} parent=1 // pred_region
      _
    $region105: #{_lambda_.1} parent=1 // pred_fallthru
      _
    %4626 = vsyncpa [#allocation7], 1
    %4627 = vsyncpa [#allocation9], 1
    %4628 = vsyncpa [#allocation12], 1

</llo_original>
